<compile_context>
chip_gen: v5e
topology: v5e:2x2
jax: 0.10.0
libtpu: 0.0.40
codegen_flags: <defaults>
</compile_context>

<pallas_src>
import functools

import jax
import jax.numpy as jnp
from jax.experimental import pallas as pl
from jax.experimental.pallas import tpu as pltpu


def _memory_write_kernel(mem_ref, wr_ref, w1_ref, w2_ref, vec_ref, o_ref,
                         *, matmul_dtype):
    tb, m, d = mem_ref.shape
    w = wr_ref.shape[1]
    n = m + w
    h_dim = w1_ref.shape[1]
    k = w2_ref.shape[1]

    # Small per-feature vectors packed into one (4, P) input (cuts 3 DMA issues):
    #   row 0 = b1[:H], row 1 = b2[:K], row 2 = gamma[:D], row 3 = beta[:D].
    vec = vec_ref[...]
    b1 = vec[0:1, :h_dim]
    b2 = vec[1:2, :k]
    gamma = vec[2:3, :d]
    beta = vec[3:4, :d]

    # Concatenate memory + write tokens inside VMEM (both token counts are
    # multiples of 8, so this is a cheap sublane-aligned concat; no HBM trip).
    x = jnp.concatenate([mem_ref[...], wr_ref[...]], axis=1).astype(jnp.float32)  # [TB,N,D]

    # --- MLP summarizer (TokenLearner-style).  W1/W2 are batch-independent, so
    # run both matmuls on the flattened (TB*N, D) token block (fills the MXU M
    # dim).  Matmul operands go through the MXU in `matmul_dtype` (bf16 by
    # default) with f32 accumulation; elementwise math stays f32.
    xf = x.reshape(tb * n, d)
    h = jnp.dot(xf.astype(matmul_dtype), w1_ref[...].astype(matmul_dtype),
                preferred_element_type=jnp.float32) + b1
    h = jax.nn.gelu(h)                                                    # [TB*N, H]
    logits = jnp.dot(h.astype(matmul_dtype), w2_ref[...].astype(matmul_dtype),
                     preferred_element_type=jnp.float32) + b2
    logits = logits.reshape(tb, n, k)                                     # [TB, N, K]

    # Softmax over the token axis, segmented per batch element.  The approx
    # reciprocal's per-(b, k) scale error cancels through the LayerNorm below
    # up to the eps=1e-5 term (var(summary) >> eps at these scales).
    mx = jnp.max(logits, axis=1, keepdims=True)
    e = jnp.exp(logits - mx)
    denom = jnp.sum(e, axis=1, keepdims=True)
    wts = e * pl.reciprocal(denom, approx=True)                           # [TB, N, K]

    # Weighted token summarization: contract the token axis of both operands,
    # batched over TB:  [TB, N, K] x [TB, N, D] -> [TB, K, D].
    # (At K=16 / D=32 the per-batch relayout is negligible; if K/D grow to
    #  >=128, produce logits pre-transposed instead.)
    summary = jax.lax.dot_general(
        wts.astype(matmul_dtype), x.astype(matmul_dtype),
        dimension_numbers=(((1,), (1,)), ((0,), (0,))),
        preferred_element_type=jnp.float32)

    # LayerNorm over the embedding dim (eps=1e-5, affine).
    mu = jnp.mean(summary, axis=-1, keepdims=True)
    var = jnp.mean((summary - mu) ** 2, axis=-1, keepdims=True)
    normed = (summary - mu) * jax.lax.rsqrt(var + 1e-5)
    out = normed * gamma + beta                                           # [TB, K, D]

    # TODO(synk): dropout is identity (eval mode); training-mode dropout would
    # need pltpu.prng_seed / prng_random_bits.

    # Lane-dense store: merge (K, D) -> K*D (= 512 lanes) so the output store is
    # a full-width vst instead of a masked 32-lane vst.msk.
    o_ref[...] = out.reshape(tb, k * d).astype(o_ref.dtype)


def _num_tensorcores():
    """TensorCores per chip: v7x has 2; v5e/v6e have 1 (grid is a serial loop)."""
    try:
        kind = jax.devices()[0].device_kind.lower()
    except Exception:
        return 1
    return 2 if "v7" in kind else 1


def _pick_batch_tile(batch, m, w, d, h, k, num_cores, vmem_budget_bytes=8 << 20):
    """Largest batch tile whose per-step working set fits a conservative VMEM
    budget (well under the tightest default scoped VMEM across v5e/v6e/v7x).

    Single-TC chips (v5e/v6e): each grid step costs ~0.35us of pipeline
    overhead on this tiny workload, so prefer a SINGLE step (TB = B).
    v7x (2 TCs): prefer the largest tile that leaves a multiple of 2 'parallel'
    steps so both TensorCores get work; if no divisor allows it, fall back to a
    single step rather than many tiny ones.
    """
    n = m + w
    f32 = 4
    per_batch = (
        2 * (m * d + w * d + k * d) * f32        # double-buffered in/out tiles
        + (n * d + n * h + n * k + k * d) * f32  # x, h, logits, summary (f32)
        + (n * d + n * h + n * k) * 2            # bf16 matmul-operand copies
    )
    max_tb = max(1, vmem_budget_bytes // max(per_batch, 1))
    divisors = [t for t in range(1, batch + 1) if batch % t == 0 and t <= max_tb]
    if not divisors:
        divisors = [1]
    if num_cores > 1:
        for t in sorted(divisors, reverse=True):
            if (batch // t) % num_cores == 0:
                return t
    return max(divisors)


def memory_write(memory, write_tokens, params, *, batch_tile=None,
                 matmul_dtype=jnp.bfloat16):
    """memory: [B, M, D], write_tokens: [B, W, D] -> [B, M, D]."""
    B, M, D = memory.shape
    _, W, _ = write_tokens.shape
    K = M                        # summarizer compresses back to memory_size tokens
    H = params["w1"].shape[1]

    num_cores = _num_tensorcores()
    TB = (batch_tile if batch_tile is not None
          else _pick_batch_tile(B, M, W, D, H, K, num_cores))
    assert B % TB == 0, f"batch {B} must be divisible by batch tile {TB}"

    # Pack the four tiny per-feature vectors into one (4, P) array.
    P = max(H, K, D)

    def _row(v):
        v = v.reshape(-1)
        return jnp.pad(v, (0, P - v.shape[0]))

    packed_vec = jnp.stack([_row(params["b1"]), _row(params["b2"]),
                            _row(params["gamma"]), _row(params["beta"])], axis=0)

    full = lambda shape: pl.BlockSpec(shape, lambda b: (0,) * len(shape))
    kernel = functools.partial(_memory_write_kernel, matmul_dtype=matmul_dtype)

    out = pl.pallas_call(
        kernel,
        # Lane-dense output layout: (B, K*D).  The reshape back to (B, K, D) in
        # the wrapper is a free (contiguous row-major) metadata change in XLA.
        out_shape=jax.ShapeDtypeStruct((B, K * D), memory.dtype),
        grid_spec=pltpu.PrefetchScalarGridSpec(
            num_scalar_prefetch=0,
            grid=(B // TB,),
            in_specs=[
                pl.BlockSpec((TB, M, D), lambda b: (b, 0, 0)),   # memory tokens
                pl.BlockSpec((TB, W, D), lambda b: (b, 0, 0)),   # write tokens
                full((D, H)),                                    # W1
                full((H, K)),                                    # W2
                full((4, P)),                                    # b1/b2/gamma/beta
            ],
            out_specs=pl.BlockSpec((TB, K * D), lambda b: (b, 0)),
        ),
        # Per-step working set is ~TB * 24 KB here, far under every generation's
        # default scoped VMEM; re-budget against v7x's 64 MiB if shapes grow.
        compiler_params=pltpu.CompilerParams(
            dimension_semantics=("parallel",)),
    )(memory, write_tokens, params["w1"], params["w2"], packed_vec)
    return out.reshape(B, K, D)


def init_params(key, embedding_dim, memory_size, hidden_dim):
    k1, k2 = jax.random.split(key)
    scale1 = 1.0 / jnp.sqrt(embedding_dim)
    scale2 = 1.0 / jnp.sqrt(hidden_dim)
    return {
        "w1": jax.random.normal(k1, (embedding_dim, hidden_dim), jnp.float32) * scale1,
        "b1": jnp.zeros((1, hidden_dim), jnp.float32),
        "w2": jax.random.normal(k2, (hidden_dim, memory_size), jnp.float32) * scale2,
        "b2": jnp.zeros((1, memory_size), jnp.float32),
        # nn.LayerNorm default init: weight=1, bias=0
        "gamma": jnp.ones((1, embedding_dim), jnp.float32),
        "beta": jnp.zeros((1, embedding_dim), jnp.float32),
    }


def reference(memory, write_tokens, params):
    """Pure-JAX (f32) reference for sanity checking."""
    x = jnp.concatenate([memory, write_tokens], axis=1)          # [B, N, D]
    h = jax.nn.gelu(jnp.einsum("bnd,dh->bnh", x, params["w1"]) + params["b1"][0])
    logits = jnp.einsum("bnh,hk->bnk", h, params["w2"]) + params["b2"][0]
    w = jax.nn.softmax(logits, axis=1)                           # over tokens
    s = jnp.einsum("bnk,bnd->bkd", w, x)
    mu = jnp.mean(s, axis=-1, keepdims=True)
    var = jnp.mean((s - mu) ** 2, axis=-1, keepdims=True)
    normed = (s - mu) / jnp.sqrt(var + 1e-5)
    return normed * params["gamma"][0] + params["beta"][0]


if __name__ == "__main__":
    batch = 16            # exercises batch fusion (1 step on v5e/v6e, 2 on v7x)
    embedding_dim = 32
    memory_size = 16
    write_size = 8
    hidden_dim = 32

    key = jax.random.PRNGKey(0)
    k_mem, k_wr, k_par = jax.random.split(key, 3)
    memory = jax.random.normal(k_mem, (batch, memory_size, embedding_dim), jnp.float32)
    write_tokens = jax.random.normal(k_wr, (batch, write_size, embedding_dim), jnp.float32)
    params = init_params(k_par, embedding_dim, memory_size, hidden_dim)

    ref = reference(memory, write_tokens, params)

    # Strict correctness gate: f32 matmul path vs. f32 reference.
    out_f32 = memory_write(memory, write_tokens, params, matmul_dtype=jnp.float32)
    out_f32 = jax.block_until_ready(out_f32)
    assert out_f32.shape == (batch, memory_size, embedding_dim)
    assert jnp.allclose(out_f32, ref, atol=1e-4, rtol=1e-4), "f32 path mismatch vs reference"

    # Default performance path: bf16 MXU operands (f32 accumulation); looser
    # tolerance accounts for bf16 operand rounding only.
    out_bf16 = memory_write(memory, write_tokens, params)
    out_bf16 = jax.block_until_ready(out_bf16)
    assert out_bf16.shape == (batch, memory_size, embedding_dim)
    assert jnp.allclose(out_bf16, ref, atol=5e-2, rtol=5e-2), "bf16 path mismatch vs reference"

    print("KERNEL_OK")
</pallas_src>

<mosaic_0001>
module attributes {stable_mosaic.version = 11 : i64} {
  func.func @_memory_write_kernel(%arg0: i32, %arg1: memref<16x16x32xf32, #tpu.memory_space<vmem>>, %arg2: memref<16x8x32xf32, #tpu.memory_space<vmem>>, %arg3: memref<32x32xf32, #tpu.memory_space<vmem>>, %arg4: memref<32x16xf32, #tpu.memory_space<vmem>>, %arg5: memref<4x32xf32, #tpu.memory_space<vmem>>, %arg6: memref<16x512xf32, #tpu.memory_space<vmem>>) attributes {dimension_semantics = [#tpu.dimension_semantics<parallel>], iteration_bounds = array<i64: 1>, scalar_prefetch = 0 : i64, scratch_operands = 0 : i64, tpu.core_type = #tpu.core_type<tc>, window_params = [{transform_indices = @transform_0, window_bounds = array<i64: 16, 16, 32>}, {transform_indices = @transform_1, window_bounds = array<i64: 16, 8, 32>}, {pipeline_mode = #tpu.pipeline_mode<synchronous>, transform_indices = @transform_2, window_bounds = array<i64: 32, 32>}, {pipeline_mode = #tpu.pipeline_mode<synchronous>, transform_indices = @transform_3, window_bounds = array<i64: 32, 16>}, {pipeline_mode = #tpu.pipeline_mode<synchronous>, transform_indices = @transform_4, window_bounds = array<i64: 4, 32>}, {transform_indices = @transform_5, window_bounds = array<i64: 16, 512>}]} {
    %c0 = arith.constant 0 : index
    %c0_0 = arith.constant 0 : index
    %0 = vector.load %arg5[%c0, %c0_0] : memref<4x32xf32, #tpu.memory_space<vmem>>, vector<4x32xf32>
    %1 = vector.extract_strided_slice %0 {offsets = [0, 0], sizes = [1, 32], strides = [1, 1]} : vector<4x32xf32> to vector<1x32xf32>
    %2 = vector.extract_strided_slice %0 {offsets = [1, 0], sizes = [1, 16], strides = [1, 1]} : vector<4x32xf32> to vector<1x16xf32>
    %3 = vector.extract_strided_slice %0 {offsets = [2, 0], sizes = [1, 32], strides = [1, 1]} : vector<4x32xf32> to vector<1x32xf32>
    %4 = vector.extract_strided_slice %0 {offsets = [3, 0], sizes = [1, 32], strides = [1, 1]} : vector<4x32xf32> to vector<1x32xf32>
    %c0_1 = arith.constant 0 : index
    %c0_2 = arith.constant 0 : index
    %c0_3 = arith.constant 0 : index
    %5 = vector.load %arg1[%c0_1, %c0_2, %c0_3] : memref<16x16x32xf32, #tpu.memory_space<vmem>>, vector<16x16x32xf32>
    %c0_4 = arith.constant 0 : index
    %c0_5 = arith.constant 0 : index
    %c0_6 = arith.constant 0 : index
    %6 = vector.load %arg2[%c0_4, %c0_5, %c0_6] : memref<16x8x32xf32, #tpu.memory_space<vmem>>, vector<16x8x32xf32>
    %7 = tpu.concatenate %5, %6 in 1 : vector<16x16x32xf32>, vector<16x8x32xf32> -> vector<16x24x32xf32>
    %8 = vector.shape_cast %7 : vector<16x24x32xf32> to vector<384x32xf32>
    %c0_7 = arith.constant 0 : index
    %c0_8 = arith.constant 0 : index
    %9 = vector.load %arg3[%c0_7, %c0_8] : memref<32x32xf32, #tpu.memory_space<vmem>>, vector<32x32xf32>
    %cst = arith.constant dense<0.000000e+00> : vector<384x32xf32>
    %10 = tpu.matmul %8, %9, %cst {dimension_numbers = #tpu.dot_dimension_numbers<[1], [0], [0], [1], [0, 0, 1, 1], [], []>} : vector<384x32xf32>, vector<32x32xf32>, vector<384x32xf32> -> vector<384x32xf32>
    %11 = vector.broadcast %1 : vector<1x32xf32> to vector<384x32xf32>
    %12 = arith.addf %10, %11 : vector<384x32xf32>
    %13 = arith.mulf %12, %12 : vector<384x32xf32>
    %14 = arith.mulf %12, %13 : vector<384x32xf32>
    %cst_9 = arith.constant 4.471500e-02 : f32
    %15 = vector.broadcast %cst_9 : f32 to vector<384x32xf32>
    %16 = arith.mulf %15, %14 : vector<384x32xf32>
    %17 = arith.addf %12, %16 : vector<384x32xf32>
    %cst_10 = arith.constant 0.797884583 : f32
    %18 = vector.broadcast %cst_10 : f32 to vector<384x32xf32>
    %19 = arith.mulf %18, %17 : vector<384x32xf32>
    %20 = math.tanh %19 : vector<384x32xf32>
    %cst_11 = arith.constant 1.000000e+00 : f32
    %21 = vector.broadcast %cst_11 : f32 to vector<384x32xf32>
    %22 = arith.addf %21, %20 : vector<384x32xf32>
    %cst_12 = arith.constant 5.000000e-01 : f32
    %23 = vector.broadcast %cst_12 : f32 to vector<384x32xf32>
    %24 = arith.mulf %23, %22 : vector<384x32xf32>
    %25 = arith.mulf %12, %24 : vector<384x32xf32>
    %c0_13 = arith.constant 0 : index
    %c0_14 = arith.constant 0 : index
    %26 = vector.load %arg4[%c0_13, %c0_14] : memref<32x16xf32, #tpu.memory_space<vmem>>, vector<32x16xf32>
    %cst_15 = arith.constant dense<0.000000e+00> : vector<384x16xf32>
    %27 = tpu.matmul %25, %26, %cst_15 {dimension_numbers = #tpu.dot_dimension_numbers<[1], [0], [0], [1], [0, 0, 1, 1], [], []>} : vector<384x32xf32>, vector<32x16xf32>, vector<384x16xf32> -> vector<384x16xf32>
    %28 = vector.broadcast %2 : vector<1x16xf32> to vector<384x16xf32>
    %29 = arith.addf %27, %28 : vector<384x16xf32>
    %30 = vector.shape_cast %29 : vector<384x16xf32> to vector<16x24x16xf32>
    %cst_16 = arith.constant dense<0xFF800000> : vector<16x16xf32>
    %31 = vector.multi_reduction <maximumf>, %30, %cst_16 [1] : vector<16x24x16xf32> to vector<16x16xf32>
    %32 = vector.shape_cast %31 : vector<16x16xf32> to vector<16x1x16xf32>
    %33 = vector.broadcast %32 : vector<16x1x16xf32> to vector<16x24x16xf32>
    %34 = arith.subf %30, %33 : vector<16x24x16xf32>
    %35 = math.exp %34 : vector<16x24x16xf32>
    %cst_17 = arith.constant dense<0.000000e+00> : vector<16x16xf32>
    %36 = vector.multi_reduction <add>, %35, %cst_17 [1] : vector<16x24x16xf32> to vector<16x16xf32>
    %37 = vector.shape_cast %36 : vector<16x16xf32> to vector<16x1x16xf32>
    %38 = tpu.reciprocal %37 {approx = true} : vector<16x1x16xf32> -> vector<16x1x16xf32>
    %39 = vector.broadcast %38 : vector<16x1x16xf32> to vector<16x24x16xf32>
    %40 = arith.mulf %35, %39 : vector<16x24x16xf32>
    %cst_18 = arith.constant dense<0.000000e+00> : vector<16x16x32xf32>
    %41 = tpu.matmul %40, %7, %cst_18 {dimension_numbers = #tpu.dot_dimension_numbers<[1], [1], [2], [2], [0, 0, 0, 2, 1, 2], [0], [0]>} : vector<16x24x16xf32>, vector<16x24x32xf32>, vector<16x16x32xf32> -> vector<16x16x32xf32>
    %cst_19 = arith.constant dense<0.000000e+00> : vector<16x16xf32>
    %42 = vector.multi_reduction <add>, %41, %cst_19 [2] : vector<16x16x32xf32> to vector<16x16xf32>
    %43 = vector.shape_cast %42 : vector<16x16xf32> to vector<16x16x1xf32>
    %cst_20 = arith.constant 3.200000e+01 : f32
    %44 = vector.broadcast %cst_20 : f32 to vector<16x16x1xf32>
    %45 = arith.divf %43, %44 : vector<16x16x1xf32>
    %46 = vector.broadcast %45 : vector<16x16x1xf32> to vector<16x16x32xf32>
    %47 = arith.subf %41, %46 : vector<16x16x32xf32>
    %48 = arith.mulf %47, %47 : vector<16x16x32xf32>
    %cst_21 = arith.constant dense<0.000000e+00> : vector<16x16xf32>
    %49 = vector.multi_reduction <add>, %48, %cst_21 [2] : vector<16x16x32xf32> to vector<16x16xf32>
    %50 = vector.shape_cast %49 : vector<16x16xf32> to vector<16x16x1xf32>
    %cst_22 = arith.constant 3.200000e+01 : f32
    %51 = vector.broadcast %cst_22 : f32 to vector<16x16x1xf32>
    %52 = arith.divf %50, %51 : vector<16x16x1xf32>
    %53 = vector.broadcast %45 : vector<16x16x1xf32> to vector<16x16x32xf32>
    %54 = arith.subf %41, %53 : vector<16x16x32xf32>
    %cst_23 = arith.constant 9.99999974E-6 : f32
    %55 = vector.broadcast %cst_23 : f32 to vector<16x16x1xf32>
    %56 = arith.addf %52, %55 : vector<16x16x1xf32>
    %57 = math.rsqrt %56 : vector<16x16x1xf32>
    %58 = vector.broadcast %57 : vector<16x16x1xf32> to vector<16x16x32xf32>
    %59 = arith.mulf %54, %58 : vector<16x16x32xf32>
    %60 = vector.shape_cast %3 : vector<1x32xf32> to vector<1x1x32xf32>
    %61 = vector.broadcast %60 : vector<1x1x32xf32> to vector<16x16x32xf32>
    %62 = arith.mulf %59, %61 : vector<16x16x32xf32>
    %63 = vector.shape_cast %4 : vector<1x32xf32> to vector<1x1x32xf32>
    %64 = vector.broadcast %63 : vector<1x1x32xf32> to vector<16x16x32xf32>
    %65 = arith.addf %62, %64 : vector<16x16x32xf32>
    %66 = vector.shape_cast %65 : vector<16x16x32xf32> to vector<16x512xf32>
    %c0_24 = arith.constant 0 : index
    %c0_25 = arith.constant 0 : index
    %67 = vector.load %arg6[%c0_24, %c0_25] : memref<16x512xf32, #tpu.memory_space<vmem>>, vector<16x512xf32>
    tpu.vector_store %arg6[%c0_24, %c0_25], %66 {strides = array<i32>} : memref<16x512xf32, #tpu.memory_space<vmem>>, vector<16x512xf32>,
    return
  }
  func.func @transform_0(%arg0: i32) -> (i32, i32, i32) {
    %c0_i32 = arith.constant 0 : i32
    %c0_i32_0 = arith.constant 0 : i32
    %c0_i32_1 = arith.constant 0 : i32
    return %arg0, %c0_i32, %c0_i32_0 : i32, i32, i32
  }
  func.func @transform_1(%arg0: i32) -> (i32, i32, i32) {
    %c0_i32 = arith.constant 0 : i32
    %c0_i32_0 = arith.constant 0 : i32
    %c0_i32_1 = arith.constant 0 : i32
    return %arg0, %c0_i32, %c0_i32_0 : i32, i32, i32
  }
  func.func @transform_2(%arg0: i32) -> (i32, i32) {
    %c0_i32 = arith.constant 0 : i32
    %c0_i32_0 = arith.constant 0 : i32
    %c0_i32_1 = arith.constant 0 : i32
    return %c0_i32, %c0_i32_0 : i32, i32
  }
  func.func @transform_3(%arg0: i32) -> (i32, i32) {
    %c0_i32 = arith.constant 0 : i32
    %c0_i32_0 = arith.constant 0 : i32
    %c0_i32_1 = arith.constant 0 : i32
    return %c0_i32, %c0_i32_0 : i32, i32
  }
  func.func @transform_4(%arg0: i32) -> (i32, i32) {
    %c0_i32 = arith.constant 0 : i32
    %c0_i32_0 = arith.constant 0 : i32
    %c0_i32_1 = arith.constant 0 : i32
    return %c0_i32, %c0_i32_0 : i32, i32
  }
  func.func @transform_5(%arg0: i32) -> (i32, i32) {
    %c0_i32 = arith.constant 0 : i32
    %c0_i32_0 = arith.constant 0 : i32
    return %arg0, %c0_i32 : i32, i32
  }
}

</mosaic_0001>

<llo_original>
// kernel: tpu_custom_call.1
$region0: #{tpu_custom_call.1}
  #allocation0 [shape = 'u32[]', space=smem, size = 0x4, offset = 0x4, fixed_abs, tag = 'smem constant byte address 0x4 - core index']
  #allocation1 [shape = 'u32[72,128]{1,0:T(1,128)}', space=vmem, size = 0x9000, scoped, tag = 'internal scratch']
  %s0 = inlined_call_operand.hbm [shape: f32[16,16,32], index: 0, kind: input, shape index: {}]
  %s1 = inlined_call_operand.hbm [shape: f32[16,8,32], index: 1, kind: input, shape index: {}]
  %s2 = inlined_call_operand.vmem [shape: f32[32,32], index: 2, kind: input, shape index: {}]
  %s3 = inlined_call_operand.vmem [shape: f32[32,16], index: 3, kind: input, shape index: {}]
  %s4 = inlined_call_operand.vmem [shape: f32[4,32], index: 4, kind: input, shape index: {}]
  %s5 = inlined_call_operand.hbm [shape: f32[16,512], index: 5, kind: output, shape index: {}]
  %s6 = sld [smem:[#allocation0]]
  $region38: #{tpu_custom_call.1} parent=0
    _
  %s8 = ssub.s32 1, %s6
  %s9 = scalar_select 0, %s8, %s6
  $region1: #{tpu_custom_call.1} parent=0
    #allocation2 [shape = 'u8[131072]{0}', space=vmem, size = 0x20000, scoped, tag = 'input window, operand 0, single buffered']
    #allocation3 [shape = 's32[1]{0}', space=sflag, size = 0x4, scoped, tag = 'scoped memory for tpu_custom_call.1']
    #allocation4 [shape = 's32[1]{0}', space=sflag, size = 0x4, scoped, tag = 'scoped memory for tpu_custom_call.1']
    #allocation5 [shape = 'u8[65536]{0}', space=vmem, size = 0x10000, scoped, tag = 'input window, operand 1, single buffered']
    #allocation6 [shape = 's32[1]{0}', space=sflag, size = 0x4, scoped, tag = 'scoped memory for tpu_custom_call.1']
    #allocation7 [shape = 'u8[32768]{0}', space=vmem, size = 0x8000, scoped, tag = 'output window, operand 0, single buffered']
    %10 = vsyncpa [#allocation3], 0
    %11 = vsyncpa [#allocation6], 0
    %12 = vsyncpa [#allocation4], 0
    // Predicated region
    $region2: #{tpu_custom_call.1} parent=1 // pred_check
      _
    $region3: #{tpu_custom_call.1} parent=1 // pred_check_branch
      %14 = sbr.rel (0) target = $region5
    $region4: #{tpu_custom_call.1} parent=1 // pred_region
      %16 = vsyncadd [#allocation3], 0
      %s17 = sshll.u32 %s0, 4
      %s18 = int_to_ptr.hbm [resolvable:$true] %s17
      %s19 = sshll.u32 [#allocation2], 4
      %s20 = int_to_ptr.vmem [resolvable:$true] %s19
      %25 = dma.hbm_to_vmem [thread:$0]  %s18, 4096, %s20, [#allocation3], 128, 128, 8
    $region5: #{tpu_custom_call.1} parent=1 // pred_fallthru
      _
    // Predicated region
    $region6: #{tpu_custom_call.1} parent=1 // pred_check
      _
    $region7: #{tpu_custom_call.1} parent=1 // pred_check_branch
      %27 = sbr.rel (0) target = $region9
    $region8: #{tpu_custom_call.1} parent=1 // pred_region
      %29 = vsyncadd [#allocation6], 0
      %s30 = sshll.u32 %s1, 4
      %s31 = int_to_ptr.hbm [resolvable:$true] %s30
      %s32 = sshll.u32 [#allocation5], 4
      %s33 = int_to_ptr.vmem [resolvable:$true] %s32
      %38 = dma.hbm_to_vmem [thread:$0]  %s31, 2048, %s33, [#allocation6], 128, 128, 8
    $region9: #{tpu_custom_call.1} parent=1 // pred_fallthru
      _
    // Predicated region
    $region10: #{tpu_custom_call.1} parent=1 // pred_check
      _
    $region11: #{tpu_custom_call.1} parent=1 // pred_check_branch
      %40 = sbr.rel (0) target = $region13
    $region12: #{tpu_custom_call.1} parent=1 // pred_region
      _
    $region13: #{tpu_custom_call.1} parent=1 // pred_fallthru
      _
    // Predicated region
    $region14: #{tpu_custom_call.1} parent=1 // pred_check
      _
    $region15: #{tpu_custom_call.1} parent=1 // pred_check_branch
      %42 = sbr.rel (0) target = $region17
    $region16: #{tpu_custom_call.1} parent=1 // pred_region
      _
    $region17: #{tpu_custom_call.1} parent=1 // pred_fallthru
      _
    // Predicated region
    $region18: #{tpu_custom_call.1} parent=1 // pred_check
      _
    $region19: #{tpu_custom_call.1} parent=1 // pred_check_branch
      %44 = sbr.rel (0) target = $region21
    $region20: #{tpu_custom_call.1} parent=1 // pred_region
      _
    $region21: #{tpu_custom_call.1} parent=1 // pred_fallthru
      _
    // Predicated region
    $region22: #{tpu_custom_call.1} parent=1 // pred_check
      _
    $region23: #{tpu_custom_call.1} parent=1 // pred_check_branch
      %46 = sbr.rel (0) target = $region25
    $region24: #{tpu_custom_call.1} parent=1 // pred_region
      %48 = dma.done [#allocation3], 4096
    $region25: #{tpu_custom_call.1} parent=1 // pred_fallthru
      _
    // Predicated region
    $region26: #{tpu_custom_call.1} parent=1 // pred_check
      _
    $region27: #{tpu_custom_call.1} parent=1 // pred_check_branch
      %50 = sbr.rel (0) target = $region29
    $region28: #{tpu_custom_call.1} parent=1 // pred_region
      %52 = dma.done [#allocation6], 2048
    $region29: #{tpu_custom_call.1} parent=1 // pred_fallthru
      _
    %v53 = vld [vmem:[%s4] sm:$0xf]
    %v54 = vld [vmem:[#allocation2] sm:$0xff]
    %v55 = vld [vmem:[#allocation2 + $0x8] sm:$0xff]
    %v56 = vld [vmem:[#allocation2 + $0x10] sm:$0xff]
    %v57 = vld [vmem:[#allocation2 + $0x18] sm:$0xff]
    %v58 = vld [vmem:[#allocation2 + $0x20] sm:$0xff]
    %v59 = vld [vmem:[#allocation2 + $0x28] sm:$0xff]
    %v60 = vld [vmem:[#allocation2 + $0x30] sm:$0xff]
    %v61 = vld [vmem:[#allocation2 + $0x38] sm:$0xff]
    %v62 = vld [vmem:[#allocation2 + $0x40] sm:$0xff]
    %v63 = vld [vmem:[#allocation2 + $0x48] sm:$0xff]
    %v64 = vld [vmem:[#allocation2 + $0x50] sm:$0xff]
    %v65 = vld [vmem:[#allocation2 + $0x58] sm:$0xff]
    %v66 = vld [vmem:[#allocation2 + $0x60] sm:$0xff]
    %v67 = vld [vmem:[#allocation2 + $0x68] sm:$0xff]
    %v68 = vld [vmem:[#allocation2 + $0x70] sm:$0xff]
    %v69 = vld [vmem:[#allocation2 + $0x78] sm:$0xff]
    %v70 = vld [vmem:[#allocation2 + $0x80] sm:$0xff]
    %v71 = vld [vmem:[#allocation2 + $0x88] sm:$0xff]
    %v72 = vld [vmem:[#allocation2 + $0x90] sm:$0xff]
    %v73 = vld [vmem:[#allocation2 + $0x98] sm:$0xff]
    %v74 = vld [vmem:[#allocation2 + $0xa0] sm:$0xff]
    %v75 = vld [vmem:[#allocation2 + $0xa8] sm:$0xff]
    %v76 = vld [vmem:[#allocation2 + $0xb0] sm:$0xff]
    %v77 = vld [vmem:[#allocation2 + $0xb8] sm:$0xff]
    %v78 = vld [vmem:[#allocation2 + $0xc0] sm:$0xff]
    %v79 = vld [vmem:[#allocation2 + $0xc8] sm:$0xff]
    %v80 = vld [vmem:[#allocation2 + $0xd0] sm:$0xff]
    %v81 = vld [vmem:[#allocation2 + $0xd8] sm:$0xff]
    %v82 = vld [vmem:[#allocation2 + $0xe0] sm:$0xff]
    %v83 = vld [vmem:[#allocation2 + $0xe8] sm:$0xff]
    %v84 = vld [vmem:[#allocation2 + $0xf0] sm:$0xff]
    %v85 = vld [vmem:[#allocation2 + $0xf8] sm:$0xff]
    %v86 = vld [vmem:[#allocation5] sm:$0xff]
    %v87 = vld [vmem:[#allocation5 + $0x8] sm:$0xff]
    %v88 = vld [vmem:[#allocation5 + $0x10] sm:$0xff]
    %v89 = vld [vmem:[#allocation5 + $0x18] sm:$0xff]
    %v90 = vld [vmem:[#allocation5 + $0x20] sm:$0xff]
    %v91 = vld [vmem:[#allocation5 + $0x28] sm:$0xff]
    %v92 = vld [vmem:[#allocation5 + $0x30] sm:$0xff]
    %v93 = vld [vmem:[#allocation5 + $0x38] sm:$0xff]
    %v94 = vld [vmem:[#allocation5 + $0x40] sm:$0xff]
    %v95 = vld [vmem:[#allocation5 + $0x48] sm:$0xff]
    %v96 = vld [vmem:[#allocation5 + $0x50] sm:$0xff]
    %v97 = vld [vmem:[#allocation5 + $0x58] sm:$0xff]
    %v98 = vld [vmem:[#allocation5 + $0x60] sm:$0xff]
    %v99 = vld [vmem:[#allocation5 + $0x68] sm:$0xff]
    %v100 = vld [vmem:[#allocation5 + $0x70] sm:$0xff]
    %v101 = vld [vmem:[#allocation5 + $0x78] sm:$0xff]
    %v102 = vld [vmem:[%s2] sm:$0xff]
    %v103 = vld [vmem:[%s2 + $0x8] sm:$0xff]
    %v104 = vld [vmem:[%s2 + $0x10] sm:$0xff]
    %v105 = vld [vmem:[%s2 + $0x18] sm:$0xff]
    %v106 = vperm.slane %v53, 0
    %vm107 = vcmask 261120
    %v109 = vsel %vm107, %v54, 0
    %v112 = vsel %vm107, %v55, 0
    %v115 = vsel %vm107, %v86, 0
    %v118 = vsel %vm107, %v56, 0
    %v121 = vsel %vm107, %v57, 0
    %v124 = vsel %vm107, %v87, 0
    %v127 = vsel %vm107, %v58, 0
    %v130 = vsel %vm107, %v59, 0
    %v133 = vsel %vm107, %v88, 0
    %v136 = vsel %vm107, %v60, 0
    %v139 = vsel %vm107, %v61, 0
    %v142 = vsel %vm107, %v89, 0
    %v145 = vsel %vm107, %v62, 0
    %v148 = vsel %vm107, %v63, 0
    %v151 = vsel %vm107, %v90, 0
    %v154 = vsel %vm107, %v64, 0
    %v157 = vsel %vm107, %v65, 0
    %v160 = vsel %vm107, %v91, 0
    %v163 = vsel %vm107, %v66, 0
    %v166 = vsel %vm107, %v67, 0
    %v169 = vsel %vm107, %v92, 0
    %v172 = vsel %vm107, %v68, 0
    %v175 = vsel %vm107, %v69, 0
    %v178 = vsel %vm107, %v93, 0
    %v181 = vsel %vm107, %v70, 0
    %v184 = vsel %vm107, %v71, 0
    %v187 = vsel %vm107, %v94, 0
    %v190 = vsel %vm107, %v72, 0
    %v193 = vsel %vm107, %v73, 0
    %v196 = vsel %vm107, %v95, 0
    %v199 = vsel %vm107, %v74, 0
    %v202 = vsel %vm107, %v75, 0
    %v205 = vsel %vm107, %v96, 0
    %v208 = vsel %vm107, %v76, 0
    %v211 = vsel %vm107, %v77, 0
    %v214 = vsel %vm107, %v97, 0
    %v217 = vsel %vm107, %v78, 0
    %v220 = vsel %vm107, %v79, 0
    %v223 = vsel %vm107, %v98, 0
    %v226 = vsel %vm107, %v80, 0
    %v229 = vsel %vm107, %v81, 0
    %v232 = vsel %vm107, %v99, 0
    %v235 = vsel %vm107, %v82, 0
    %v238 = vsel %vm107, %v83, 0
    %v241 = vsel %vm107, %v100, 0
    %v244 = vsel %vm107, %v84, 0
    %v247 = vsel %vm107, %v85, 0
    %v250 = vsel %vm107, %v101, 0
    %252 = vmatpush.msra.mxu0 0.0
    %253 = vmatpush.msra.mxu0 0.0
    %254 = vmatpush.msra.mxu0 0.0
    %255 = vmatpush.msra.mxu0 0.0
    %256 = vmatpush.msra.mxu0 0.0
    %257 = vmatpush.msra.mxu0 0.0
    %258 = vmatpush.msra.mxu0 0.0
    %259 = vmatpush.msra.mxu0 0.0
    %260 = vmatpush.msra.mxu0 0.0
    %261 = vmatpush.msra.mxu0 0.0
    %262 = vmatpush.msra.mxu0 0.0
    %263 = vmatpush.msra.mxu0 0.0
    %264 = vmatpush.msra.mxu0 %v105
    %265 = vmatpush.msra.mxu0 %v104
    %266 = vmatpush.msra.mxu0 %v103
    %267 = vmatpush.msra.mxu0 %v102
    %268 = vmatmul.f32.gmra.mxu0 %v109
    %v269 = vpop.f32.mrf.mxu0
    %v270 = vadd.f32 %v106, %v269
    %271 = vmatmul.f32.gmra.mxu0 %v112
    %v272 = vpop.f32.mrf.mxu0
    %v273 = vadd.f32 %v106, %v272
    %274 = vmatmul.f32.gmra.mxu0 %v115
    %v275 = vpop.f32.mrf.mxu0
    %v276 = vadd.f32 %v106, %v275
    %277 = vmatmul.f32.gmra.mxu0 %v118
    %v278 = vpop.f32.mrf.mxu0
    %v279 = vadd.f32 %v106, %v278
    %280 = vmatmul.f32.gmra.mxu0 %v121
    %v281 = vpop.f32.mrf.mxu0
    %v282 = vadd.f32 %v106, %v281
    %283 = vmatmul.f32.gmra.mxu0 %v124
    %v284 = vpop.f32.mrf.mxu0
    %v285 = vadd.f32 %v106, %v284
    %286 = vmatmul.f32.gmra.mxu0 %v127
    %v287 = vpop.f32.mrf.mxu0
    %v288 = vadd.f32 %v106, %v287
    %289 = vmatmul.f32.gmra.mxu0 %v130
    %v290 = vpop.f32.mrf.mxu0
    %v291 = vadd.f32 %v106, %v290
    %292 = vmatmul.f32.gmra.mxu0 %v133
    %v293 = vpop.f32.mrf.mxu0
    %v294 = vadd.f32 %v106, %v293
    %295 = vmatmul.f32.gmra.mxu0 %v136
    %v296 = vpop.f32.mrf.mxu0
    %v297 = vadd.f32 %v106, %v296
    %298 = vmatmul.f32.gmra.mxu0 %v139
    %v299 = vpop.f32.mrf.mxu0
    %v300 = vadd.f32 %v106, %v299
    %301 = vmatmul.f32.gmra.mxu0 %v142
    %v302 = vpop.f32.mrf.mxu0
    %v303 = vadd.f32 %v106, %v302
    %304 = vmatmul.f32.gmra.mxu0 %v145
    %v305 = vpop.f32.mrf.mxu0
    %v306 = vadd.f32 %v106, %v305
    %307 = vmatmul.f32.gmra.mxu0 %v148
    %v308 = vpop.f32.mrf.mxu0
    %v309 = vadd.f32 %v106, %v308
    %310 = vmatmul.f32.gmra.mxu0 %v151
    %v311 = vpop.f32.mrf.mxu0
    %v312 = vadd.f32 %v106, %v311
    %313 = vmatmul.f32.gmra.mxu0 %v154
    %v314 = vpop.f32.mrf.mxu0
    %v315 = vadd.f32 %v106, %v314
    %316 = vmatmul.f32.gmra.mxu0 %v157
    %v317 = vpop.f32.mrf.mxu0
    %v318 = vadd.f32 %v106, %v317
    %319 = vmatmul.f32.gmra.mxu0 %v160
    %v320 = vpop.f32.mrf.mxu0
    %v321 = vadd.f32 %v106, %v320
    %322 = vmatmul.f32.gmra.mxu0 %v163
    %v323 = vpop.f32.mrf.mxu0
    %v324 = vadd.f32 %v106, %v323
    %325 = vmatmul.f32.gmra.mxu0 %v166
    %v326 = vpop.f32.mrf.mxu0
    %v327 = vadd.f32 %v106, %v326
    %328 = vmatmul.f32.gmra.mxu0 %v169
    %v329 = vpop.f32.mrf.mxu0
    %v330 = vadd.f32 %v106, %v329
    %331 = vmatmul.f32.gmra.mxu0 %v172
    %v332 = vpop.f32.mrf.mxu0
    %v333 = vadd.f32 %v106, %v332
    %334 = vmatmul.f32.gmra.mxu0 %v175
    %v335 = vpop.f32.mrf.mxu0
    %v336 = vadd.f32 %v106, %v335
    %337 = vmatmul.f32.gmra.mxu0 %v178
    %v338 = vpop.f32.mrf.mxu0
    %v339 = vadd.f32 %v106, %v338
    %340 = vmatmul.f32.gmra.mxu0 %v181
    %v341 = vpop.f32.mrf.mxu0
    %v342 = vadd.f32 %v106, %v341
    %343 = vmatmul.f32.gmra.mxu0 %v184
    %v344 = vpop.f32.mrf.mxu0
    %v345 = vadd.f32 %v106, %v344
    %346 = vmatmul.f32.gmra.mxu0 %v187
    %v347 = vpop.f32.mrf.mxu0
    %v348 = vadd.f32 %v106, %v347
    %349 = vmatmul.f32.gmra.mxu0 %v190
    %v350 = vpop.f32.mrf.mxu0
    %v351 = vadd.f32 %v106, %v350
    %352 = vmatmul.f32.gmra.mxu0 %v193
    %v353 = vpop.f32.mrf.mxu0
    %v354 = vadd.f32 %v106, %v353
    %355 = vmatmul.f32.gmra.mxu0 %v196
    %v356 = vpop.f32.mrf.mxu0
    %v357 = vadd.f32 %v106, %v356
    %358 = vmatmul.f32.gmra.mxu0 %v199
    %v359 = vpop.f32.mrf.mxu0
    %v360 = vadd.f32 %v106, %v359
    %361 = vmatmul.f32.gmra.mxu0 %v202
    %v362 = vpop.f32.mrf.mxu0
    %v363 = vadd.f32 %v106, %v362
    %364 = vmatmul.f32.gmra.mxu0 %v205
    %v365 = vpop.f32.mrf.mxu0
    %v366 = vadd.f32 %v106, %v365
    %367 = vmatmul.f32.gmra.mxu0 %v208
    %v368 = vpop.f32.mrf.mxu0
    %v369 = vadd.f32 %v106, %v368
    %370 = vmatmul.f32.gmra.mxu0 %v211
    %v371 = vpop.f32.mrf.mxu0
    %v372 = vadd.f32 %v106, %v371
    %373 = vmatmul.f32.gmra.mxu0 %v214
    %v374 = vpop.f32.mrf.mxu0
    %v375 = vadd.f32 %v106, %v374
    %376 = vmatmul.f32.gmra.mxu0 %v217
    %v377 = vpop.f32.mrf.mxu0
    %v378 = vadd.f32 %v106, %v377
    %379 = vmatmul.f32.gmra.mxu0 %v220
    %v380 = vpop.f32.mrf.mxu0
    %v381 = vadd.f32 %v106, %v380
    %382 = vmatmul.f32.gmra.mxu0 %v223
    %v383 = vpop.f32.mrf.mxu0
    %v384 = vadd.f32 %v106, %v383
    %385 = vmatmul.f32.gmra.mxu0 %v226
    %v386 = vpop.f32.mrf.mxu0
    %v387 = vadd.f32 %v106, %v386
    %388 = vmatmul.f32.gmra.mxu0 %v229
    %v389 = vpop.f32.mrf.mxu0
    %v390 = vadd.f32 %v106, %v389
    %391 = vmatmul.f32.gmra.mxu0 %v232
    %v392 = vpop.f32.mrf.mxu0
    %v393 = vadd.f32 %v106, %v392
    %394 = vmatmul.f32.gmra.mxu0 %v235
    %v395 = vpop.f32.mrf.mxu0
    %v396 = vadd.f32 %v106, %v395
    %397 = vmatmul.f32.gmra.mxu0 %v238
    %v398 = vpop.f32.mrf.mxu0
    %v399 = vadd.f32 %v106, %v398
    %400 = vmatmul.f32.gmra.mxu0 %v241
    %v401 = vpop.f32.mrf.mxu0
    %v402 = vadd.f32 %v106, %v401
    %403 = vmatmul.f32.gmra.mxu0 %v244
    %v404 = vpop.f32.mrf.mxu0
    %v405 = vadd.f32 %v106, %v404
    %406 = vmatmul.f32.gmra.mxu0 %v247
    %v407 = vpop.f32.mrf.mxu0
    %v408 = vadd.f32 %v106, %v407
    %409 = vmatmul.f32.gmra.mxu0 %v250
    %v410 = vpop.f32.mrf.mxu0
    %v411 = vadd.f32 %v106, %v410
    %412 = vdwg.mxu0
    %v413 = vmul.f32 %v270, %v270
    %v414 = vmul.f32 %v273, %v273
    %v415 = vmul.f32 %v276, %v276
    %v416 = vmul.f32 %v279, %v279
    %v417 = vmul.f32 %v282, %v282
    %v418 = vmul.f32 %v285, %v285
    %v419 = vmul.f32 %v288, %v288
    %v420 = vmul.f32 %v291, %v291
    %v421 = vmul.f32 %v294, %v294
    %v422 = vmul.f32 %v297, %v297
    %v423 = vmul.f32 %v300, %v300
    %v424 = vmul.f32 %v303, %v303
    %v425 = vmul.f32 %v306, %v306
    %v426 = vmul.f32 %v309, %v309
    %v427 = vmul.f32 %v312, %v312
    %v428 = vmul.f32 %v315, %v315
    %v429 = vmul.f32 %v318, %v318
    %v430 = vmul.f32 %v321, %v321
    %v431 = vmul.f32 %v324, %v324
    %v432 = vmul.f32 %v327, %v327
    %v433 = vmul.f32 %v330, %v330
    %v434 = vmul.f32 %v333, %v333
    %v435 = vmul.f32 %v336, %v336
    %v436 = vmul.f32 %v339, %v339
    %v437 = vmul.f32 %v342, %v342
    %v438 = vmul.f32 %v345, %v345
    %v439 = vmul.f32 %v348, %v348
    %v440 = vmul.f32 %v351, %v351
    %v441 = vmul.f32 %v354, %v354
    %v442 = vmul.f32 %v357, %v357
    %v443 = vmul.f32 %v360, %v360
    %v444 = vmul.f32 %v363, %v363
    %v445 = vmul.f32 %v366, %v366
    %v446 = vmul.f32 %v369, %v369
    %v447 = vmul.f32 %v372, %v372
    %v448 = vmul.f32 %v375, %v375
    %v449 = vmul.f32 %v378, %v378
    %v450 = vmul.f32 %v381, %v381
    %v451 = vmul.f32 %v384, %v384
    %v452 = vmul.f32 %v387, %v387
    %v453 = vmul.f32 %v390, %v390
    %v454 = vmul.f32 %v393, %v393
    %v455 = vmul.f32 %v396, %v396
    %v456 = vmul.f32 %v399, %v399
    %v457 = vmul.f32 %v402, %v402
    %v458 = vmul.f32 %v405, %v405
    %v459 = vmul.f32 %v408, %v408
    %v460 = vmul.f32 %v411, %v411
    %v461 = vmul.f32 %v270, %v413
    %v462 = vmul.f32 %v273, %v414
    %v463 = vmul.f32 %v276, %v415
    %v464 = vmul.f32 %v279, %v416
    %v465 = vmul.f32 %v282, %v417
    %v466 = vmul.f32 %v285, %v418
    %v467 = vmul.f32 %v288, %v419
    %v468 = vmul.f32 %v291, %v420
    %v469 = vmul.f32 %v294, %v421
    %v470 = vmul.f32 %v297, %v422
    %v471 = vmul.f32 %v300, %v423
    %v472 = vmul.f32 %v303, %v424
    %v473 = vmul.f32 %v306, %v425
    %v474 = vmul.f32 %v309, %v426
    %v475 = vmul.f32 %v312, %v427
    %v476 = vmul.f32 %v315, %v428
    %v477 = vmul.f32 %v318, %v429
    %v478 = vmul.f32 %v321, %v430
    %v479 = vmul.f32 %v324, %v431
    %v480 = vmul.f32 %v327, %v432
    %v481 = vmul.f32 %v330, %v433
    %v482 = vmul.f32 %v333, %v434
    %v483 = vmul.f32 %v336, %v435
    %v484 = vmul.f32 %v339, %v436
    %v485 = vmul.f32 %v342, %v437
    %v486 = vmul.f32 %v345, %v438
    %v487 = vmul.f32 %v348, %v439
    %v488 = vmul.f32 %v351, %v440
    %v489 = vmul.f32 %v354, %v441
    %v490 = vmul.f32 %v357, %v442
    %v491 = vmul.f32 %v360, %v443
    %v492 = vmul.f32 %v363, %v444
    %v493 = vmul.f32 %v366, %v445
    %v494 = vmul.f32 %v369, %v446
    %v495 = vmul.f32 %v372, %v447
    %v496 = vmul.f32 %v375, %v448
    %v497 = vmul.f32 %v378, %v449
    %v498 = vmul.f32 %v381, %v450
    %v499 = vmul.f32 %v384, %v451
    %v500 = vmul.f32 %v387, %v452
    %v501 = vmul.f32 %v390, %v453
    %v502 = vmul.f32 %v393, %v454
    %v503 = vmul.f32 %v396, %v455
    %v504 = vmul.f32 %v399, %v456
    %v505 = vmul.f32 %v402, %v457
    %v506 = vmul.f32 %v405, %v458
    %v507 = vmul.f32 %v408, %v459
    %v508 = vmul.f32 %v411, %v460
    %v509 = vmul.f32 %v461, 0.044715
    %v510 = vmul.f32 %v462, 0.044715
    %v511 = vmul.f32 %v463, 0.044715
    %v512 = vmul.f32 %v464, 0.044715
    %v513 = vmul.f32 %v465, 0.044715
    %v514 = vmul.f32 %v466, 0.044715
    %v515 = vmul.f32 %v467, 0.044715
    %v516 = vmul.f32 %v468, 0.044715
    %v517 = vmul.f32 %v469, 0.044715
    %v518 = vmul.f32 %v470, 0.044715
    %v519 = vmul.f32 %v471, 0.044715
    %v520 = vmul.f32 %v472, 0.044715
    %v521 = vmul.f32 %v473, 0.044715
    %v522 = vmul.f32 %v474, 0.044715
    %v523 = vmul.f32 %v475, 0.044715
    %v524 = vmul.f32 %v476, 0.044715
    %v525 = vmul.f32 %v477, 0.044715
    %v526 = vmul.f32 %v478, 0.044715
    %v527 = vmul.f32 %v479, 0.044715
    %v528 = vmul.f32 %v480, 0.044715
    %v529 = vmul.f32 %v481, 0.044715
    %v530 = vmul.f32 %v482, 0.044715
    %v531 = vmul.f32 %v483, 0.044715
    %v532 = vmul.f32 %v484, 0.044715
    %v533 = vmul.f32 %v485, 0.044715
    %v534 = vmul.f32 %v486, 0.044715
    %v535 = vmul.f32 %v487, 0.044715
    %v536 = vmul.f32 %v488, 0.044715
    %v537 = vmul.f32 %v489, 0.044715
    %v538 = vmul.f32 %v490, 0.044715
    %v539 = vmul.f32 %v491, 0.044715
    %v540 = vmul.f32 %v492, 0.044715
    %v541 = vmul.f32 %v493, 0.044715
    %v542 = vmul.f32 %v494, 0.044715
    %v543 = vmul.f32 %v495, 0.044715
    %v544 = vmul.f32 %v496, 0.044715
    %v545 = vmul.f32 %v497, 0.044715
    %v546 = vmul.f32 %v498, 0.044715
    %v547 = vmul.f32 %v499, 0.044715
    %v548 = vmul.f32 %v500, 0.044715
    %v549 = vmul.f32 %v501, 0.044715
    %v550 = vmul.f32 %v502, 0.044715
    %v551 = vmul.f32 %v503, 0.044715
    %v552 = vmul.f32 %v504, 0.044715
    %v553 = vmul.f32 %v505, 0.044715
    %v554 = vmul.f32 %v506, 0.044715
    %v555 = vmul.f32 %v507, 0.044715
    %v556 = vmul.f32 %v508, 0.044715
    %v557 = vadd.f32 %v270, %v509
    %v558 = vadd.f32 %v273, %v510
    %v559 = vadd.f32 %v276, %v511
    %v560 = vadd.f32 %v279, %v512
    %v561 = vadd.f32 %v282, %v513
    %v562 = vadd.f32 %v285, %v514
    %v563 = vadd.f32 %v288, %v515
    %v564 = vadd.f32 %v291, %v516
    %v565 = vadd.f32 %v294, %v517
    %v566 = vadd.f32 %v297, %v518
    %v567 = vadd.f32 %v300, %v519
    %v568 = vadd.f32 %v303, %v520
    %v569 = vadd.f32 %v306, %v521
    %v570 = vadd.f32 %v309, %v522
    %v571 = vadd.f32 %v312, %v523
    %v572 = vadd.f32 %v315, %v524
    %v573 = vadd.f32 %v318, %v525
    %v574 = vadd.f32 %v321, %v526
    %v575 = vadd.f32 %v324, %v527
    %v576 = vadd.f32 %v327, %v528
    %v577 = vadd.f32 %v330, %v529
    %v578 = vadd.f32 %v333, %v530
    %v579 = vadd.f32 %v336, %v531
    %v580 = vadd.f32 %v339, %v532
    %v581 = vadd.f32 %v342, %v533
    %v582 = vadd.f32 %v345, %v534
    %v583 = vadd.f32 %v348, %v535
    %v584 = vadd.f32 %v351, %v536
    %v585 = vadd.f32 %v354, %v537
    %v586 = vadd.f32 %v357, %v538
    %v587 = vadd.f32 %v360, %v539
    %v588 = vadd.f32 %v363, %v540
    %v589 = vadd.f32 %v366, %v541
    %v590 = vadd.f32 %v369, %v542
    %v591 = vadd.f32 %v372, %v543
    %v592 = vadd.f32 %v375, %v544
    %v593 = vadd.f32 %v378, %v545
    %v594 = vadd.f32 %v381, %v546
    %v595 = vadd.f32 %v384, %v547
    %v596 = vadd.f32 %v387, %v548
    %v597 = vadd.f32 %v390, %v549
    %v598 = vadd.f32 %v393, %v550
    %v599 = vadd.f32 %v396, %v551
    %v600 = vadd.f32 %v399, %v552
    %v601 = vadd.f32 %v402, %v553
    %v602 = vadd.f32 %v405, %v554
    %v603 = vadd.f32 %v408, %v555
    %v604 = vadd.f32 %v411, %v556
    %v605 = vmul.f32 %v557, 0.7978846
    %v606 = vmul.f32 %v558, 0.7978846
    %v607 = vmul.f32 %v559, 0.7978846
    %v608 = vmul.f32 %v560, 0.7978846
    %v609 = vmul.f32 %v561, 0.7978846
    %v610 = vmul.f32 %v562, 0.7978846
    %v611 = vmul.f32 %v563, 0.7978846
    %v612 = vmul.f32 %v564, 0.7978846
    %v613 = vmul.f32 %v565, 0.7978846
    %v614 = vmul.f32 %v566, 0.7978846
    %v615 = vmul.f32 %v567, 0.7978846
    %v616 = vmul.f32 %v568, 0.7978846
    %v617 = vmul.f32 %v569, 0.7978846
    %v618 = vmul.f32 %v570, 0.7978846
    %v619 = vmul.f32 %v571, 0.7978846
    %v620 = vmul.f32 %v572, 0.7978846
    %v621 = vmul.f32 %v573, 0.7978846
    %v622 = vmul.f32 %v574, 0.7978846
    %v623 = vmul.f32 %v575, 0.7978846
    %v624 = vmul.f32 %v576, 0.7978846
    %v625 = vmul.f32 %v577, 0.7978846
    %v626 = vmul.f32 %v578, 0.7978846
    %v627 = vmul.f32 %v579, 0.7978846
    %v628 = vmul.f32 %v580, 0.7978846
    %v629 = vmul.f32 %v581, 0.7978846
    %v630 = vmul.f32 %v582, 0.7978846
    %v631 = vmul.f32 %v583, 0.7978846
    %v632 = vmul.f32 %v584, 0.7978846
    %v633 = vmul.f32 %v585, 0.7978846
    %v634 = vmul.f32 %v586, 0.7978846
    %v635 = vmul.f32 %v587, 0.7978846
    %v636 = vmul.f32 %v588, 0.7978846
    %v637 = vmul.f32 %v589, 0.7978846
    %v638 = vmul.f32 %v590, 0.7978846
    %v639 = vmul.f32 %v591, 0.7978846
    %v640 = vmul.f32 %v592, 0.7978846
    %v641 = vmul.f32 %v593, 0.7978846
    %v642 = vmul.f32 %v594, 0.7978846
    %v643 = vmul.f32 %v595, 0.7978846
    %v644 = vmul.f32 %v596, 0.7978846
    %v645 = vmul.f32 %v597, 0.7978846
    %v646 = vmul.f32 %v598, 0.7978846
    %v647 = vmul.f32 %v599, 0.7978846
    %v648 = vmul.f32 %v600, 0.7978846
    %v649 = vmul.f32 %v601, 0.7978846
    %v650 = vmul.f32 %v602, 0.7978846
    %v651 = vmul.f32 %v603, 0.7978846
    %v652 = vmul.f32 %v604, 0.7978846
    %v653 = vtanh.pop %v605
    %v654 = vtanh.pop %v606
    %v655 = vtanh.pop %v607
    %v656 = vtanh.pop %v608
    %v657 = vtanh.pop %v609
    %v658 = vtanh.pop %v610
    %v659 = vtanh.pop %v611
    %v660 = vtanh.pop %v612
    %v661 = vtanh.pop %v613
    %v662 = vtanh.pop %v614
    %v663 = vtanh.pop %v615
    %v664 = vtanh.pop %v616
    %v665 = vtanh.pop %v617
    %v666 = vtanh.pop %v618
    %v667 = vtanh.pop %v619
    %v668 = vtanh.pop %v620
    %v669 = vtanh.pop %v621
    %v670 = vtanh.pop %v622
    %v671 = vtanh.pop %v623
    %v672 = vtanh.pop %v624
    %v673 = vtanh.pop %v625
    %v674 = vtanh.pop %v626
    %v675 = vtanh.pop %v627
    %v676 = vtanh.pop %v628
    %v677 = vtanh.pop %v629
    %v678 = vtanh.pop %v630
    %v679 = vtanh.pop %v631
    %v680 = vtanh.pop %v632
    %v681 = vtanh.pop %v633
    %v682 = vtanh.pop %v634
    %v683 = vtanh.pop %v635
    %v684 = vtanh.pop %v636
    %v685 = vtanh.pop %v637
    %v686 = vtanh.pop %v638
    %v687 = vtanh.pop %v639
    %v688 = vtanh.pop %v640
    %v689 = vtanh.pop %v641
    %v690 = vtanh.pop %v642
    %v691 = vtanh.pop %v643
    %v692 = vtanh.pop %v644
    %v693 = vtanh.pop %v645
    %v694 = vtanh.pop %v646
    %v695 = vtanh.pop %v647
    %v696 = vtanh.pop %v648
    %v697 = vtanh.pop %v649
    %v698 = vtanh.pop %v650
    %v699 = vtanh.pop %v651
    %v700 = vtanh.pop %v652
    %v701 = vadd.f32 %v653, 1.0
    %v702 = vadd.f32 %v654, 1.0
    %v703 = vadd.f32 %v655, 1.0
    %v704 = vadd.f32 %v656, 1.0
    %v705 = vadd.f32 %v657, 1.0
    %v706 = vadd.f32 %v658, 1.0
    %v707 = vadd.f32 %v659, 1.0
    %v708 = vadd.f32 %v660, 1.0
    %v709 = vadd.f32 %v661, 1.0
    %v710 = vadd.f32 %v662, 1.0
    %v711 = vadd.f32 %v663, 1.0
    %v712 = vadd.f32 %v664, 1.0
    %v713 = vadd.f32 %v665, 1.0
    %v714 = vadd.f32 %v666, 1.0
    %v715 = vadd.f32 %v667, 1.0
    %v716 = vadd.f32 %v668, 1.0
    %v717 = vadd.f32 %v669, 1.0
    %v718 = vadd.f32 %v670, 1.0
    %v719 = vadd.f32 %v671, 1.0
    %v720 = vadd.f32 %v672, 1.0
    %v721 = vadd.f32 %v673, 1.0
    %v722 = vadd.f32 %v674, 1.0
    %v723 = vadd.f32 %v675, 1.0
    %v724 = vadd.f32 %v676, 1.0
    %v725 = vadd.f32 %v677, 1.0
    %v726 = vadd.f32 %v678, 1.0
    %v727 = vadd.f32 %v679, 1.0
    %v728 = vadd.f32 %v680, 1.0
    %v729 = vadd.f32 %v681, 1.0
    %v730 = vadd.f32 %v682, 1.0
    %v731 = vadd.f32 %v683, 1.0
    %v732 = vadd.f32 %v684, 1.0
    %v733 = vadd.f32 %v685, 1.0
    %v734 = vadd.f32 %v686, 1.0
    %v735 = vadd.f32 %v687, 1.0
    %v736 = vadd.f32 %v688, 1.0
    %v737 = vadd.f32 %v689, 1.0
    %v738 = vadd.f32 %v690, 1.0
    %v739 = vadd.f32 %v691, 1.0
    %v740 = vadd.f32 %v692, 1.0
    %v741 = vadd.f32 %v693, 1.0
    %v742 = vadd.f32 %v694, 1.0
    %v743 = vadd.f32 %v695, 1.0
    %v744 = vadd.f32 %v696, 1.0
    %v745 = vadd.f32 %v697, 1.0
    %v746 = vadd.f32 %v698, 1.0
    %v747 = vadd.f32 %v699, 1.0
    %v748 = vadd.f32 %v700, 1.0
    %v749 = vmul.f32 %v701, 0.5
    %v750 = vmul.f32 %v702, 0.5
    %v751 = vmul.f32 %v703, 0.5
    %v752 = vmul.f32 %v704, 0.5
    %v753 = vmul.f32 %v705, 0.5
    %v754 = vmul.f32 %v706, 0.5
    %v755 = vmul.f32 %v707, 0.5
    %v756 = vmul.f32 %v708, 0.5
    %v757 = vmul.f32 %v709, 0.5
    %v758 = vmul.f32 %v710, 0.5
    %v759 = vmul.f32 %v711, 0.5
    %v760 = vmul.f32 %v712, 0.5
    %v761 = vmul.f32 %v713, 0.5
    %v762 = vmul.f32 %v714, 0.5
    %v763 = vmul.f32 %v715, 0.5
    %v764 = vmul.f32 %v716, 0.5
    %v765 = vmul.f32 %v717, 0.5
    %v766 = vmul.f32 %v718, 0.5
    %v767 = vmul.f32 %v719, 0.5
    %v768 = vmul.f32 %v720, 0.5
    %v769 = vmul.f32 %v721, 0.5
    %v770 = vmul.f32 %v722, 0.5
    %v771 = vmul.f32 %v723, 0.5
    %v772 = vmul.f32 %v724, 0.5
    %v773 = vmul.f32 %v725, 0.5
    %v774 = vmul.f32 %v726, 0.5
    %v775 = vmul.f32 %v727, 0.5
    %v776 = vmul.f32 %v728, 0.5
    %v777 = vmul.f32 %v729, 0.5
    %v778 = vmul.f32 %v730, 0.5
    %v779 = vmul.f32 %v731, 0.5
    %v780 = vmul.f32 %v732, 0.5
    %v781 = vmul.f32 %v733, 0.5
    %v782 = vmul.f32 %v734, 0.5
    %v783 = vmul.f32 %v735, 0.5
    %v784 = vmul.f32 %v736, 0.5
    %v785 = vmul.f32 %v737, 0.5
    %v786 = vmul.f32 %v738, 0.5
    %v787 = vmul.f32 %v739, 0.5
    %v788 = vmul.f32 %v740, 0.5
    %v789 = vmul.f32 %v741, 0.5
    %v790 = vmul.f32 %v742, 0.5
    %v791 = vmul.f32 %v743, 0.5
    %v792 = vmul.f32 %v744, 0.5
    %v793 = vmul.f32 %v745, 0.5
    %v794 = vmul.f32 %v746, 0.5
    %v795 = vmul.f32 %v747, 0.5
    %v796 = vmul.f32 %v748, 0.5
    %v797 = vmul.f32 %v270, %v749
    %v798 = vmul.f32 %v273, %v750
    %v799 = vmul.f32 %v276, %v751
    %v800 = vmul.f32 %v279, %v752
    %v801 = vmul.f32 %v282, %v753
    %v802 = vmul.f32 %v285, %v754
    %v803 = vmul.f32 %v288, %v755
    %v804 = vmul.f32 %v291, %v756
    %v805 = vmul.f32 %v294, %v757
    %v806 = vmul.f32 %v297, %v758
    %v807 = vmul.f32 %v300, %v759
    %v808 = vmul.f32 %v303, %v760
    %v809 = vmul.f32 %v306, %v761
    %v810 = vmul.f32 %v309, %v762
    %v811 = vmul.f32 %v312, %v763
    %v812 = vmul.f32 %v315, %v764
    %v813 = vmul.f32 %v318, %v765
    %v814 = vmul.f32 %v321, %v766
    %v815 = vmul.f32 %v324, %v767
    %v816 = vmul.f32 %v327, %v768
    %v817 = vmul.f32 %v330, %v769
    %v818 = vmul.f32 %v333, %v770
    %v819 = vmul.f32 %v336, %v771
    %v820 = vmul.f32 %v339, %v772
    %v821 = vmul.f32 %v342, %v773
    %v822 = vmul.f32 %v345, %v774
    %v823 = vmul.f32 %v348, %v775
    %v824 = vmul.f32 %v351, %v776
    %v825 = vmul.f32 %v354, %v777
    %v826 = vmul.f32 %v357, %v778
    %v827 = vmul.f32 %v360, %v779
    %v828 = vmul.f32 %v363, %v780
    %v829 = vmul.f32 %v366, %v781
    %v830 = vmul.f32 %v369, %v782
    %v831 = vmul.f32 %v372, %v783
    %v832 = vmul.f32 %v375, %v784
    %v833 = vmul.f32 %v378, %v785
    %v834 = vmul.f32 %v381, %v786
    %v835 = vmul.f32 %v384, %v787
    %v836 = vmul.f32 %v387, %v788
    %v837 = vmul.f32 %v390, %v789
    %v838 = vmul.f32 %v393, %v790
    %v839 = vmul.f32 %v396, %v791
    %v840 = vmul.f32 %v399, %v792
    %v841 = vmul.f32 %v402, %v793
    %v842 = vmul.f32 %v405, %v794
    %v843 = vmul.f32 %v408, %v795
    %v844 = vmul.f32 %v411, %v796
    %v845 = vld [vmem:[%s3] sm:$0xff]
    %v846 = vld [vmem:[%s3 + $0x8] sm:$0xff]
    %v847 = vld [vmem:[%s3 + $0x10] sm:$0xff]
    %v848 = vld [vmem:[%s3 + $0x18] sm:$0xff]
    %v849 = vperm.slane %v53, 1
    %v851 = vsel %vm107, %v797, 0
    %v854 = vsel %vm107, %v798, 0
    %v857 = vsel %vm107, %v799, 0
    %v860 = vsel %vm107, %v800, 0
    %v863 = vsel %vm107, %v801, 0
    %v866 = vsel %vm107, %v802, 0
    %v869 = vsel %vm107, %v803, 0
    %v872 = vsel %vm107, %v804, 0
    %v875 = vsel %vm107, %v805, 0
    %v878 = vsel %vm107, %v806, 0
    %v881 = vsel %vm107, %v807, 0
    %v884 = vsel %vm107, %v808, 0
    %v887 = vsel %vm107, %v809, 0
    %v890 = vsel %vm107, %v810, 0
    %v893 = vsel %vm107, %v811, 0
    %v896 = vsel %vm107, %v812, 0
    %v899 = vsel %vm107, %v813, 0
    %v902 = vsel %vm107, %v814, 0
    %v905 = vsel %vm107, %v815, 0
    %v908 = vsel %vm107, %v816, 0
    %v911 = vsel %vm107, %v817, 0
    %v914 = vsel %vm107, %v818, 0
    %v917 = vsel %vm107, %v819, 0
    %v920 = vsel %vm107, %v820, 0
    %v923 = vsel %vm107, %v821, 0
    %v926 = vsel %vm107, %v822, 0
    %v929 = vsel %vm107, %v823, 0
    %v932 = vsel %vm107, %v824, 0
    %v935 = vsel %vm107, %v825, 0
    %v938 = vsel %vm107, %v826, 0
    %v941 = vsel %vm107, %v827, 0
    %v944 = vsel %vm107, %v828, 0
    %v947 = vsel %vm107, %v829, 0
    %v950 = vsel %vm107, %v830, 0
    %v953 = vsel %vm107, %v831, 0
    %v956 = vsel %vm107, %v832, 0
    %v959 = vsel %vm107, %v833, 0
    %v962 = vsel %vm107, %v834, 0
    %v965 = vsel %vm107, %v835, 0
    %v968 = vsel %vm107, %v836, 0
    %v971 = vsel %vm107, %v837, 0
    %v974 = vsel %vm107, %v838, 0
    %v977 = vsel %vm107, %v839, 0
    %v980 = vsel %vm107, %v840, 0
    %v983 = vsel %vm107, %v841, 0
    %v986 = vsel %vm107, %v842, 0
    %v989 = vsel %vm107, %v843, 0
    %v992 = vsel %vm107, %v844, 0
    %994 = vmatpush.msra.mxu0 0.0
    %995 = vmatpush.msra.mxu0 0.0
    %996 = vmatpush.msra.mxu0 0.0
    %997 = vmatpush.msra.mxu0 0.0
    %998 = vmatpush.msra.mxu0 0.0
    %999 = vmatpush.msra.mxu0 0.0
    %1000 = vmatpush.msra.mxu0 0.0
    %1001 = vmatpush.msra.mxu0 0.0
    %1002 = vmatpush.msra.mxu0 0.0
    %1003 = vmatpush.msra.mxu0 0.0
    %1004 = vmatpush.msra.mxu0 0.0
    %1005 = vmatpush.msra.mxu0 0.0
    %1006 = vmatpush.msra.mxu0 %v848
    %1007 = vmatpush.msra.mxu0 %v847
    %1008 = vmatpush.msra.mxu0 %v846
    %1009 = vmatpush.msra.mxu0 %v845
    %1010 = vmatmul.f32.gmra.mxu0 %v851
    %v1011 = vpop.f32.mrf.mxu0
    %v1012 = vadd.f32 %v849, %v1011
    %1013 = vmatmul.f32.gmra.mxu0 %v854
    %v1014 = vpop.f32.mrf.mxu0
    %v1015 = vadd.f32 %v849, %v1014
    %1016 = vmatmul.f32.gmra.mxu0 %v857
    %v1017 = vpop.f32.mrf.mxu0
    %v1018 = vadd.f32 %v849, %v1017
    %1019 = vmatmul.f32.gmra.mxu0 %v860
    %v1020 = vpop.f32.mrf.mxu0
    %v1021 = vadd.f32 %v849, %v1020
    %1022 = vmatmul.f32.gmra.mxu0 %v863
    %v1023 = vpop.f32.mrf.mxu0
    %v1024 = vadd.f32 %v849, %v1023
    %1025 = vmatmul.f32.gmra.mxu0 %v866
    %v1026 = vpop.f32.mrf.mxu0
    %v1027 = vadd.f32 %v849, %v1026
    %1028 = vmatmul.f32.gmra.mxu0 %v869
    %v1029 = vpop.f32.mrf.mxu0
    %v1030 = vadd.f32 %v849, %v1029
    %1031 = vmatmul.f32.gmra.mxu0 %v872
    %v1032 = vpop.f32.mrf.mxu0
    %v1033 = vadd.f32 %v849, %v1032
    %1034 = vmatmul.f32.gmra.mxu0 %v875
    %v1035 = vpop.f32.mrf.mxu0
    %v1036 = vadd.f32 %v849, %v1035
    %1037 = vmatmul.f32.gmra.mxu0 %v878
    %v1038 = vpop.f32.mrf.mxu0
    %v1039 = vadd.f32 %v849, %v1038
    %1040 = vmatmul.f32.gmra.mxu0 %v881
    %v1041 = vpop.f32.mrf.mxu0
    %v1042 = vadd.f32 %v849, %v1041
    %1043 = vmatmul.f32.gmra.mxu0 %v884
    %v1044 = vpop.f32.mrf.mxu0
    %v1045 = vadd.f32 %v849, %v1044
    %1046 = vmatmul.f32.gmra.mxu0 %v887
    %v1047 = vpop.f32.mrf.mxu0
    %v1048 = vadd.f32 %v849, %v1047
    %1049 = vmatmul.f32.gmra.mxu0 %v890
    %v1050 = vpop.f32.mrf.mxu0
    %v1051 = vadd.f32 %v849, %v1050
    %1052 = vmatmul.f32.gmra.mxu0 %v893
    %v1053 = vpop.f32.mrf.mxu0
    %v1054 = vadd.f32 %v849, %v1053
    %1055 = vmatmul.f32.gmra.mxu0 %v896
    %v1056 = vpop.f32.mrf.mxu0
    %v1057 = vadd.f32 %v849, %v1056
    %1058 = vmatmul.f32.gmra.mxu0 %v899
    %v1059 = vpop.f32.mrf.mxu0
    %v1060 = vadd.f32 %v849, %v1059
    %1061 = vmatmul.f32.gmra.mxu0 %v902
    %v1062 = vpop.f32.mrf.mxu0
    %v1063 = vadd.f32 %v849, %v1062
    %1064 = vmatmul.f32.gmra.mxu0 %v905
    %v1065 = vpop.f32.mrf.mxu0
    %v1066 = vadd.f32 %v849, %v1065
    %1067 = vmatmul.f32.gmra.mxu0 %v908
    %v1068 = vpop.f32.mrf.mxu0
    %v1069 = vadd.f32 %v849, %v1068
    %1070 = vmatmul.f32.gmra.mxu0 %v911
    %v1071 = vpop.f32.mrf.mxu0
    %v1072 = vadd.f32 %v849, %v1071
    %1073 = vmatmul.f32.gmra.mxu0 %v914
    %v1074 = vpop.f32.mrf.mxu0
    %v1075 = vadd.f32 %v849, %v1074
    %1076 = vmatmul.f32.gmra.mxu0 %v917
    %v1077 = vpop.f32.mrf.mxu0
    %v1078 = vadd.f32 %v849, %v1077
    %1079 = vmatmul.f32.gmra.mxu0 %v920
    %v1080 = vpop.f32.mrf.mxu0
    %v1081 = vadd.f32 %v849, %v1080
    %1082 = vmatmul.f32.gmra.mxu0 %v923
    %v1083 = vpop.f32.mrf.mxu0
    %v1084 = vadd.f32 %v849, %v1083
    %1085 = vmatmul.f32.gmra.mxu0 %v926
    %v1086 = vpop.f32.mrf.mxu0
    %v1087 = vadd.f32 %v849, %v1086
    %1088 = vmatmul.f32.gmra.mxu0 %v929
    %v1089 = vpop.f32.mrf.mxu0
    %v1090 = vadd.f32 %v849, %v1089
    %1091 = vmatmul.f32.gmra.mxu0 %v932
    %v1092 = vpop.f32.mrf.mxu0
    %v1093 = vadd.f32 %v849, %v1092
    %1094 = vmatmul.f32.gmra.mxu0 %v935
    %v1095 = vpop.f32.mrf.mxu0
    %v1096 = vadd.f32 %v849, %v1095
    %1097 = vmatmul.f32.gmra.mxu0 %v938
    %v1098 = vpop.f32.mrf.mxu0
    %v1099 = vadd.f32 %v849, %v1098
    %1100 = vmatmul.f32.gmra.mxu0 %v941
    %v1101 = vpop.f32.mrf.mxu0
    %v1102 = vadd.f32 %v849, %v1101
    %1103 = vmatmul.f32.gmra.mxu0 %v944
    %v1104 = vpop.f32.mrf.mxu0
    %v1105 = vadd.f32 %v849, %v1104
    %1106 = vmatmul.f32.gmra.mxu0 %v947
    %v1107 = vpop.f32.mrf.mxu0
    %v1108 = vadd.f32 %v849, %v1107
    %1109 = vmatmul.f32.gmra.mxu0 %v950
    %v1110 = vpop.f32.mrf.mxu0
    %v1111 = vadd.f32 %v849, %v1110
    %1112 = vmatmul.f32.gmra.mxu0 %v953
    %v1113 = vpop.f32.mrf.mxu0
    %v1114 = vadd.f32 %v849, %v1113
    %1115 = vmatmul.f32.gmra.mxu0 %v956
    %v1116 = vpop.f32.mrf.mxu0
    %v1117 = vadd.f32 %v849, %v1116
    %1118 = vmatmul.f32.gmra.mxu0 %v959
    %v1119 = vpop.f32.mrf.mxu0
    %v1120 = vadd.f32 %v849, %v1119
    %1121 = vmatmul.f32.gmra.mxu0 %v962
    %v1122 = vpop.f32.mrf.mxu0
    %v1123 = vadd.f32 %v849, %v1122
    %1124 = vmatmul.f32.gmra.mxu0 %v965
    %v1125 = vpop.f32.mrf.mxu0
    %v1126 = vadd.f32 %v849, %v1125
    %1127 = vmatmul.f32.gmra.mxu0 %v968
    %v1128 = vpop.f32.mrf.mxu0
    %v1129 = vadd.f32 %v849, %v1128
    %1130 = vmatmul.f32.gmra.mxu0 %v971
    %v1131 = vpop.f32.mrf.mxu0
    %v1132 = vadd.f32 %v849, %v1131
    %1133 = vmatmul.f32.gmra.mxu0 %v974
    %v1134 = vpop.f32.mrf.mxu0
    %v1135 = vadd.f32 %v849, %v1134
    %1136 = vmatmul.f32.gmra.mxu0 %v977
    %v1137 = vpop.f32.mrf.mxu0
    %v1138 = vadd.f32 %v849, %v1137
    %1139 = vmatmul.f32.gmra.mxu0 %v980
    %v1140 = vpop.f32.mrf.mxu0
    %v1141 = vadd.f32 %v849, %v1140
    %1142 = vmatmul.f32.gmra.mxu0 %v983
    %v1143 = vpop.f32.mrf.mxu0
    %v1144 = vadd.f32 %v849, %v1143
    %1145 = vmatmul.f32.gmra.mxu0 %v986
    %v1146 = vpop.f32.mrf.mxu0
    %v1147 = vadd.f32 %v849, %v1146
    %1148 = vmatmul.f32.gmra.mxu0 %v989
    %v1149 = vpop.f32.mrf.mxu0
    %v1150 = vadd.f32 %v849, %v1149
    %1151 = vmatmul.f32.gmra.mxu0 %v992
    %v1152 = vpop.f32.mrf.mxu0
    %v1153 = vadd.f32 %v849, %v1152
    %1154 = vdwg.mxu0
    %vm1155 = vcmask 130048
    %v1156 = vsel %vm1155, %v1012, -inf
    %v1157 = vsel %vm1155, %v1015, -inf
    %v1158 = vmax.f32 %v1156, %v1157
    %v1159 = vsel %vm1155, %v1018, -inf
    %v1160 = vmax.f32 %v1158, %v1159
    %v1161 = vrot.slane %v1160, 4
    %v1162 = vmax.f32 %v1160, %v1161
    %v1163 = vrot.slane %v1162, 2
    %v1164 = vmax.f32 %v1162, %v1163
    %v1165 = vrot.slane %v1164, 1
    %v1166 = vmax.f32 %v1164, %v1165
    %v1167 = vsel %vm1155, %v1021, -inf
    %v1168 = vsel %vm1155, %v1024, -inf
    %v1169 = vmax.f32 %v1167, %v1168
    %v1170 = vsel %vm1155, %v1027, -inf
    %v1171 = vmax.f32 %v1169, %v1170
    %v1172 = vrot.slane %v1171, 4
    %v1173 = vmax.f32 %v1171, %v1172
    %v1174 = vrot.slane %v1173, 2
    %v1175 = vmax.f32 %v1173, %v1174
    %v1176 = vrot.slane %v1175, 1
    %v1177 = vmax.f32 %v1175, %v1176
    %v1178 = vsel %vm1155, %v1030, -inf
    %v1179 = vsel %vm1155, %v1033, -inf
    %v1180 = vmax.f32 %v1178, %v1179
    %v1181 = vsel %vm1155, %v1036, -inf
    %v1182 = vmax.f32 %v1180, %v1181
    %v1183 = vrot.slane %v1182, 4
    %v1184 = vmax.f32 %v1182, %v1183
    %v1185 = vrot.slane %v1184, 2
    %v1186 = vmax.f32 %v1184, %v1185
    %v1187 = vrot.slane %v1186, 1
    %v1188 = vmax.f32 %v1186, %v1187
    %v1189 = vsel %vm1155, %v1039, -inf
    %v1190 = vsel %vm1155, %v1042, -inf
    %v1191 = vmax.f32 %v1189, %v1190
    %v1192 = vsel %vm1155, %v1045, -inf
    %v1193 = vmax.f32 %v1191, %v1192
    %v1194 = vrot.slane %v1193, 4
    %v1195 = vmax.f32 %v1193, %v1194
    %v1196 = vrot.slane %v1195, 2
    %v1197 = vmax.f32 %v1195, %v1196
    %v1198 = vrot.slane %v1197, 1
    %v1199 = vmax.f32 %v1197, %v1198
    %v1200 = vsel %vm1155, %v1048, -inf
    %v1201 = vsel %vm1155, %v1051, -inf
    %v1202 = vmax.f32 %v1200, %v1201
    %v1203 = vsel %vm1155, %v1054, -inf
    %v1204 = vmax.f32 %v1202, %v1203
    %v1205 = vrot.slane %v1204, 4
    %v1206 = vmax.f32 %v1204, %v1205
    %v1207 = vrot.slane %v1206, 2
    %v1208 = vmax.f32 %v1206, %v1207
    %v1209 = vrot.slane %v1208, 1
    %v1210 = vmax.f32 %v1208, %v1209
    %v1211 = vsel %vm1155, %v1057, -inf
    %v1212 = vsel %vm1155, %v1060, -inf
    %v1213 = vmax.f32 %v1211, %v1212
    %v1214 = vsel %vm1155, %v1063, -inf
    %v1215 = vmax.f32 %v1213, %v1214
    %v1216 = vrot.slane %v1215, 4
    %v1217 = vmax.f32 %v1215, %v1216
    %v1218 = vrot.slane %v1217, 2
    %v1219 = vmax.f32 %v1217, %v1218
    %v1220 = vrot.slane %v1219, 1
    %v1221 = vmax.f32 %v1219, %v1220
    %v1222 = vsel %vm1155, %v1066, -inf
    %v1223 = vsel %vm1155, %v1069, -inf
    %v1224 = vmax.f32 %v1222, %v1223
    %v1225 = vsel %vm1155, %v1072, -inf
    %v1226 = vmax.f32 %v1224, %v1225
    %v1227 = vrot.slane %v1226, 4
    %v1228 = vmax.f32 %v1226, %v1227
    %v1229 = vrot.slane %v1228, 2
    %v1230 = vmax.f32 %v1228, %v1229
    %v1231 = vrot.slane %v1230, 1
    %v1232 = vmax.f32 %v1230, %v1231
    %v1233 = vsel %vm1155, %v1075, -inf
    %v1234 = vsel %vm1155, %v1078, -inf
    %v1235 = vmax.f32 %v1233, %v1234
    %v1236 = vsel %vm1155, %v1081, -inf
    %v1237 = vmax.f32 %v1235, %v1236
    %v1238 = vrot.slane %v1237, 4
    %v1239 = vmax.f32 %v1237, %v1238
    %v1240 = vrot.slane %v1239, 2
    %v1241 = vmax.f32 %v1239, %v1240
    %v1242 = vrot.slane %v1241, 1
    %v1243 = vmax.f32 %v1241, %v1242
    %v1244 = vsel %vm1155, %v1084, -inf
    %v1245 = vsel %vm1155, %v1087, -inf
    %v1246 = vmax.f32 %v1244, %v1245
    %v1247 = vsel %vm1155, %v1090, -inf
    %v1248 = vmax.f32 %v1246, %v1247
    %v1249 = vrot.slane %v1248, 4
    %v1250 = vmax.f32 %v1248, %v1249
    %v1251 = vrot.slane %v1250, 2
    %v1252 = vmax.f32 %v1250, %v1251
    %v1253 = vrot.slane %v1252, 1
    %v1254 = vmax.f32 %v1252, %v1253
    %v1255 = vsel %vm1155, %v1093, -inf
    %v1256 = vsel %vm1155, %v1096, -inf
    %v1257 = vmax.f32 %v1255, %v1256
    %v1258 = vsel %vm1155, %v1099, -inf
    %v1259 = vmax.f32 %v1257, %v1258
    %v1260 = vrot.slane %v1259, 4
    %v1261 = vmax.f32 %v1259, %v1260
    %v1262 = vrot.slane %v1261, 2
    %v1263 = vmax.f32 %v1261, %v1262
    %v1264 = vrot.slane %v1263, 1
    %v1265 = vmax.f32 %v1263, %v1264
    %v1266 = vsel %vm1155, %v1102, -inf
    %v1267 = vsel %vm1155, %v1105, -inf
    %v1268 = vmax.f32 %v1266, %v1267
    %v1269 = vsel %vm1155, %v1108, -inf
    %v1270 = vmax.f32 %v1268, %v1269
    %v1271 = vrot.slane %v1270, 4
    %v1272 = vmax.f32 %v1270, %v1271
    %v1273 = vrot.slane %v1272, 2
    %v1274 = vmax.f32 %v1272, %v1273
    %v1275 = vrot.slane %v1274, 1
    %v1276 = vmax.f32 %v1274, %v1275
    %v1277 = vsel %vm1155, %v1111, -inf
    %v1278 = vsel %vm1155, %v1114, -inf
    %v1279 = vmax.f32 %v1277, %v1278
    %v1280 = vsel %vm1155, %v1117, -inf
    %v1281 = vmax.f32 %v1279, %v1280
    %v1282 = vrot.slane %v1281, 4
    %v1283 = vmax.f32 %v1281, %v1282
    %v1284 = vrot.slane %v1283, 2
    %v1285 = vmax.f32 %v1283, %v1284
    %v1286 = vrot.slane %v1285, 1
    %v1287 = vmax.f32 %v1285, %v1286
    %v1288 = vsel %vm1155, %v1120, -inf
    %v1289 = vsel %vm1155, %v1123, -inf
    %v1290 = vmax.f32 %v1288, %v1289
    %v1291 = vsel %vm1155, %v1126, -inf
    %v1292 = vmax.f32 %v1290, %v1291
    %v1293 = vrot.slane %v1292, 4
    %v1294 = vmax.f32 %v1292, %v1293
    %v1295 = vrot.slane %v1294, 2
    %v1296 = vmax.f32 %v1294, %v1295
    %v1297 = vrot.slane %v1296, 1
    %v1298 = vmax.f32 %v1296, %v1297
    %v1299 = vsel %vm1155, %v1129, -inf
    %v1300 = vsel %vm1155, %v1132, -inf
    %v1301 = vmax.f32 %v1299, %v1300
    %v1302 = vsel %vm1155, %v1135, -inf
    %v1303 = vmax.f32 %v1301, %v1302
    %v1304 = vrot.slane %v1303, 4
    %v1305 = vmax.f32 %v1303, %v1304
    %v1306 = vrot.slane %v1305, 2
    %v1307 = vmax.f32 %v1305, %v1306
    %v1308 = vrot.slane %v1307, 1
    %v1309 = vmax.f32 %v1307, %v1308
    %v1310 = vsel %vm1155, %v1138, -inf
    %v1311 = vsel %vm1155, %v1141, -inf
    %v1312 = vmax.f32 %v1310, %v1311
    %v1313 = vsel %vm1155, %v1144, -inf
    %v1314 = vmax.f32 %v1312, %v1313
    %v1315 = vrot.slane %v1314, 4
    %v1316 = vmax.f32 %v1314, %v1315
    %v1317 = vrot.slane %v1316, 2
    %v1318 = vmax.f32 %v1316, %v1317
    %v1319 = vrot.slane %v1318, 1
    %v1320 = vmax.f32 %v1318, %v1319
    %v1321 = vsel %vm1155, %v1147, -inf
    %v1322 = vsel %vm1155, %v1150, -inf
    %v1323 = vmax.f32 %v1321, %v1322
    %v1324 = vsel %vm1155, %v1153, -inf
    %v1325 = vmax.f32 %v1323, %v1324
    %v1326 = vrot.slane %v1325, 4
    %v1327 = vmax.f32 %v1325, %v1326
    %v1328 = vrot.slane %v1327, 2
    %v1329 = vmax.f32 %v1327, %v1328
    %v1330 = vrot.slane %v1329, 1
    %v1331 = vmax.f32 %v1329, %v1330
    %v1332 = vsub.f32 %v1012, %v1166
    %v1333 = vsub.f32 %v1015, %v1166
    %v1334 = vsub.f32 %v1018, %v1166
    %v1335 = vsub.f32 %v1021, %v1177
    %v1336 = vsub.f32 %v1024, %v1177
    %v1337 = vsub.f32 %v1027, %v1177
    %v1338 = vsub.f32 %v1030, %v1188
    %v1339 = vsub.f32 %v1033, %v1188
    %v1340 = vsub.f32 %v1036, %v1188
    %v1341 = vsub.f32 %v1039, %v1199
    %v1342 = vsub.f32 %v1042, %v1199
    %v1343 = vsub.f32 %v1045, %v1199
    %v1344 = vsub.f32 %v1048, %v1210
    %v1345 = vsub.f32 %v1051, %v1210
    %v1346 = vsub.f32 %v1054, %v1210
    %v1347 = vsub.f32 %v1057, %v1221
    %v1348 = vsub.f32 %v1060, %v1221
    %v1349 = vsub.f32 %v1063, %v1221
    %v1350 = vsub.f32 %v1066, %v1232
    %v1351 = vsub.f32 %v1069, %v1232
    %v1352 = vsub.f32 %v1072, %v1232
    %v1353 = vsub.f32 %v1075, %v1243
    %v1354 = vsub.f32 %v1078, %v1243
    %v1355 = vsub.f32 %v1081, %v1243
    %v1356 = vsub.f32 %v1084, %v1254
    %v1357 = vsub.f32 %v1087, %v1254
    %v1358 = vsub.f32 %v1090, %v1254
    %v1359 = vsub.f32 %v1093, %v1265
    %v1360 = vsub.f32 %v1096, %v1265
    %v1361 = vsub.f32 %v1099, %v1265
    %v1362 = vsub.f32 %v1102, %v1276
    %v1363 = vsub.f32 %v1105, %v1276
    %v1364 = vsub.f32 %v1108, %v1276
    %v1365 = vsub.f32 %v1111, %v1287
    %v1366 = vsub.f32 %v1114, %v1287
    %v1367 = vsub.f32 %v1117, %v1287
    %v1368 = vsub.f32 %v1120, %v1298
    %v1369 = vsub.f32 %v1123, %v1298
    %v1370 = vsub.f32 %v1126, %v1298
    %v1371 = vsub.f32 %v1129, %v1309
    %v1372 = vsub.f32 %v1132, %v1309
    %v1373 = vsub.f32 %v1135, %v1309
    %v1374 = vsub.f32 %v1138, %v1320
    %v1375 = vsub.f32 %v1141, %v1320
    %v1376 = vsub.f32 %v1144, %v1320
    %v1377 = vsub.f32 %v1147, %v1331
    %v1378 = vsub.f32 %v1150, %v1331
    %v1379 = vsub.f32 %v1153, %v1331
    %v1380 = vmul.f32 %v1332, 1.442695
    %v1381 = vpow.pop %v1380
    %v1382 = vmul.f32 %v1333, 1.442695
    %v1383 = vpow.pop %v1382
    %v1384 = vmul.f32 %v1334, 1.442695
    %v1385 = vpow.pop %v1384
    %v1386 = vmul.f32 %v1335, 1.442695
    %v1387 = vpow.pop %v1386
    %v1388 = vmul.f32 %v1336, 1.442695
    %v1389 = vpow.pop %v1388
    %v1390 = vmul.f32 %v1337, 1.442695
    %v1391 = vpow.pop %v1390
    %v1392 = vmul.f32 %v1338, 1.442695
    %v1393 = vpow.pop %v1392
    %v1394 = vmul.f32 %v1339, 1.442695
    %v1395 = vpow.pop %v1394
    %v1396 = vmul.f32 %v1340, 1.442695
    %v1397 = vpow.pop %v1396
    %v1398 = vmul.f32 %v1341, 1.442695
    %v1399 = vpow.pop %v1398
    %v1400 = vmul.f32 %v1342, 1.442695
    %v1401 = vpow.pop %v1400
    %v1402 = vmul.f32 %v1343, 1.442695
    %v1403 = vpow.pop %v1402
    %v1404 = vmul.f32 %v1344, 1.442695
    %v1405 = vpow.pop %v1404
    %v1406 = vmul.f32 %v1345, 1.442695
    %v1407 = vpow.pop %v1406
    %v1408 = vmul.f32 %v1346, 1.442695
    %v1409 = vpow.pop %v1408
    %v1410 = vmul.f32 %v1347, 1.442695
    %v1411 = vpow.pop %v1410
    %v1412 = vmul.f32 %v1348, 1.442695
    %v1413 = vpow.pop %v1412
    %v1414 = vmul.f32 %v1349, 1.442695
    %v1415 = vpow.pop %v1414
    %v1416 = vmul.f32 %v1350, 1.442695
    %v1417 = vpow.pop %v1416
    %v1418 = vmul.f32 %v1351, 1.442695
    %v1419 = vpow.pop %v1418
    %v1420 = vmul.f32 %v1352, 1.442695
    %v1421 = vpow.pop %v1420
    %v1422 = vmul.f32 %v1353, 1.442695
    %v1423 = vpow.pop %v1422
    %v1424 = vmul.f32 %v1354, 1.442695
    %v1425 = vpow.pop %v1424
    %v1426 = vmul.f32 %v1355, 1.442695
    %v1427 = vpow.pop %v1426
    %v1428 = vmul.f32 %v1356, 1.442695
    %v1429 = vpow.pop %v1428
    %v1430 = vmul.f32 %v1357, 1.442695
    %v1431 = vpow.pop %v1430
    %v1432 = vmul.f32 %v1358, 1.442695
    %v1433 = vpow.pop %v1432
    %v1434 = vmul.f32 %v1359, 1.442695
    %v1435 = vpow.pop %v1434
    %v1436 = vmul.f32 %v1360, 1.442695
    %v1437 = vpow.pop %v1436
    %v1438 = vmul.f32 %v1361, 1.442695
    %v1439 = vpow.pop %v1438
    %v1440 = vmul.f32 %v1362, 1.442695
    %v1441 = vpow.pop %v1440
    %v1442 = vmul.f32 %v1363, 1.442695
    %v1443 = vpow.pop %v1442
    %v1444 = vmul.f32 %v1364, 1.442695
    %v1445 = vpow.pop %v1444
    %v1446 = vmul.f32 %v1365, 1.442695
    %v1447 = vpow.pop %v1446
    %v1448 = vmul.f32 %v1366, 1.442695
    %v1449 = vpow.pop %v1448
    %v1450 = vmul.f32 %v1367, 1.442695
    %v1451 = vpow.pop %v1450
    %v1452 = vmul.f32 %v1368, 1.442695
    %v1453 = vpow.pop %v1452
    %v1454 = vmul.f32 %v1369, 1.442695
    %v1455 = vpow.pop %v1454
    %v1456 = vmul.f32 %v1370, 1.442695
    %v1457 = vpow.pop %v1456
    %v1458 = vmul.f32 %v1371, 1.442695
    %v1459 = vpow.pop %v1458
    %v1460 = vmul.f32 %v1372, 1.442695
    %v1461 = vpow.pop %v1460
    %v1462 = vmul.f32 %v1373, 1.442695
    %v1463 = vpow.pop %v1462
    %v1464 = vmul.f32 %v1374, 1.442695
    %v1465 = vpow.pop %v1464
    %v1466 = vmul.f32 %v1375, 1.442695
    %v1467 = vpow.pop %v1466
    %v1468 = vmul.f32 %v1376, 1.442695
    %v1469 = vpow.pop %v1468
    %v1470 = vmul.f32 %v1377, 1.442695
    %v1471 = vpow.pop %v1470
    %v1472 = vmul.f32 %v1378, 1.442695
    %v1473 = vpow.pop %v1472
    %v1474 = vmul.f32 %v1379, 1.442695
    %v1475 = vpow.pop %v1474
    %v1476 = vsel %vm1155, %v1381, 0.0
    %v1477 = vsel %vm1155, %v1383, 0.0
    %v1478 = vadd.f32 %v1476, %v1477
    %v1479 = vsel %vm1155, %v1385, 0.0
    %v1480 = vadd.f32 %v1478, %v1479
    %v1481 = vrot.slane %v1480, 4
    %v1482 = vadd.f32 %v1480, %v1481
    %v1483 = vrot.slane %v1482, 2
    %v1484 = vadd.f32 %v1482, %v1483
    %v1485 = vrot.slane %v1484, 1
    %v1486 = vadd.f32 %v1484, %v1485
    %v1487 = vsel %vm1155, %v1387, 0.0
    %v1488 = vsel %vm1155, %v1389, 0.0
    %v1489 = vadd.f32 %v1487, %v1488
    %v1490 = vsel %vm1155, %v1391, 0.0
    %v1491 = vadd.f32 %v1489, %v1490
    %v1492 = vrot.slane %v1491, 4
    %v1493 = vadd.f32 %v1491, %v1492
    %v1494 = vrot.slane %v1493, 2
    %v1495 = vadd.f32 %v1493, %v1494
    %v1496 = vrot.slane %v1495, 1
    %v1497 = vadd.f32 %v1495, %v1496
    %v1498 = vsel %vm1155, %v1393, 0.0
    %v1499 = vsel %vm1155, %v1395, 0.0
    %v1500 = vadd.f32 %v1498, %v1499
    %v1501 = vsel %vm1155, %v1397, 0.0
    %v1502 = vadd.f32 %v1500, %v1501
    %v1503 = vrot.slane %v1502, 4
    %v1504 = vadd.f32 %v1502, %v1503
    %v1505 = vrot.slane %v1504, 2
    %v1506 = vadd.f32 %v1504, %v1505
    %v1507 = vrot.slane %v1506, 1
    %v1508 = vadd.f32 %v1506, %v1507
    %v1509 = vsel %vm1155, %v1399, 0.0
    %v1510 = vsel %vm1155, %v1401, 0.0
    %v1511 = vadd.f32 %v1509, %v1510
    %v1512 = vsel %vm1155, %v1403, 0.0
    %v1513 = vadd.f32 %v1511, %v1512
    %v1514 = vrot.slane %v1513, 4
    %v1515 = vadd.f32 %v1513, %v1514
    %v1516 = vrot.slane %v1515, 2
    %v1517 = vadd.f32 %v1515, %v1516
    %v1518 = vrot.slane %v1517, 1
    %v1519 = vadd.f32 %v1517, %v1518
    %v1520 = vsel %vm1155, %v1405, 0.0
    %v1521 = vsel %vm1155, %v1407, 0.0
    %v1522 = vadd.f32 %v1520, %v1521
    %v1523 = vsel %vm1155, %v1409, 0.0
    %v1524 = vadd.f32 %v1522, %v1523
    %v1525 = vrot.slane %v1524, 4
    %v1526 = vadd.f32 %v1524, %v1525
    %v1527 = vrot.slane %v1526, 2
    %v1528 = vadd.f32 %v1526, %v1527
    %v1529 = vrot.slane %v1528, 1
    %v1530 = vadd.f32 %v1528, %v1529
    %v1531 = vsel %vm1155, %v1411, 0.0
    %v1532 = vsel %vm1155, %v1413, 0.0
    %v1533 = vadd.f32 %v1531, %v1532
    %v1534 = vsel %vm1155, %v1415, 0.0
    %v1535 = vadd.f32 %v1533, %v1534
    %v1536 = vrot.slane %v1535, 4
    %v1537 = vadd.f32 %v1535, %v1536
    %v1538 = vrot.slane %v1537, 2
    %v1539 = vadd.f32 %v1537, %v1538
    %v1540 = vrot.slane %v1539, 1
    %v1541 = vadd.f32 %v1539, %v1540
    %v1542 = vsel %vm1155, %v1417, 0.0
    %v1543 = vsel %vm1155, %v1419, 0.0
    %v1544 = vadd.f32 %v1542, %v1543
    %v1545 = vsel %vm1155, %v1421, 0.0
    %v1546 = vadd.f32 %v1544, %v1545
    %v1547 = vrot.slane %v1546, 4
    %v1548 = vadd.f32 %v1546, %v1547
    %v1549 = vrot.slane %v1548, 2
    %v1550 = vadd.f32 %v1548, %v1549
    %v1551 = vrot.slane %v1550, 1
    %v1552 = vadd.f32 %v1550, %v1551
    %v1553 = vsel %vm1155, %v1423, 0.0
    %v1554 = vsel %vm1155, %v1425, 0.0
    %v1555 = vadd.f32 %v1553, %v1554
    %v1556 = vsel %vm1155, %v1427, 0.0
    %v1557 = vadd.f32 %v1555, %v1556
    %v1558 = vrot.slane %v1557, 4
    %v1559 = vadd.f32 %v1557, %v1558
    %v1560 = vrot.slane %v1559, 2
    %v1561 = vadd.f32 %v1559, %v1560
    %v1562 = vrot.slane %v1561, 1
    %v1563 = vadd.f32 %v1561, %v1562
    %v1564 = vsel %vm1155, %v1429, 0.0
    %v1565 = vsel %vm1155, %v1431, 0.0
    %v1566 = vadd.f32 %v1564, %v1565
    %v1567 = vsel %vm1155, %v1433, 0.0
    %v1568 = vadd.f32 %v1566, %v1567
    %v1569 = vrot.slane %v1568, 4
    %v1570 = vadd.f32 %v1568, %v1569
    %v1571 = vrot.slane %v1570, 2
    %v1572 = vadd.f32 %v1570, %v1571
    %v1573 = vrot.slane %v1572, 1
    %v1574 = vadd.f32 %v1572, %v1573
    %v1575 = vsel %vm1155, %v1435, 0.0
    %v1576 = vsel %vm1155, %v1437, 0.0
    %v1577 = vadd.f32 %v1575, %v1576
    %v1578 = vsel %vm1155, %v1439, 0.0
    %v1579 = vadd.f32 %v1577, %v1578
    %v1580 = vrot.slane %v1579, 4
    %v1581 = vadd.f32 %v1579, %v1580
    %v1582 = vrot.slane %v1581, 2
    %v1583 = vadd.f32 %v1581, %v1582
    %v1584 = vrot.slane %v1583, 1
    %v1585 = vadd.f32 %v1583, %v1584
    %v1586 = vsel %vm1155, %v1441, 0.0
    %v1587 = vsel %vm1155, %v1443, 0.0
    %v1588 = vadd.f32 %v1586, %v1587
    %v1589 = vsel %vm1155, %v1445, 0.0
    %v1590 = vadd.f32 %v1588, %v1589
    %v1591 = vrot.slane %v1590, 4
    %v1592 = vadd.f32 %v1590, %v1591
    %v1593 = vrot.slane %v1592, 2
    %v1594 = vadd.f32 %v1592, %v1593
    %v1595 = vrot.slane %v1594, 1
    %v1596 = vadd.f32 %v1594, %v1595
    %v1597 = vsel %vm1155, %v1447, 0.0
    %v1598 = vsel %vm1155, %v1449, 0.0
    %v1599 = vadd.f32 %v1597, %v1598
    %v1600 = vsel %vm1155, %v1451, 0.0
    %v1601 = vadd.f32 %v1599, %v1600
    %v1602 = vrot.slane %v1601, 4
    %v1603 = vadd.f32 %v1601, %v1602
    %v1604 = vrot.slane %v1603, 2
    %v1605 = vadd.f32 %v1603, %v1604
    %v1606 = vrot.slane %v1605, 1
    %v1607 = vadd.f32 %v1605, %v1606
    %v1608 = vsel %vm1155, %v1453, 0.0
    %v1609 = vsel %vm1155, %v1455, 0.0
    %v1610 = vadd.f32 %v1608, %v1609
    %v1611 = vsel %vm1155, %v1457, 0.0
    %v1612 = vadd.f32 %v1610, %v1611
    %v1613 = vrot.slane %v1612, 4
    %v1614 = vadd.f32 %v1612, %v1613
    %v1615 = vrot.slane %v1614, 2
    %v1616 = vadd.f32 %v1614, %v1615
    %v1617 = vrot.slane %v1616, 1
    %v1618 = vadd.f32 %v1616, %v1617
    %v1619 = vsel %vm1155, %v1459, 0.0
    %v1620 = vsel %vm1155, %v1461, 0.0
    %v1621 = vadd.f32 %v1619, %v1620
    %v1622 = vsel %vm1155, %v1463, 0.0
    %v1623 = vadd.f32 %v1621, %v1622
    %v1624 = vrot.slane %v1623, 4
    %v1625 = vadd.f32 %v1623, %v1624
    %v1626 = vrot.slane %v1625, 2
    %v1627 = vadd.f32 %v1625, %v1626
    %v1628 = vrot.slane %v1627, 1
    %v1629 = vadd.f32 %v1627, %v1628
    %v1630 = vsel %vm1155, %v1465, 0.0
    %v1631 = vsel %vm1155, %v1467, 0.0
    %v1632 = vadd.f32 %v1630, %v1631
    %v1633 = vsel %vm1155, %v1469, 0.0
    %v1634 = vadd.f32 %v1632, %v1633
    %v1635 = vrot.slane %v1634, 4
    %v1636 = vadd.f32 %v1634, %v1635
    %v1637 = vrot.slane %v1636, 2
    %v1638 = vadd.f32 %v1636, %v1637
    %v1639 = vrot.slane %v1638, 1
    %v1640 = vadd.f32 %v1638, %v1639
    %v1641 = vsel %vm1155, %v1471, 0.0
    %v1642 = vsel %vm1155, %v1473, 0.0
    %v1643 = vadd.f32 %v1641, %v1642
    %v1644 = vsel %vm1155, %v1475, 0.0
    %v1645 = vadd.f32 %v1643, %v1644
    %v1646 = vrot.slane %v1645, 4
    %v1647 = vadd.f32 %v1645, %v1646
    %v1648 = vrot.slane %v1647, 2
    %v1649 = vadd.f32 %v1647, %v1648
    %v1650 = vrot.slane %v1649, 1
    %v1651 = vadd.f32 %v1649, %v1650
    %v1652 = vrcp.pop %v1486
    %v1653 = vrcp.pop %v1497
    %v1654 = vrcp.pop %v1508
    %v1655 = vrcp.pop %v1519
    %v1656 = vrcp.pop %v1530
    %v1657 = vrcp.pop %v1541
    %v1658 = vrcp.pop %v1552
    %v1659 = vrcp.pop %v1563
    %v1660 = vrcp.pop %v1574
    %v1661 = vrcp.pop %v1585
    %v1662 = vrcp.pop %v1596
    %v1663 = vrcp.pop %v1607
    %v1664 = vrcp.pop %v1618
    %v1665 = vrcp.pop %v1629
    %v1666 = vrcp.pop %v1640
    %v1667 = vrcp.pop %v1651
    %v1668 = vmul.f32 %v1381, %v1652
    %v1669 = vmul.f32 %v1383, %v1652
    %v1670 = vmul.f32 %v1385, %v1652
    %v1671 = vmul.f32 %v1387, %v1653
    %v1672 = vmul.f32 %v1389, %v1653
    %v1673 = vmul.f32 %v1391, %v1653
    %v1674 = vmul.f32 %v1393, %v1654
    %v1675 = vmul.f32 %v1395, %v1654
    %v1676 = vmul.f32 %v1397, %v1654
    %v1677 = vmul.f32 %v1399, %v1655
    %v1678 = vmul.f32 %v1401, %v1655
    %v1679 = vmul.f32 %v1403, %v1655
    %v1680 = vmul.f32 %v1405, %v1656
    %v1681 = vmul.f32 %v1407, %v1656
    %v1682 = vmul.f32 %v1409, %v1656
    %v1683 = vmul.f32 %v1411, %v1657
    %v1684 = vmul.f32 %v1413, %v1657
    %v1685 = vmul.f32 %v1415, %v1657
    %v1686 = vmul.f32 %v1417, %v1658
    %v1687 = vmul.f32 %v1419, %v1658
    %v1688 = vmul.f32 %v1421, %v1658
    %v1689 = vmul.f32 %v1423, %v1659
    %v1690 = vmul.f32 %v1425, %v1659
    %v1691 = vmul.f32 %v1427, %v1659
    %v1692 = vmul.f32 %v1429, %v1660
    %v1693 = vmul.f32 %v1431, %v1660
    %v1694 = vmul.f32 %v1433, %v1660
    %v1695 = vmul.f32 %v1435, %v1661
    %v1696 = vmul.f32 %v1437, %v1661
    %v1697 = vmul.f32 %v1439, %v1661
    %v1698 = vmul.f32 %v1441, %v1662
    %v1699 = vmul.f32 %v1443, %v1662
    %v1700 = vmul.f32 %v1445, %v1662
    %v1701 = vmul.f32 %v1447, %v1663
    %v1702 = vmul.f32 %v1449, %v1663
    %v1703 = vmul.f32 %v1451, %v1663
    %v1704 = vmul.f32 %v1453, %v1664
    %v1705 = vmul.f32 %v1455, %v1664
    %v1706 = vmul.f32 %v1457, %v1664
    %v1707 = vmul.f32 %v1459, %v1665
    %v1708 = vmul.f32 %v1461, %v1665
    %v1709 = vmul.f32 %v1463, %v1665
    %v1710 = vmul.f32 %v1465, %v1666
    %v1711 = vmul.f32 %v1467, %v1666
    %v1712 = vmul.f32 %v1469, %v1666
    %v1713 = vmul.f32 %v1471, %v1667
    %v1714 = vmul.f32 %v1473, %v1667
    %v1715 = vmul.f32 %v1475, %v1667
    %1716 = vxpose.xlu0.b32.start [1/16] %v1668, 128
    %1717 = vxpose.xlu0.b32.cont [2/16] %v1669, 128
    %1718 = vxpose.xlu0.b32.cont [3/16] %v1670, 128
    %1719 = vxpose.xlu0.b32.cont [4/16] 0.0, 128
    %1720 = vxpose.xlu0.b32.cont [5/16] 0.0, 128
    %1721 = vxpose.xlu0.b32.cont [6/16] 0.0, 128
    %1722 = vxpose.xlu0.b32.cont [7/16] 0.0, 128
    %1723 = vxpose.xlu0.b32.cont [8/16] 0.0, 128
    %1724 = vxpose.xlu0.b32.cont [9/16] 0.0, 128
    %1725 = vxpose.xlu0.b32.cont [10/16] 0.0, 128
    %1726 = vxpose.xlu0.b32.cont [11/16] 0.0, 128
    %1727 = vxpose.xlu0.b32.cont [12/16] 0.0, 128
    %1728 = vxpose.xlu0.b32.cont [13/16] 0.0, 128
    %1729 = vxpose.xlu0.b32.cont [14/16] 0.0, 128
    %1730 = vxpose.xlu0.b32.cont [15/16] 0.0, 128
    %1731 = vxpose.xlu0.b32.end [16/16] 0.0, 128
    %v1732 = vpop.trf.xlu0
    %v1733 = vpop.trf.xlu0
    %v1734 = vpop.trf.xlu0
    %v1735 = vpop.trf.xlu0
    %v1736 = vpop.trf.xlu0
    %v1737 = vpop.trf.xlu0
    %v1738 = vpop.trf.xlu0
    %v1739 = vpop.trf.xlu0
    %v1740 = vpop.trf.xlu0
    %v1741 = vpop.trf.xlu0
    %v1742 = vpop.trf.xlu0
    %v1743 = vpop.trf.xlu0
    %v1744 = vpop.trf.xlu0
    %v1745 = vpop.trf.xlu0
    %v1746 = vpop.trf.xlu0
    %v1747 = vpop.trf.xlu0
    %vm1748 = vcmask 195584
    %v1750 = vsel %vm1748, %v1732, 0
    %v1753 = vsel %vm1748, %v1733, 0
    %1755 = vmatpush.msra.mxu0 0.0
    %1756 = vmatpush.msra.mxu0 0.0
    %1757 = vmatpush.msra.mxu0 0.0
    %1758 = vmatpush.msra.mxu0 0.0
    %1759 = vmatpush.msra.mxu0 0.0
    %1760 = vmatpush.msra.mxu0 0.0
    %1761 = vmatpush.msra.mxu0 0.0
    %1762 = vmatpush.msra.mxu0 0.0
    %1763 = vmatpush.msra.mxu0 0.0
    %1764 = vmatpush.msra.mxu0 0.0
    %1765 = vmatpush.msra.mxu0 0.0
    %1766 = vmatpush.msra.mxu0 0.0
    %1767 = vmatpush.msra.mxu0 0.0
    %1768 = vmatpush.msra.mxu0 %v86
    %1769 = vmatpush.msra.mxu0 %v55
    %1770 = vmatpush.msra.mxu0 %v54
    %1771 = vmatmul.f32.gmra.mxu0 %v1750
    %v1772 = vpop.f32.mrf.mxu0
    %v1773 = vadd.f32 0.0, %v1772
    %1774 = vmatmul.f32.gmra.mxu0 %v1753
    %v1775 = vpop.f32.mrf.mxu0
    %v1776 = vadd.f32 0.0, %v1775
    %1777 = vdwg.mxu0
    %1778 = vxpose.xlu0.b32.start [1/16] %v1671, 128
    %1779 = vxpose.xlu0.b32.cont [2/16] %v1672, 128
    %1780 = vxpose.xlu0.b32.cont [3/16] %v1673, 128
    %1781 = vxpose.xlu0.b32.cont [4/16] 0.0, 128
    %1782 = vxpose.xlu0.b32.cont [5/16] 0.0, 128
    %1783 = vxpose.xlu0.b32.cont [6/16] 0.0, 128
    %1784 = vxpose.xlu0.b32.cont [7/16] 0.0, 128
    %1785 = vxpose.xlu0.b32.cont [8/16] 0.0, 128
    %1786 = vxpose.xlu0.b32.cont [9/16] 0.0, 128
    %1787 = vxpose.xlu0.b32.cont [10/16] 0.0, 128
    %1788 = vxpose.xlu0.b32.cont [11/16] 0.0, 128
    %1789 = vxpose.xlu0.b32.cont [12/16] 0.0, 128
    %1790 = vxpose.xlu0.b32.cont [13/16] 0.0, 128
    %1791 = vxpose.xlu0.b32.cont [14/16] 0.0, 128
    %1792 = vxpose.xlu0.b32.cont [15/16] 0.0, 128
    %1793 = vxpose.xlu0.b32.end [16/16] 0.0, 128
    %v1794 = vpop.trf.xlu0
    %v1795 = vpop.trf.xlu0
    %v1796 = vpop.trf.xlu0
    %v1797 = vpop.trf.xlu0
    %v1798 = vpop.trf.xlu0
    %v1799 = vpop.trf.xlu0
    %v1800 = vpop.trf.xlu0
    %v1801 = vpop.trf.xlu0
    %v1802 = vpop.trf.xlu0
    %v1803 = vpop.trf.xlu0
    %v1804 = vpop.trf.xlu0
    %v1805 = vpop.trf.xlu0
    %v1806 = vpop.trf.xlu0
    %v1807 = vpop.trf.xlu0
    %v1808 = vpop.trf.xlu0
    %v1809 = vpop.trf.xlu0
    %v1811 = vsel %vm1748, %v1794, 0
    %v1814 = vsel %vm1748, %v1795, 0
    %1816 = vmatpush.msra.mxu0 0.0
    %1817 = vmatpush.msra.mxu0 0.0
    %1818 = vmatpush.msra.mxu0 0.0
    %1819 = vmatpush.msra.mxu0 0.0
    %1820 = vmatpush.msra.mxu0 0.0
    %1821 = vmatpush.msra.mxu0 0.0
    %1822 = vmatpush.msra.mxu0 0.0
    %1823 = vmatpush.msra.mxu0 0.0
    %1824 = vmatpush.msra.mxu0 0.0
    %1825 = vmatpush.msra.mxu0 0.0
    %1826 = vmatpush.msra.mxu0 0.0
    %1827 = vmatpush.msra.mxu0 0.0
    %1828 = vmatpush.msra.mxu0 0.0
    %1829 = vmatpush.msra.mxu0 %v87
    %1830 = vmatpush.msra.mxu0 %v57
    %1831 = vmatpush.msra.mxu0 %v56
    %1832 = vmatmul.f32.gmra.mxu0 %v1811
    %v1833 = vpop.f32.mrf.mxu0
    %v1834 = vadd.f32 0.0, %v1833
    %1835 = vmatmul.f32.gmra.mxu0 %v1814
    %v1836 = vpop.f32.mrf.mxu0
    %v1837 = vadd.f32 0.0, %v1836
    %1838 = vdwg.mxu0
    %1839 = vxpose.xlu0.b32.start [1/16] %v1674, 128
    %1840 = vxpose.xlu0.b32.cont [2/16] %v1675, 128
    %1841 = vxpose.xlu0.b32.cont [3/16] %v1676, 128
    %1842 = vxpose.xlu0.b32.cont [4/16] 0.0, 128
    %1843 = vxpose.xlu0.b32.cont [5/16] 0.0, 128
    %1844 = vxpose.xlu0.b32.cont [6/16] 0.0, 128
    %1845 = vxpose.xlu0.b32.cont [7/16] 0.0, 128
    %1846 = vxpose.xlu0.b32.cont [8/16] 0.0, 128
    %1847 = vxpose.xlu0.b32.cont [9/16] 0.0, 128
    %1848 = vxpose.xlu0.b32.cont [10/16] 0.0, 128
    %1849 = vxpose.xlu0.b32.cont [11/16] 0.0, 128
    %1850 = vxpose.xlu0.b32.cont [12/16] 0.0, 128
    %1851 = vxpose.xlu0.b32.cont [13/16] 0.0, 128
    %1852 = vxpose.xlu0.b32.cont [14/16] 0.0, 128
    %1853 = vxpose.xlu0.b32.cont [15/16] 0.0, 128
    %1854 = vxpose.xlu0.b32.end [16/16] 0.0, 128
    %v1855 = vpop.trf.xlu0
    %v1856 = vpop.trf.xlu0
    %v1857 = vpop.trf.xlu0
    %v1858 = vpop.trf.xlu0
    %v1859 = vpop.trf.xlu0
    %v1860 = vpop.trf.xlu0
    %v1861 = vpop.trf.xlu0
    %v1862 = vpop.trf.xlu0
    %v1863 = vpop.trf.xlu0
    %v1864 = vpop.trf.xlu0
    %v1865 = vpop.trf.xlu0
    %v1866 = vpop.trf.xlu0
    %v1867 = vpop.trf.xlu0
    %v1868 = vpop.trf.xlu0
    %v1869 = vpop.trf.xlu0
    %v1870 = vpop.trf.xlu0
    %v1872 = vsel %vm1748, %v1855, 0
    %v1875 = vsel %vm1748, %v1856, 0
    %1877 = vmatpush.msra.mxu0 0.0
    %1878 = vmatpush.msra.mxu0 0.0
    %1879 = vmatpush.msra.mxu0 0.0
    %1880 = vmatpush.msra.mxu0 0.0
    %1881 = vmatpush.msra.mxu0 0.0
    %1882 = vmatpush.msra.mxu0 0.0
    %1883 = vmatpush.msra.mxu0 0.0
    %1884 = vmatpush.msra.mxu0 0.0
    %1885 = vmatpush.msra.mxu0 0.0
    %1886 = vmatpush.msra.mxu0 0.0
    %1887 = vmatpush.msra.mxu0 0.0
    %1888 = vmatpush.msra.mxu0 0.0
    %1889 = vmatpush.msra.mxu0 0.0
    %1890 = vmatpush.msra.mxu0 %v88
    %1891 = vmatpush.msra.mxu0 %v59
    %1892 = vmatpush.msra.mxu0 %v58
    %1893 = vmatmul.f32.gmra.mxu0 %v1872
    %v1894 = vpop.f32.mrf.mxu0
    %v1895 = vadd.f32 0.0, %v1894
    %1896 = vmatmul.f32.gmra.mxu0 %v1875
    %v1897 = vpop.f32.mrf.mxu0
    %v1898 = vadd.f32 0.0, %v1897
    %1899 = vdwg.mxu0
    %1900 = vxpose.xlu0.b32.start [1/16] %v1677, 128
    %1901 = vxpose.xlu0.b32.cont [2/16] %v1678, 128
    %1902 = vxpose.xlu0.b32.cont [3/16] %v1679, 128
    %1903 = vxpose.xlu0.b32.cont [4/16] 0.0, 128
    %1904 = vxpose.xlu0.b32.cont [5/16] 0.0, 128
    %1905 = vxpose.xlu0.b32.cont [6/16] 0.0, 128
    %1906 = vxpose.xlu0.b32.cont [7/16] 0.0, 128
    %1907 = vxpose.xlu0.b32.cont [8/16] 0.0, 128
    %1908 = vxpose.xlu0.b32.cont [9/16] 0.0, 128
    %1909 = vxpose.xlu0.b32.cont [10/16] 0.0, 128
    %1910 = vxpose.xlu0.b32.cont [11/16] 0.0, 128
    %1911 = vxpose.xlu0.b32.cont [12/16] 0.0, 128
    %1912 = vxpose.xlu0.b32.cont [13/16] 0.0, 128
    %1913 = vxpose.xlu0.b32.cont [14/16] 0.0, 128
    %1914 = vxpose.xlu0.b32.cont [15/16] 0.0, 128
    %1915 = vxpose.xlu0.b32.end [16/16] 0.0, 128
    %v1916 = vpop.trf.xlu0
    %v1917 = vpop.trf.xlu0
    %v1918 = vpop.trf.xlu0
    %v1919 = vpop.trf.xlu0
    %v1920 = vpop.trf.xlu0
    %v1921 = vpop.trf.xlu0
    %v1922 = vpop.trf.xlu0
    %v1923 = vpop.trf.xlu0
    %v1924 = vpop.trf.xlu0
    %v1925 = vpop.trf.xlu0
    %v1926 = vpop.trf.xlu0
    %v1927 = vpop.trf.xlu0
    %v1928 = vpop.trf.xlu0
    %v1929 = vpop.trf.xlu0
    %v1930 = vpop.trf.xlu0
    %v1931 = vpop.trf.xlu0
    %v1933 = vsel %vm1748, %v1916, 0
    %v1936 = vsel %vm1748, %v1917, 0
    %1938 = vmatpush.msra.mxu0 0.0
    %1939 = vmatpush.msra.mxu0 0.0
    %1940 = vmatpush.msra.mxu0 0.0
    %1941 = vmatpush.msra.mxu0 0.0
    %1942 = vmatpush.msra.mxu0 0.0
    %1943 = vmatpush.msra.mxu0 0.0
    %1944 = vmatpush.msra.mxu0 0.0
    %1945 = vmatpush.msra.mxu0 0.0
    %1946 = vmatpush.msra.mxu0 0.0
    %1947 = vmatpush.msra.mxu0 0.0
    %1948 = vmatpush.msra.mxu0 0.0
    %1949 = vmatpush.msra.mxu0 0.0
    %1950 = vmatpush.msra.mxu0 0.0
    %1951 = vmatpush.msra.mxu0 %v89
    %1952 = vmatpush.msra.mxu0 %v61
    %1953 = vmatpush.msra.mxu0 %v60
    %1954 = vmatmul.f32.gmra.mxu0 %v1933
    %v1955 = vpop.f32.mrf.mxu0
    %v1956 = vadd.f32 0.0, %v1955
    %1957 = vmatmul.f32.gmra.mxu0 %v1936
    %v1958 = vpop.f32.mrf.mxu0
    %v1959 = vadd.f32 0.0, %v1958
    %1960 = vdwg.mxu0
    %1961 = vxpose.xlu0.b32.start [1/16] %v1680, 128
    %1962 = vxpose.xlu0.b32.cont [2/16] %v1681, 128
    %1963 = vxpose.xlu0.b32.cont [3/16] %v1682, 128
    %1964 = vxpose.xlu0.b32.cont [4/16] 0.0, 128
    %1965 = vxpose.xlu0.b32.cont [5/16] 0.0, 128
    %1966 = vxpose.xlu0.b32.cont [6/16] 0.0, 128
    %1967 = vxpose.xlu0.b32.cont [7/16] 0.0, 128
    %1968 = vxpose.xlu0.b32.cont [8/16] 0.0, 128
    %1969 = vxpose.xlu0.b32.cont [9/16] 0.0, 128
    %1970 = vxpose.xlu0.b32.cont [10/16] 0.0, 128
    %1971 = vxpose.xlu0.b32.cont [11/16] 0.0, 128
    %1972 = vxpose.xlu0.b32.cont [12/16] 0.0, 128
    %1973 = vxpose.xlu0.b32.cont [13/16] 0.0, 128
    %1974 = vxpose.xlu0.b32.cont [14/16] 0.0, 128
    %1975 = vxpose.xlu0.b32.cont [15/16] 0.0, 128
    %1976 = vxpose.xlu0.b32.end [16/16] 0.0, 128
    %v1977 = vpop.trf.xlu0
    %v1978 = vpop.trf.xlu0
    %v1979 = vpop.trf.xlu0
    %v1980 = vpop.trf.xlu0
    %v1981 = vpop.trf.xlu0
    %v1982 = vpop.trf.xlu0
    %v1983 = vpop.trf.xlu0
    %v1984 = vpop.trf.xlu0
    %v1985 = vpop.trf.xlu0
    %v1986 = vpop.trf.xlu0
    %v1987 = vpop.trf.xlu0
    %v1988 = vpop.trf.xlu0
    %v1989 = vpop.trf.xlu0
    %v1990 = vpop.trf.xlu0
    %v1991 = vpop.trf.xlu0
    %v1992 = vpop.trf.xlu0
    %v1994 = vsel %vm1748, %v1977, 0
    %v1997 = vsel %vm1748, %v1978, 0
    %1999 = vmatpush.msra.mxu0 0.0
    %2000 = vmatpush.msra.mxu0 0.0
    %2001 = vmatpush.msra.mxu0 0.0
    %2002 = vmatpush.msra.mxu0 0.0
    %2003 = vmatpush.msra.mxu0 0.0
    %2004 = vmatpush.msra.mxu0 0.0
    %2005 = vmatpush.msra.mxu0 0.0
    %2006 = vmatpush.msra.mxu0 0.0
    %2007 = vmatpush.msra.mxu0 0.0
    %2008 = vmatpush.msra.mxu0 0.0
    %2009 = vmatpush.msra.mxu0 0.0
    %2010 = vmatpush.msra.mxu0 0.0
    %2011 = vmatpush.msra.mxu0 0.0
    %2012 = vmatpush.msra.mxu0 %v90
    %2013 = vmatpush.msra.mxu0 %v63
    %2014 = vmatpush.msra.mxu0 %v62
    %2015 = vmatmul.f32.gmra.mxu0 %v1994
    %v2016 = vpop.f32.mrf.mxu0
    %v2017 = vadd.f32 0.0, %v2016
    %2018 = vmatmul.f32.gmra.mxu0 %v1997
    %v2019 = vpop.f32.mrf.mxu0
    %v2020 = vadd.f32 0.0, %v2019
    %2021 = vdwg.mxu0
    %2022 = vxpose.xlu0.b32.start [1/16] %v1683, 128
    %2023 = vxpose.xlu0.b32.cont [2/16] %v1684, 128
    %2024 = vxpose.xlu0.b32.cont [3/16] %v1685, 128
    %2025 = vxpose.xlu0.b32.cont [4/16] 0.0, 128
    %2026 = vxpose.xlu0.b32.cont [5/16] 0.0, 128
    %2027 = vxpose.xlu0.b32.cont [6/16] 0.0, 128
    %2028 = vxpose.xlu0.b32.cont [7/16] 0.0, 128
    %2029 = vxpose.xlu0.b32.cont [8/16] 0.0, 128
    %2030 = vxpose.xlu0.b32.cont [9/16] 0.0, 128
    %2031 = vxpose.xlu0.b32.cont [10/16] 0.0, 128
    %2032 = vxpose.xlu0.b32.cont [11/16] 0.0, 128
    %2033 = vxpose.xlu0.b32.cont [12/16] 0.0, 128
    %2034 = vxpose.xlu0.b32.cont [13/16] 0.0, 128
    %2035 = vxpose.xlu0.b32.cont [14/16] 0.0, 128
    %2036 = vxpose.xlu0.b32.cont [15/16] 0.0, 128
    %2037 = vxpose.xlu0.b32.end [16/16] 0.0, 128
    %v2038 = vpop.trf.xlu0
    %v2039 = vpop.trf.xlu0
    %v2040 = vpop.trf.xlu0
    %v2041 = vpop.trf.xlu0
    %v2042 = vpop.trf.xlu0
    %v2043 = vpop.trf.xlu0
    %v2044 = vpop.trf.xlu0
    %v2045 = vpop.trf.xlu0
    %v2046 = vpop.trf.xlu0
    %v2047 = vpop.trf.xlu0
    %v2048 = vpop.trf.xlu0
    %v2049 = vpop.trf.xlu0
    %v2050 = vpop.trf.xlu0
    %v2051 = vpop.trf.xlu0
    %v2052 = vpop.trf.xlu0
    %v2053 = vpop.trf.xlu0
    %v2055 = vsel %vm1748, %v2038, 0
    %v2058 = vsel %vm1748, %v2039, 0
    %2060 = vmatpush.msra.mxu0 0.0
    %2061 = vmatpush.msra.mxu0 0.0
    %2062 = vmatpush.msra.mxu0 0.0
    %2063 = vmatpush.msra.mxu0 0.0
    %2064 = vmatpush.msra.mxu0 0.0
    %2065 = vmatpush.msra.mxu0 0.0
    %2066 = vmatpush.msra.mxu0 0.0
    %2067 = vmatpush.msra.mxu0 0.0
    %2068 = vmatpush.msra.mxu0 0.0
    %2069 = vmatpush.msra.mxu0 0.0
    %2070 = vmatpush.msra.mxu0 0.0
    %2071 = vmatpush.msra.mxu0 0.0
    %2072 = vmatpush.msra.mxu0 0.0
    %2073 = vmatpush.msra.mxu0 %v91
    %2074 = vmatpush.msra.mxu0 %v65
    %2075 = vmatpush.msra.mxu0 %v64
    %2076 = vmatmul.f32.gmra.mxu0 %v2055
    %v2077 = vpop.f32.mrf.mxu0
    %v2078 = vadd.f32 0.0, %v2077
    %2079 = vmatmul.f32.gmra.mxu0 %v2058
    %v2080 = vpop.f32.mrf.mxu0
    %v2081 = vadd.f32 0.0, %v2080
    %2082 = vdwg.mxu0
    %2083 = vxpose.xlu0.b32.start [1/16] %v1686, 128
    %2084 = vxpose.xlu0.b32.cont [2/16] %v1687, 128
    %2085 = vxpose.xlu0.b32.cont [3/16] %v1688, 128
    %2086 = vxpose.xlu0.b32.cont [4/16] 0.0, 128
    %2087 = vxpose.xlu0.b32.cont [5/16] 0.0, 128
    %2088 = vxpose.xlu0.b32.cont [6/16] 0.0, 128
    %2089 = vxpose.xlu0.b32.cont [7/16] 0.0, 128
    %2090 = vxpose.xlu0.b32.cont [8/16] 0.0, 128
    %2091 = vxpose.xlu0.b32.cont [9/16] 0.0, 128
    %2092 = vxpose.xlu0.b32.cont [10/16] 0.0, 128
    %2093 = vxpose.xlu0.b32.cont [11/16] 0.0, 128
    %2094 = vxpose.xlu0.b32.cont [12/16] 0.0, 128
    %2095 = vxpose.xlu0.b32.cont [13/16] 0.0, 128
    %2096 = vxpose.xlu0.b32.cont [14/16] 0.0, 128
    %2097 = vxpose.xlu0.b32.cont [15/16] 0.0, 128
    %2098 = vxpose.xlu0.b32.end [16/16] 0.0, 128
    %v2099 = vpop.trf.xlu0
    %v2100 = vpop.trf.xlu0
    %v2101 = vpop.trf.xlu0
    %v2102 = vpop.trf.xlu0
    %v2103 = vpop.trf.xlu0
    %v2104 = vpop.trf.xlu0
    %v2105 = vpop.trf.xlu0
    %v2106 = vpop.trf.xlu0
    %v2107 = vpop.trf.xlu0
    %v2108 = vpop.trf.xlu0
    %v2109 = vpop.trf.xlu0
    %v2110 = vpop.trf.xlu0
    %v2111 = vpop.trf.xlu0
    %v2112 = vpop.trf.xlu0
    %v2113 = vpop.trf.xlu0
    %v2114 = vpop.trf.xlu0
    %v2116 = vsel %vm1748, %v2099, 0
    %v2119 = vsel %vm1748, %v2100, 0
    %2121 = vmatpush.msra.mxu0 0.0
    %2122 = vmatpush.msra.mxu0 0.0
    %2123 = vmatpush.msra.mxu0 0.0
    %2124 = vmatpush.msra.mxu0 0.0
    %2125 = vmatpush.msra.mxu0 0.0
    %2126 = vmatpush.msra.mxu0 0.0
    %2127 = vmatpush.msra.mxu0 0.0
    %2128 = vmatpush.msra.mxu0 0.0
    %2129 = vmatpush.msra.mxu0 0.0
    %2130 = vmatpush.msra.mxu0 0.0
    %2131 = vmatpush.msra.mxu0 0.0
    %2132 = vmatpush.msra.mxu0 0.0
    %2133 = vmatpush.msra.mxu0 0.0
    %2134 = vmatpush.msra.mxu0 %v92
    %2135 = vmatpush.msra.mxu0 %v67
    %2136 = vmatpush.msra.mxu0 %v66
    %2137 = vmatmul.f32.gmra.mxu0 %v2116
    %v2138 = vpop.f32.mrf.mxu0
    %v2139 = vadd.f32 0.0, %v2138
    %2140 = vmatmul.f32.gmra.mxu0 %v2119
    %v2141 = vpop.f32.mrf.mxu0
    %v2142 = vadd.f32 0.0, %v2141
    %2143 = vdwg.mxu0
    %2144 = vxpose.xlu0.b32.start [1/16] %v1689, 128
    %2145 = vxpose.xlu0.b32.cont [2/16] %v1690, 128
    %2146 = vxpose.xlu0.b32.cont [3/16] %v1691, 128
    %2147 = vxpose.xlu0.b32.cont [4/16] 0.0, 128
    %2148 = vxpose.xlu0.b32.cont [5/16] 0.0, 128
    %2149 = vxpose.xlu0.b32.cont [6/16] 0.0, 128
    %2150 = vxpose.xlu0.b32.cont [7/16] 0.0, 128
    %2151 = vxpose.xlu0.b32.cont [8/16] 0.0, 128
    %2152 = vxpose.xlu0.b32.cont [9/16] 0.0, 128
    %2153 = vxpose.xlu0.b32.cont [10/16] 0.0, 128
    %2154 = vxpose.xlu0.b32.cont [11/16] 0.0, 128
    %2155 = vxpose.xlu0.b32.cont [12/16] 0.0, 128
    %2156 = vxpose.xlu0.b32.cont [13/16] 0.0, 128
    %2157 = vxpose.xlu0.b32.cont [14/16] 0.0, 128
    %2158 = vxpose.xlu0.b32.cont [15/16] 0.0, 128
    %2159 = vxpose.xlu0.b32.end [16/16] 0.0, 128
    %v2160 = vpop.trf.xlu0
    %v2161 = vpop.trf.xlu0
    %v2162 = vpop.trf.xlu0
    %v2163 = vpop.trf.xlu0
    %v2164 = vpop.trf.xlu0
    %v2165 = vpop.trf.xlu0
    %v2166 = vpop.trf.xlu0
    %v2167 = vpop.trf.xlu0
    %v2168 = vpop.trf.xlu0
    %v2169 = vpop.trf.xlu0
    %v2170 = vpop.trf.xlu0
    %v2171 = vpop.trf.xlu0
    %v2172 = vpop.trf.xlu0
    %v2173 = vpop.trf.xlu0
    %v2174 = vpop.trf.xlu0
    %v2175 = vpop.trf.xlu0
    %v2177 = vsel %vm1748, %v2160, 0
    %v2180 = vsel %vm1748, %v2161, 0
    %2182 = vmatpush.msra.mxu0 0.0
    %2183 = vmatpush.msra.mxu0 0.0
    %2184 = vmatpush.msra.mxu0 0.0
    %2185 = vmatpush.msra.mxu0 0.0
    %2186 = vmatpush.msra.mxu0 0.0
    %2187 = vmatpush.msra.mxu0 0.0
    %2188 = vmatpush.msra.mxu0 0.0
    %2189 = vmatpush.msra.mxu0 0.0
    %2190 = vmatpush.msra.mxu0 0.0
    %2191 = vmatpush.msra.mxu0 0.0
    %2192 = vmatpush.msra.mxu0 0.0
    %2193 = vmatpush.msra.mxu0 0.0
    %2194 = vmatpush.msra.mxu0 0.0
    %2195 = vmatpush.msra.mxu0 %v93
    %2196 = vmatpush.msra.mxu0 %v69
    %2197 = vmatpush.msra.mxu0 %v68
    %2198 = vmatmul.f32.gmra.mxu0 %v2177
    %v2199 = vpop.f32.mrf.mxu0
    %v2200 = vadd.f32 0.0, %v2199
    %2201 = vmatmul.f32.gmra.mxu0 %v2180
    %v2202 = vpop.f32.mrf.mxu0
    %v2203 = vadd.f32 0.0, %v2202
    %2204 = vdwg.mxu0
    %2205 = vxpose.xlu0.b32.start [1/16] %v1692, 128
    %2206 = vxpose.xlu0.b32.cont [2/16] %v1693, 128
    %2207 = vxpose.xlu0.b32.cont [3/16] %v1694, 128
    %2208 = vxpose.xlu0.b32.cont [4/16] 0.0, 128
    %2209 = vxpose.xlu0.b32.cont [5/16] 0.0, 128
    %2210 = vxpose.xlu0.b32.cont [6/16] 0.0, 128
    %2211 = vxpose.xlu0.b32.cont [7/16] 0.0, 128
    %2212 = vxpose.xlu0.b32.cont [8/16] 0.0, 128
    %2213 = vxpose.xlu0.b32.cont [9/16] 0.0, 128
    %2214 = vxpose.xlu0.b32.cont [10/16] 0.0, 128
    %2215 = vxpose.xlu0.b32.cont [11/16] 0.0, 128
    %2216 = vxpose.xlu0.b32.cont [12/16] 0.0, 128
    %2217 = vxpose.xlu0.b32.cont [13/16] 0.0, 128
    %2218 = vxpose.xlu0.b32.cont [14/16] 0.0, 128
    %2219 = vxpose.xlu0.b32.cont [15/16] 0.0, 128
    %2220 = vxpose.xlu0.b32.end [16/16] 0.0, 128
    %v2221 = vpop.trf.xlu0
    %v2222 = vpop.trf.xlu0
    %v2223 = vpop.trf.xlu0
    %v2224 = vpop.trf.xlu0
    %v2225 = vpop.trf.xlu0
    %v2226 = vpop.trf.xlu0
    %v2227 = vpop.trf.xlu0
    %v2228 = vpop.trf.xlu0
    %v2229 = vpop.trf.xlu0
    %v2230 = vpop.trf.xlu0
    %v2231 = vpop.trf.xlu0
    %v2232 = vpop.trf.xlu0
    %v2233 = vpop.trf.xlu0
    %v2234 = vpop.trf.xlu0
    %v2235 = vpop.trf.xlu0
    %v2236 = vpop.trf.xlu0
    %v2238 = vsel %vm1748, %v2221, 0
    %v2241 = vsel %vm1748, %v2222, 0
    %2243 = vmatpush.msra.mxu0 0.0
    %2244 = vmatpush.msra.mxu0 0.0
    %2245 = vmatpush.msra.mxu0 0.0
    %2246 = vmatpush.msra.mxu0 0.0
    %2247 = vmatpush.msra.mxu0 0.0
    %2248 = vmatpush.msra.mxu0 0.0
    %2249 = vmatpush.msra.mxu0 0.0
    %2250 = vmatpush.msra.mxu0 0.0
    %2251 = vmatpush.msra.mxu0 0.0
    %2252 = vmatpush.msra.mxu0 0.0
    %2253 = vmatpush.msra.mxu0 0.0
    %2254 = vmatpush.msra.mxu0 0.0
    %2255 = vmatpush.msra.mxu0 0.0
    %2256 = vmatpush.msra.mxu0 %v94
    %2257 = vmatpush.msra.mxu0 %v71
    %2258 = vmatpush.msra.mxu0 %v70
    %2259 = vmatmul.f32.gmra.mxu0 %v2238
    %v2260 = vpop.f32.mrf.mxu0
    %v2261 = vadd.f32 0.0, %v2260
    %2262 = vmatmul.f32.gmra.mxu0 %v2241
    %v2263 = vpop.f32.mrf.mxu0
    %v2264 = vadd.f32 0.0, %v2263
    %2265 = vdwg.mxu0
    %2266 = vxpose.xlu0.b32.start [1/16] %v1695, 128
    %2267 = vxpose.xlu0.b32.cont [2/16] %v1696, 128
    %2268 = vxpose.xlu0.b32.cont [3/16] %v1697, 128
    %2269 = vxpose.xlu0.b32.cont [4/16] 0.0, 128
    %2270 = vxpose.xlu0.b32.cont [5/16] 0.0, 128
    %2271 = vxpose.xlu0.b32.cont [6/16] 0.0, 128
    %2272 = vxpose.xlu0.b32.cont [7/16] 0.0, 128
    %2273 = vxpose.xlu0.b32.cont [8/16] 0.0, 128
    %2274 = vxpose.xlu0.b32.cont [9/16] 0.0, 128
    %2275 = vxpose.xlu0.b32.cont [10/16] 0.0, 128
    %2276 = vxpose.xlu0.b32.cont [11/16] 0.0, 128
    %2277 = vxpose.xlu0.b32.cont [12/16] 0.0, 128
    %2278 = vxpose.xlu0.b32.cont [13/16] 0.0, 128
    %2279 = vxpose.xlu0.b32.cont [14/16] 0.0, 128
    %2280 = vxpose.xlu0.b32.cont [15/16] 0.0, 128
    %2281 = vxpose.xlu0.b32.end [16/16] 0.0, 128
    %v2282 = vpop.trf.xlu0
    %v2283 = vpop.trf.xlu0
    %v2284 = vpop.trf.xlu0
    %v2285 = vpop.trf.xlu0
    %v2286 = vpop.trf.xlu0
    %v2287 = vpop.trf.xlu0
    %v2288 = vpop.trf.xlu0
    %v2289 = vpop.trf.xlu0
    %v2290 = vpop.trf.xlu0
    %v2291 = vpop.trf.xlu0
    %v2292 = vpop.trf.xlu0
    %v2293 = vpop.trf.xlu0
    %v2294 = vpop.trf.xlu0
    %v2295 = vpop.trf.xlu0
    %v2296 = vpop.trf.xlu0
    %v2297 = vpop.trf.xlu0
    %v2299 = vsel %vm1748, %v2282, 0
    %v2302 = vsel %vm1748, %v2283, 0
    %2304 = vmatpush.msra.mxu0 0.0
    %2305 = vmatpush.msra.mxu0 0.0
    %2306 = vmatpush.msra.mxu0 0.0
    %2307 = vmatpush.msra.mxu0 0.0
    %2308 = vmatpush.msra.mxu0 0.0
    %2309 = vmatpush.msra.mxu0 0.0
    %2310 = vmatpush.msra.mxu0 0.0
    %2311 = vmatpush.msra.mxu0 0.0
    %2312 = vmatpush.msra.mxu0 0.0
    %2313 = vmatpush.msra.mxu0 0.0
    %2314 = vmatpush.msra.mxu0 0.0
    %2315 = vmatpush.msra.mxu0 0.0
    %2316 = vmatpush.msra.mxu0 0.0
    %2317 = vmatpush.msra.mxu0 %v95
    %2318 = vmatpush.msra.mxu0 %v73
    %2319 = vmatpush.msra.mxu0 %v72
    %2320 = vmatmul.f32.gmra.mxu0 %v2299
    %v2321 = vpop.f32.mrf.mxu0
    %v2322 = vadd.f32 0.0, %v2321
    %2323 = vmatmul.f32.gmra.mxu0 %v2302
    %v2324 = vpop.f32.mrf.mxu0
    %v2325 = vadd.f32 0.0, %v2324
    %2326 = vdwg.mxu0
    %2327 = vxpose.xlu0.b32.start [1/16] %v1698, 128
    %2328 = vxpose.xlu0.b32.cont [2/16] %v1699, 128
    %2329 = vxpose.xlu0.b32.cont [3/16] %v1700, 128
    %2330 = vxpose.xlu0.b32.cont [4/16] 0.0, 128
    %2331 = vxpose.xlu0.b32.cont [5/16] 0.0, 128
    %2332 = vxpose.xlu0.b32.cont [6/16] 0.0, 128
    %2333 = vxpose.xlu0.b32.cont [7/16] 0.0, 128
    %2334 = vxpose.xlu0.b32.cont [8/16] 0.0, 128
    %2335 = vxpose.xlu0.b32.cont [9/16] 0.0, 128
    %2336 = vxpose.xlu0.b32.cont [10/16] 0.0, 128
    %2337 = vxpose.xlu0.b32.cont [11/16] 0.0, 128
    %2338 = vxpose.xlu0.b32.cont [12/16] 0.0, 128
    %2339 = vxpose.xlu0.b32.cont [13/16] 0.0, 128
    %2340 = vxpose.xlu0.b32.cont [14/16] 0.0, 128
    %2341 = vxpose.xlu0.b32.cont [15/16] 0.0, 128
    %2342 = vxpose.xlu0.b32.end [16/16] 0.0, 128
    %v2343 = vpop.trf.xlu0
    %v2344 = vpop.trf.xlu0
    %v2345 = vpop.trf.xlu0
    %v2346 = vpop.trf.xlu0
    %v2347 = vpop.trf.xlu0
    %v2348 = vpop.trf.xlu0
    %v2349 = vpop.trf.xlu0
    %v2350 = vpop.trf.xlu0
    %v2351 = vpop.trf.xlu0
    %v2352 = vpop.trf.xlu0
    %v2353 = vpop.trf.xlu0
    %v2354 = vpop.trf.xlu0
    %v2355 = vpop.trf.xlu0
    %v2356 = vpop.trf.xlu0
    %v2357 = vpop.trf.xlu0
    %v2358 = vpop.trf.xlu0
    %v2360 = vsel %vm1748, %v2343, 0
    %v2363 = vsel %vm1748, %v2344, 0
    %2365 = vmatpush.msra.mxu0 0.0
    %2366 = vmatpush.msra.mxu0 0.0
    %2367 = vmatpush.msra.mxu0 0.0
    %2368 = vmatpush.msra.mxu0 0.0
    %2369 = vmatpush.msra.mxu0 0.0
    %2370 = vmatpush.msra.mxu0 0.0
    %2371 = vmatpush.msra.mxu0 0.0
    %2372 = vmatpush.msra.mxu0 0.0
    %2373 = vmatpush.msra.mxu0 0.0
    %2374 = vmatpush.msra.mxu0 0.0
    %2375 = vmatpush.msra.mxu0 0.0
    %2376 = vmatpush.msra.mxu0 0.0
    %2377 = vmatpush.msra.mxu0 0.0
    %2378 = vmatpush.msra.mxu0 %v96
    %2379 = vmatpush.msra.mxu0 %v75
    %2380 = vmatpush.msra.mxu0 %v74
    %2381 = vmatmul.f32.gmra.mxu0 %v2360
    %v2382 = vpop.f32.mrf.mxu0
    %v2383 = vadd.f32 0.0, %v2382
    %2384 = vmatmul.f32.gmra.mxu0 %v2363
    %v2385 = vpop.f32.mrf.mxu0
    %v2386 = vadd.f32 0.0, %v2385
    %2387 = vdwg.mxu0
    %2388 = vxpose.xlu0.b32.start [1/16] %v1701, 128
    %2389 = vxpose.xlu0.b32.cont [2/16] %v1702, 128
    %2390 = vxpose.xlu0.b32.cont [3/16] %v1703, 128
    %2391 = vxpose.xlu0.b32.cont [4/16] 0.0, 128
    %2392 = vxpose.xlu0.b32.cont [5/16] 0.0, 128
    %2393 = vxpose.xlu0.b32.cont [6/16] 0.0, 128
    %2394 = vxpose.xlu0.b32.cont [7/16] 0.0, 128
    %2395 = vxpose.xlu0.b32.cont [8/16] 0.0, 128
    %2396 = vxpose.xlu0.b32.cont [9/16] 0.0, 128
    %2397 = vxpose.xlu0.b32.cont [10/16] 0.0, 128
    %2398 = vxpose.xlu0.b32.cont [11/16] 0.0, 128
    %2399 = vxpose.xlu0.b32.cont [12/16] 0.0, 128
    %2400 = vxpose.xlu0.b32.cont [13/16] 0.0, 128
    %2401 = vxpose.xlu0.b32.cont [14/16] 0.0, 128
    %2402 = vxpose.xlu0.b32.cont [15/16] 0.0, 128
    %2403 = vxpose.xlu0.b32.end [16/16] 0.0, 128
    %v2404 = vpop.trf.xlu0
    %v2405 = vpop.trf.xlu0
    %v2406 = vpop.trf.xlu0
    %v2407 = vpop.trf.xlu0
    %v2408 = vpop.trf.xlu0
    %v2409 = vpop.trf.xlu0
    %v2410 = vpop.trf.xlu0
    %v2411 = vpop.trf.xlu0
    %v2412 = vpop.trf.xlu0
    %v2413 = vpop.trf.xlu0
    %v2414 = vpop.trf.xlu0
    %v2415 = vpop.trf.xlu0
    %v2416 = vpop.trf.xlu0
    %v2417 = vpop.trf.xlu0
    %v2418 = vpop.trf.xlu0
    %v2419 = vpop.trf.xlu0
    %v2421 = vsel %vm1748, %v2404, 0
    %v2424 = vsel %vm1748, %v2405, 0
    %2426 = vmatpush.msra.mxu0 0.0
    %2427 = vmatpush.msra.mxu0 0.0
    %2428 = vmatpush.msra.mxu0 0.0
    %2429 = vmatpush.msra.mxu0 0.0
    %2430 = vmatpush.msra.mxu0 0.0
    %2431 = vmatpush.msra.mxu0 0.0
    %2432 = vmatpush.msra.mxu0 0.0
    %2433 = vmatpush.msra.mxu0 0.0
    %2434 = vmatpush.msra.mxu0 0.0
    %2435 = vmatpush.msra.mxu0 0.0
    %2436 = vmatpush.msra.mxu0 0.0
    %2437 = vmatpush.msra.mxu0 0.0
    %2438 = vmatpush.msra.mxu0 0.0
    %2439 = vmatpush.msra.mxu0 %v97
    %2440 = vmatpush.msra.mxu0 %v77
    %2441 = vmatpush.msra.mxu0 %v76
    %2442 = vmatmul.f32.gmra.mxu0 %v2421
    %v2443 = vpop.f32.mrf.mxu0
    %v2444 = vadd.f32 0.0, %v2443
    %2445 = vmatmul.f32.gmra.mxu0 %v2424
    %v2446 = vpop.f32.mrf.mxu0
    %v2447 = vadd.f32 0.0, %v2446
    %2448 = vdwg.mxu0
    %2449 = vxpose.xlu0.b32.start [1/16] %v1704, 128
    %2450 = vxpose.xlu0.b32.cont [2/16] %v1705, 128
    %2451 = vxpose.xlu0.b32.cont [3/16] %v1706, 128
    %2452 = vxpose.xlu0.b32.cont [4/16] 0.0, 128
    %2453 = vxpose.xlu0.b32.cont [5/16] 0.0, 128
    %2454 = vxpose.xlu0.b32.cont [6/16] 0.0, 128
    %2455 = vxpose.xlu0.b32.cont [7/16] 0.0, 128
    %2456 = vxpose.xlu0.b32.cont [8/16] 0.0, 128
    %2457 = vxpose.xlu0.b32.cont [9/16] 0.0, 128
    %2458 = vxpose.xlu0.b32.cont [10/16] 0.0, 128
    %2459 = vxpose.xlu0.b32.cont [11/16] 0.0, 128
    %2460 = vxpose.xlu0.b32.cont [12/16] 0.0, 128
    %2461 = vxpose.xlu0.b32.cont [13/16] 0.0, 128
    %2462 = vxpose.xlu0.b32.cont [14/16] 0.0, 128
    %2463 = vxpose.xlu0.b32.cont [15/16] 0.0, 128
    %2464 = vxpose.xlu0.b32.end [16/16] 0.0, 128
    %v2465 = vpop.trf.xlu0
    %v2466 = vpop.trf.xlu0
    %v2467 = vpop.trf.xlu0
    %v2468 = vpop.trf.xlu0
    %v2469 = vpop.trf.xlu0
    %v2470 = vpop.trf.xlu0
    %v2471 = vpop.trf.xlu0
    %v2472 = vpop.trf.xlu0
    %v2473 = vpop.trf.xlu0
    %v2474 = vpop.trf.xlu0
    %v2475 = vpop.trf.xlu0
    %v2476 = vpop.trf.xlu0
    %v2477 = vpop.trf.xlu0
    %v2478 = vpop.trf.xlu0
    %v2479 = vpop.trf.xlu0
    %v2480 = vpop.trf.xlu0
    %v2482 = vsel %vm1748, %v2465, 0
    %v2485 = vsel %vm1748, %v2466, 0
    %2487 = vmatpush.msra.mxu0 0.0
    %2488 = vmatpush.msra.mxu0 0.0
    %2489 = vmatpush.msra.mxu0 0.0
    %2490 = vmatpush.msra.mxu0 0.0
    %2491 = vmatpush.msra.mxu0 0.0
    %2492 = vmatpush.msra.mxu0 0.0
    %2493 = vmatpush.msra.mxu0 0.0
    %2494 = vmatpush.msra.mxu0 0.0
    %2495 = vmatpush.msra.mxu0 0.0
    %2496 = vmatpush.msra.mxu0 0.0
    %2497 = vmatpush.msra.mxu0 0.0
    %2498 = vmatpush.msra.mxu0 0.0
    %2499 = vmatpush.msra.mxu0 0.0
    %2500 = vmatpush.msra.mxu0 %v98
    %2501 = vmatpush.msra.mxu0 %v79
    %2502 = vmatpush.msra.mxu0 %v78
    %2503 = vmatmul.f32.gmra.mxu0 %v2482
    %v2504 = vpop.f32.mrf.mxu0
    %v2505 = vadd.f32 0.0, %v2504
    %2506 = vmatmul.f32.gmra.mxu0 %v2485
    %v2507 = vpop.f32.mrf.mxu0
    %v2508 = vadd.f32 0.0, %v2507
    %2509 = vdwg.mxu0
    %2510 = vxpose.xlu0.b32.start [1/16] %v1707, 128
    %2511 = vxpose.xlu0.b32.cont [2/16] %v1708, 128
    %2512 = vxpose.xlu0.b32.cont [3/16] %v1709, 128
    %2513 = vxpose.xlu0.b32.cont [4/16] 0.0, 128
    %2514 = vxpose.xlu0.b32.cont [5/16] 0.0, 128
    %2515 = vxpose.xlu0.b32.cont [6/16] 0.0, 128
    %2516 = vxpose.xlu0.b32.cont [7/16] 0.0, 128
    %2517 = vxpose.xlu0.b32.cont [8/16] 0.0, 128
    %2518 = vxpose.xlu0.b32.cont [9/16] 0.0, 128
    %2519 = vxpose.xlu0.b32.cont [10/16] 0.0, 128
    %2520 = vxpose.xlu0.b32.cont [11/16] 0.0, 128
    %2521 = vxpose.xlu0.b32.cont [12/16] 0.0, 128
    %2522 = vxpose.xlu0.b32.cont [13/16] 0.0, 128
    %2523 = vxpose.xlu0.b32.cont [14/16] 0.0, 128
    %2524 = vxpose.xlu0.b32.cont [15/16] 0.0, 128
    %2525 = vxpose.xlu0.b32.end [16/16] 0.0, 128
    %v2526 = vpop.trf.xlu0
    %v2527 = vpop.trf.xlu0
    %v2528 = vpop.trf.xlu0
    %v2529 = vpop.trf.xlu0
    %v2530 = vpop.trf.xlu0
    %v2531 = vpop.trf.xlu0
    %v2532 = vpop.trf.xlu0
    %v2533 = vpop.trf.xlu0
    %v2534 = vpop.trf.xlu0
    %v2535 = vpop.trf.xlu0
    %v2536 = vpop.trf.xlu0
    %v2537 = vpop.trf.xlu0
    %v2538 = vpop.trf.xlu0
    %v2539 = vpop.trf.xlu0
    %v2540 = vpop.trf.xlu0
    %v2541 = vpop.trf.xlu0
    %v2543 = vsel %vm1748, %v2526, 0
    %v2546 = vsel %vm1748, %v2527, 0
    %2548 = vmatpush.msra.mxu0 0.0
    %2549 = vmatpush.msra.mxu0 0.0
    %2550 = vmatpush.msra.mxu0 0.0
    %2551 = vmatpush.msra.mxu0 0.0
    %2552 = vmatpush.msra.mxu0 0.0
    %2553 = vmatpush.msra.mxu0 0.0
    %2554 = vmatpush.msra.mxu0 0.0
    %2555 = vmatpush.msra.mxu0 0.0
    %2556 = vmatpush.msra.mxu0 0.0
    %2557 = vmatpush.msra.mxu0 0.0
    %2558 = vmatpush.msra.mxu0 0.0
    %2559 = vmatpush.msra.mxu0 0.0
    %2560 = vmatpush.msra.mxu0 0.0
    %2561 = vmatpush.msra.mxu0 %v99
    %2562 = vmatpush.msra.mxu0 %v81
    %2563 = vmatpush.msra.mxu0 %v80
    %2564 = vmatmul.f32.gmra.mxu0 %v2543
    %v2565 = vpop.f32.mrf.mxu0
    %v2566 = vadd.f32 0.0, %v2565
    %2567 = vmatmul.f32.gmra.mxu0 %v2546
    %v2568 = vpop.f32.mrf.mxu0
    %v2569 = vadd.f32 0.0, %v2568
    %2570 = vdwg.mxu0
    %2571 = vxpose.xlu0.b32.start [1/16] %v1710, 128
    %2572 = vxpose.xlu0.b32.cont [2/16] %v1711, 128
    %2573 = vxpose.xlu0.b32.cont [3/16] %v1712, 128
    %2574 = vxpose.xlu0.b32.cont [4/16] 0.0, 128
    %2575 = vxpose.xlu0.b32.cont [5/16] 0.0, 128
    %2576 = vxpose.xlu0.b32.cont [6/16] 0.0, 128
    %2577 = vxpose.xlu0.b32.cont [7/16] 0.0, 128
    %2578 = vxpose.xlu0.b32.cont [8/16] 0.0, 128
    %2579 = vxpose.xlu0.b32.cont [9/16] 0.0, 128
    %2580 = vxpose.xlu0.b32.cont [10/16] 0.0, 128
    %2581 = vxpose.xlu0.b32.cont [11/16] 0.0, 128
    %2582 = vxpose.xlu0.b32.cont [12/16] 0.0, 128
    %2583 = vxpose.xlu0.b32.cont [13/16] 0.0, 128
    %2584 = vxpose.xlu0.b32.cont [14/16] 0.0, 128
    %2585 = vxpose.xlu0.b32.cont [15/16] 0.0, 128
    %2586 = vxpose.xlu0.b32.end [16/16] 0.0, 128
    %v2587 = vpop.trf.xlu0
    %v2588 = vpop.trf.xlu0
    %v2589 = vpop.trf.xlu0
    %v2590 = vpop.trf.xlu0
    %v2591 = vpop.trf.xlu0
    %v2592 = vpop.trf.xlu0
    %v2593 = vpop.trf.xlu0
    %v2594 = vpop.trf.xlu0
    %v2595 = vpop.trf.xlu0
    %v2596 = vpop.trf.xlu0
    %v2597 = vpop.trf.xlu0
    %v2598 = vpop.trf.xlu0
    %v2599 = vpop.trf.xlu0
    %v2600 = vpop.trf.xlu0
    %v2601 = vpop.trf.xlu0
    %v2602 = vpop.trf.xlu0
    %v2604 = vsel %vm1748, %v2587, 0
    %v2607 = vsel %vm1748, %v2588, 0
    %2609 = vmatpush.msra.mxu0 0.0
    %2610 = vmatpush.msra.mxu0 0.0
    %2611 = vmatpush.msra.mxu0 0.0
    %2612 = vmatpush.msra.mxu0 0.0
    %2613 = vmatpush.msra.mxu0 0.0
    %2614 = vmatpush.msra.mxu0 0.0
    %2615 = vmatpush.msra.mxu0 0.0
    %2616 = vmatpush.msra.mxu0 0.0
    %2617 = vmatpush.msra.mxu0 0.0
    %2618 = vmatpush.msra.mxu0 0.0
    %2619 = vmatpush.msra.mxu0 0.0
    %2620 = vmatpush.msra.mxu0 0.0
    %2621 = vmatpush.msra.mxu0 0.0
    %2622 = vmatpush.msra.mxu0 %v100
    %2623 = vmatpush.msra.mxu0 %v83
    %2624 = vmatpush.msra.mxu0 %v82
    %2625 = vmatmul.f32.gmra.mxu0 %v2604
    %v2626 = vpop.f32.mrf.mxu0
    %v2627 = vadd.f32 0.0, %v2626
    %2628 = vmatmul.f32.gmra.mxu0 %v2607
    %v2629 = vpop.f32.mrf.mxu0
    %v2630 = vadd.f32 0.0, %v2629
    %2631 = vdwg.mxu0
    %2632 = vxpose.xlu0.b32.start [1/16] %v1713, 128
    %2633 = vxpose.xlu0.b32.cont [2/16] %v1714, 128
    %2634 = vxpose.xlu0.b32.cont [3/16] %v1715, 128
    %2635 = vxpose.xlu0.b32.cont [4/16] 0.0, 128
    %2636 = vxpose.xlu0.b32.cont [5/16] 0.0, 128
    %2637 = vxpose.xlu0.b32.cont [6/16] 0.0, 128
    %2638 = vxpose.xlu0.b32.cont [7/16] 0.0, 128
    %2639 = vxpose.xlu0.b32.cont [8/16] 0.0, 128
    %2640 = vxpose.xlu0.b32.cont [9/16] 0.0, 128
    %2641 = vxpose.xlu0.b32.cont [10/16] 0.0, 128
    %2642 = vxpose.xlu0.b32.cont [11/16] 0.0, 128
    %2643 = vxpose.xlu0.b32.cont [12/16] 0.0, 128
    %2644 = vxpose.xlu0.b32.cont [13/16] 0.0, 128
    %2645 = vxpose.xlu0.b32.cont [14/16] 0.0, 128
    %2646 = vxpose.xlu0.b32.cont [15/16] 0.0, 128
    %2647 = vxpose.xlu0.b32.end [16/16] 0.0, 128
    %v2648 = vpop.trf.xlu0
    %v2649 = vpop.trf.xlu0
    %v2650 = vpop.trf.xlu0
    %v2651 = vpop.trf.xlu0
    %v2652 = vpop.trf.xlu0
    %v2653 = vpop.trf.xlu0
    %v2654 = vpop.trf.xlu0
    %v2655 = vpop.trf.xlu0
    %v2656 = vpop.trf.xlu0
    %v2657 = vpop.trf.xlu0
    %v2658 = vpop.trf.xlu0
    %v2659 = vpop.trf.xlu0
    %v2660 = vpop.trf.xlu0
    %v2661 = vpop.trf.xlu0
    %v2662 = vpop.trf.xlu0
    %v2663 = vpop.trf.xlu0
    %v2665 = vsel %vm1748, %v2648, 0
    %v2668 = vsel %vm1748, %v2649, 0
    %2670 = vmatpush.msra.mxu0 0.0
    %2671 = vmatpush.msra.mxu0 0.0
    %2672 = vmatpush.msra.mxu0 0.0
    %2673 = vmatpush.msra.mxu0 0.0
    %2674 = vmatpush.msra.mxu0 0.0
    %2675 = vmatpush.msra.mxu0 0.0
    %2676 = vmatpush.msra.mxu0 0.0
    %2677 = vmatpush.msra.mxu0 0.0
    %2678 = vmatpush.msra.mxu0 0.0
    %2679 = vmatpush.msra.mxu0 0.0
    %2680 = vmatpush.msra.mxu0 0.0
    %2681 = vmatpush.msra.mxu0 0.0
    %2682 = vmatpush.msra.mxu0 0.0
    %2683 = vmatpush.msra.mxu0 %v101
    %2684 = vmatpush.msra.mxu0 %v85
    %2685 = vmatpush.msra.mxu0 %v84
    %2686 = vmatmul.f32.gmra.mxu0 %v2665
    %v2687 = vpop.f32.mrf.mxu0
    %v2688 = vadd.f32 0.0, %v2687
    %2689 = vmatmul.f32.gmra.mxu0 %v2668
    %v2690 = vpop.f32.mrf.mxu0
    %v2691 = vadd.f32 0.0, %v2690
    %2692 = vdwg.mxu0
    %v2693 = vsel %vm107, %v1773, 0.0
    %2694 = vadd.xlane.f32.xlu0 %v2693
    %v2695 = vpop.xlane.xlu0 %2694
    %v2696 = vsel %vm107, %v1776, 0.0
    %2697 = vadd.xlane.f32.xlu0 %v2696
    %v2698 = vpop.xlane.xlu0 %2697
    %v2699 = vsel %vm107, %v1834, 0.0
    %2700 = vadd.xlane.f32.xlu0 %v2699
    %v2701 = vpop.xlane.xlu0 %2700
    %v2702 = vsel %vm107, %v1837, 0.0
    %2703 = vadd.xlane.f32.xlu0 %v2702
    %v2704 = vpop.xlane.xlu0 %2703
    %v2705 = vsel %vm107, %v1895, 0.0
    %2706 = vadd.xlane.f32.xlu0 %v2705
    %v2707 = vpop.xlane.xlu0 %2706
    %v2708 = vsel %vm107, %v1898, 0.0
    %2709 = vadd.xlane.f32.xlu0 %v2708
    %v2710 = vpop.xlane.xlu0 %2709
    %v2711 = vsel %vm107, %v1956, 0.0
    %2712 = vadd.xlane.f32.xlu0 %v2711
    %v2713 = vpop.xlane.xlu0 %2712
    %v2714 = vsel %vm107, %v1959, 0.0
    %2715 = vadd.xlane.f32.xlu0 %v2714
    %v2716 = vpop.xlane.xlu0 %2715
    %v2717 = vsel %vm107, %v2017, 0.0
    %2718 = vadd.xlane.f32.xlu0 %v2717
    %v2719 = vpop.xlane.xlu0 %2718
    %v2720 = vsel %vm107, %v2020, 0.0
    %2721 = vadd.xlane.f32.xlu0 %v2720
    %v2722 = vpop.xlane.xlu0 %2721
    %v2723 = vsel %vm107, %v2078, 0.0
    %2724 = vadd.xlane.f32.xlu0 %v2723
    %v2725 = vpop.xlane.xlu0 %2724
    %v2726 = vsel %vm107, %v2081, 0.0
    %2727 = vadd.xlane.f32.xlu0 %v2726
    %v2728 = vpop.xlane.xlu0 %2727
    %v2729 = vsel %vm107, %v2139, 0.0
    %2730 = vadd.xlane.f32.xlu0 %v2729
    %v2731 = vpop.xlane.xlu0 %2730
    %v2732 = vsel %vm107, %v2142, 0.0
    %2733 = vadd.xlane.f32.xlu0 %v2732
    %v2734 = vpop.xlane.xlu0 %2733
    %v2735 = vsel %vm107, %v2200, 0.0
    %2736 = vadd.xlane.f32.xlu0 %v2735
    %v2737 = vpop.xlane.xlu0 %2736
    %v2738 = vsel %vm107, %v2203, 0.0
    %2739 = vadd.xlane.f32.xlu0 %v2738
    %v2740 = vpop.xlane.xlu0 %2739
    %v2741 = vsel %vm107, %v2261, 0.0
    %2742 = vadd.xlane.f32.xlu0 %v2741
    %v2743 = vpop.xlane.xlu0 %2742
    %v2744 = vsel %vm107, %v2264, 0.0
    %2745 = vadd.xlane.f32.xlu0 %v2744
    %v2746 = vpop.xlane.xlu0 %2745
    %v2747 = vsel %vm107, %v2322, 0.0
    %2748 = vadd.xlane.f32.xlu0 %v2747
    %v2749 = vpop.xlane.xlu0 %2748
    %v2750 = vsel %vm107, %v2325, 0.0
    %2751 = vadd.xlane.f32.xlu0 %v2750
    %v2752 = vpop.xlane.xlu0 %2751
    %v2753 = vsel %vm107, %v2383, 0.0
    %2754 = vadd.xlane.f32.xlu0 %v2753
    %v2755 = vpop.xlane.xlu0 %2754
    %v2756 = vsel %vm107, %v2386, 0.0
    %2757 = vadd.xlane.f32.xlu0 %v2756
    %v2758 = vpop.xlane.xlu0 %2757
    %v2759 = vsel %vm107, %v2444, 0.0
    %2760 = vadd.xlane.f32.xlu0 %v2759
    %v2761 = vpop.xlane.xlu0 %2760
    %v2762 = vsel %vm107, %v2447, 0.0
    %2763 = vadd.xlane.f32.xlu0 %v2762
    %v2764 = vpop.xlane.xlu0 %2763
    %v2765 = vsel %vm107, %v2505, 0.0
    %2766 = vadd.xlane.f32.xlu0 %v2765
    %v2767 = vpop.xlane.xlu0 %2766
    %v2768 = vsel %vm107, %v2508, 0.0
    %2769 = vadd.xlane.f32.xlu0 %v2768
    %v2770 = vpop.xlane.xlu0 %2769
    %v2771 = vsel %vm107, %v2566, 0.0
    %2772 = vadd.xlane.f32.xlu0 %v2771
    %v2773 = vpop.xlane.xlu0 %2772
    %v2774 = vsel %vm107, %v2569, 0.0
    %2775 = vadd.xlane.f32.xlu0 %v2774
    %v2776 = vpop.xlane.xlu0 %2775
    %v2777 = vsel %vm107, %v2627, 0.0
    %2778 = vadd.xlane.f32.xlu0 %v2777
    %v2779 = vpop.xlane.xlu0 %2778
    %v2780 = vsel %vm107, %v2630, 0.0
    %2781 = vadd.xlane.f32.xlu0 %v2780
    %v2782 = vpop.xlane.xlu0 %2781
    %v2783 = vsel %vm107, %v2688, 0.0
    %2784 = vadd.xlane.f32.xlu0 %v2783
    %v2785 = vpop.xlane.xlu0 %2784
    %v2786 = vsel %vm107, %v2691, 0.0
    %2787 = vadd.xlane.f32.xlu0 %v2786
    %v2788 = vpop.xlane.xlu0 %2787
    %v2789 = vrcp.pop 32.0
    %v2790 = vmul.f32 32.0, %v2789
    %v2791 = vsub.f32 1.0, %v2790
    %v2792 = vmul.f32 %v2789, %v2791
    %v2793 = vadd.f32 %v2789, %v2792
    %vm2794 = vweird.f32 %v2789
    %v2795 = vsel %vm2794, %v2789, %v2793
    %v2796 = vmul.f32 %v2695, %v2795
    %v2797 = vmul.f32 %v2698, %v2795
    %v2798 = vmul.f32 %v2701, %v2795
    %v2799 = vmul.f32 %v2704, %v2795
    %v2800 = vmul.f32 %v2707, %v2795
    %v2801 = vmul.f32 %v2710, %v2795
    %v2802 = vmul.f32 %v2713, %v2795
    %v2803 = vmul.f32 %v2716, %v2795
    %v2804 = vmul.f32 %v2719, %v2795
    %v2805 = vmul.f32 %v2722, %v2795
    %v2806 = vmul.f32 %v2725, %v2795
    %v2807 = vmul.f32 %v2728, %v2795
    %v2808 = vmul.f32 %v2731, %v2795
    %v2809 = vmul.f32 %v2734, %v2795
    %v2810 = vmul.f32 %v2737, %v2795
    %v2811 = vmul.f32 %v2740, %v2795
    %v2812 = vmul.f32 %v2743, %v2795
    %v2813 = vmul.f32 %v2746, %v2795
    %v2814 = vmul.f32 %v2749, %v2795
    %v2815 = vmul.f32 %v2752, %v2795
    %v2816 = vmul.f32 %v2755, %v2795
    %v2817 = vmul.f32 %v2758, %v2795
    %v2818 = vmul.f32 %v2761, %v2795
    %v2819 = vmul.f32 %v2764, %v2795
    %v2820 = vmul.f32 %v2767, %v2795
    %v2821 = vmul.f32 %v2770, %v2795
    %v2822 = vmul.f32 %v2773, %v2795
    %v2823 = vmul.f32 %v2776, %v2795
    %v2824 = vmul.f32 %v2779, %v2795
    %v2825 = vmul.f32 %v2782, %v2795
    %v2826 = vmul.f32 %v2785, %v2795
    %v2827 = vmul.f32 %v2788, %v2795
    %v2828 = vsub.f32 %v1773, %v2796
    %v2829 = vsub.f32 %v1776, %v2797
    %v2830 = vsub.f32 %v1834, %v2798
    %v2831 = vsub.f32 %v1837, %v2799
    %v2832 = vsub.f32 %v1895, %v2800
    %v2833 = vsub.f32 %v1898, %v2801
    %v2834 = vsub.f32 %v1956, %v2802
    %v2835 = vsub.f32 %v1959, %v2803
    %v2836 = vsub.f32 %v2017, %v2804
    %v2837 = vsub.f32 %v2020, %v2805
    %v2838 = vsub.f32 %v2078, %v2806
    %v2839 = vsub.f32 %v2081, %v2807
    %v2840 = vsub.f32 %v2139, %v2808
    %v2841 = vsub.f32 %v2142, %v2809
    %v2842 = vsub.f32 %v2200, %v2810
    %v2843 = vsub.f32 %v2203, %v2811
    %v2844 = vsub.f32 %v2261, %v2812
    %v2845 = vsub.f32 %v2264, %v2813
    %v2846 = vsub.f32 %v2322, %v2814
    %v2847 = vsub.f32 %v2325, %v2815
    %v2848 = vsub.f32 %v2383, %v2816
    %v2849 = vsub.f32 %v2386, %v2817
    %v2850 = vsub.f32 %v2444, %v2818
    %v2851 = vsub.f32 %v2447, %v2819
    %v2852 = vsub.f32 %v2505, %v2820
    %v2853 = vsub.f32 %v2508, %v2821
    %v2854 = vsub.f32 %v2566, %v2822
    %v2855 = vsub.f32 %v2569, %v2823
    %v2856 = vsub.f32 %v2627, %v2824
    %v2857 = vsub.f32 %v2630, %v2825
    %v2858 = vsub.f32 %v2688, %v2826
    %v2859 = vsub.f32 %v2691, %v2827
    %v2860 = vmul.f32 %v2828, %v2828
    %v2861 = vmul.f32 %v2829, %v2829
    %v2862 = vmul.f32 %v2830, %v2830
    %v2863 = vmul.f32 %v2831, %v2831
    %v2864 = vmul.f32 %v2832, %v2832
    %v2865 = vmul.f32 %v2833, %v2833
    %v2866 = vmul.f32 %v2834, %v2834
    %v2867 = vmul.f32 %v2835, %v2835
    %v2868 = vmul.f32 %v2836, %v2836
    %v2869 = vmul.f32 %v2837, %v2837
    %v2870 = vmul.f32 %v2838, %v2838
    %v2871 = vmul.f32 %v2839, %v2839
    %v2872 = vmul.f32 %v2840, %v2840
    %v2873 = vmul.f32 %v2841, %v2841
    %v2874 = vmul.f32 %v2842, %v2842
    %v2875 = vmul.f32 %v2843, %v2843
    %v2876 = vmul.f32 %v2844, %v2844
    %v2877 = vmul.f32 %v2845, %v2845
    %v2878 = vmul.f32 %v2846, %v2846
    %v2879 = vmul.f32 %v2847, %v2847
    %v2880 = vmul.f32 %v2848, %v2848
    %v2881 = vmul.f32 %v2849, %v2849
    %v2882 = vmul.f32 %v2850, %v2850
    %v2883 = vmul.f32 %v2851, %v2851
    %v2884 = vmul.f32 %v2852, %v2852
    %v2885 = vmul.f32 %v2853, %v2853
    %v2886 = vmul.f32 %v2854, %v2854
    %v2887 = vmul.f32 %v2855, %v2855
    %v2888 = vmul.f32 %v2856, %v2856
    %v2889 = vmul.f32 %v2857, %v2857
    %v2890 = vmul.f32 %v2858, %v2858
    %v2891 = vmul.f32 %v2859, %v2859
    %v2892 = vsel %vm107, %v2860, 0.0
    %2893 = vadd.xlane.f32.xlu0 %v2892
    %v2894 = vpop.xlane.xlu0 %2893
    %v2895 = vsel %vm107, %v2861, 0.0
    %2896 = vadd.xlane.f32.xlu0 %v2895
    %v2897 = vpop.xlane.xlu0 %2896
    %v2898 = vsel %vm107, %v2862, 0.0
    %2899 = vadd.xlane.f32.xlu0 %v2898
    %v2900 = vpop.xlane.xlu0 %2899
    %v2901 = vsel %vm107, %v2863, 0.0
    %2902 = vadd.xlane.f32.xlu0 %v2901
    %v2903 = vpop.xlane.xlu0 %2902
    %v2904 = vsel %vm107, %v2864, 0.0
    %2905 = vadd.xlane.f32.xlu0 %v2904
    %v2906 = vpop.xlane.xlu0 %2905
    %v2907 = vsel %vm107, %v2865, 0.0
    %2908 = vadd.xlane.f32.xlu0 %v2907
    %v2909 = vpop.xlane.xlu0 %2908
    %v2910 = vsel %vm107, %v2866, 0.0
    %2911 = vadd.xlane.f32.xlu0 %v2910
    %v2912 = vpop.xlane.xlu0 %2911
    %v2913 = vsel %vm107, %v2867, 0.0
    %2914 = vadd.xlane.f32.xlu0 %v2913
    %v2915 = vpop.xlane.xlu0 %2914
    %v2916 = vsel %vm107, %v2868, 0.0
    %2917 = vadd.xlane.f32.xlu0 %v2916
    %v2918 = vpop.xlane.xlu0 %2917
    %v2919 = vsel %vm107, %v2869, 0.0
    %2920 = vadd.xlane.f32.xlu0 %v2919
    %v2921 = vpop.xlane.xlu0 %2920
    %v2922 = vsel %vm107, %v2870, 0.0
    %2923 = vadd.xlane.f32.xlu0 %v2922
    %v2924 = vpop.xlane.xlu0 %2923
    %v2925 = vsel %vm107, %v2871, 0.0
    %2926 = vadd.xlane.f32.xlu0 %v2925
    %v2927 = vpop.xlane.xlu0 %2926
    %v2928 = vsel %vm107, %v2872, 0.0
    %2929 = vadd.xlane.f32.xlu0 %v2928
    %v2930 = vpop.xlane.xlu0 %2929
    %v2931 = vsel %vm107, %v2873, 0.0
    %2932 = vadd.xlane.f32.xlu0 %v2931
    %v2933 = vpop.xlane.xlu0 %2932
    %v2934 = vsel %vm107, %v2874, 0.0
    %2935 = vadd.xlane.f32.xlu0 %v2934
    %v2936 = vpop.xlane.xlu0 %2935
    %v2937 = vsel %vm107, %v2875, 0.0
    %2938 = vadd.xlane.f32.xlu0 %v2937
    %v2939 = vpop.xlane.xlu0 %2938
    %v2940 = vsel %vm107, %v2876, 0.0
    %2941 = vadd.xlane.f32.xlu0 %v2940
    %v2942 = vpop.xlane.xlu0 %2941
    %v2943 = vsel %vm107, %v2877, 0.0
    %2944 = vadd.xlane.f32.xlu0 %v2943
    %v2945 = vpop.xlane.xlu0 %2944
    %v2946 = vsel %vm107, %v2878, 0.0
    %2947 = vadd.xlane.f32.xlu0 %v2946
    %v2948 = vpop.xlane.xlu0 %2947
    %v2949 = vsel %vm107, %v2879, 0.0
    %2950 = vadd.xlane.f32.xlu0 %v2949
    %v2951 = vpop.xlane.xlu0 %2950
    %v2952 = vsel %vm107, %v2880, 0.0
    %2953 = vadd.xlane.f32.xlu0 %v2952
    %v2954 = vpop.xlane.xlu0 %2953
    %v2955 = vsel %vm107, %v2881, 0.0
    %2956 = vadd.xlane.f32.xlu0 %v2955
    %v2957 = vpop.xlane.xlu0 %2956
    %v2958 = vsel %vm107, %v2882, 0.0
    %2959 = vadd.xlane.f32.xlu0 %v2958
    %v2960 = vpop.xlane.xlu0 %2959
    %v2961 = vsel %vm107, %v2883, 0.0
    %2962 = vadd.xlane.f32.xlu0 %v2961
    %v2963 = vpop.xlane.xlu0 %2962
    %v2964 = vsel %vm107, %v2884, 0.0
    %2965 = vadd.xlane.f32.xlu0 %v2964
    %v2966 = vpop.xlane.xlu0 %2965
    %v2967 = vsel %vm107, %v2885, 0.0
    %2968 = vadd.xlane.f32.xlu0 %v2967
    %v2969 = vpop.xlane.xlu0 %2968
    %v2970 = vsel %vm107, %v2886, 0.0
    %2971 = vadd.xlane.f32.xlu0 %v2970
    %v2972 = vpop.xlane.xlu0 %2971
    %v2973 = vsel %vm107, %v2887, 0.0
    %2974 = vadd.xlane.f32.xlu0 %v2973
    %v2975 = vpop.xlane.xlu0 %2974
    %v2976 = vsel %vm107, %v2888, 0.0
    %2977 = vadd.xlane.f32.xlu0 %v2976
    %v2978 = vpop.xlane.xlu0 %2977
    %v2979 = vsel %vm107, %v2889, 0.0
    %2980 = vadd.xlane.f32.xlu0 %v2979
    %v2981 = vpop.xlane.xlu0 %2980
    %v2982 = vsel %vm107, %v2890, 0.0
    %2983 = vadd.xlane.f32.xlu0 %v2982
    %v2984 = vpop.xlane.xlu0 %2983
    %v2985 = vsel %vm107, %v2891, 0.0
    %2986 = vadd.xlane.f32.xlu0 %v2985
    %v2987 = vpop.xlane.xlu0 %2986
    %v2988 = vmul.f32 %v2894, %v2795
    %v2989 = vmul.f32 %v2897, %v2795
    %v2990 = vmul.f32 %v2900, %v2795
    %v2991 = vmul.f32 %v2903, %v2795
    %v2992 = vmul.f32 %v2906, %v2795
    %v2993 = vmul.f32 %v2909, %v2795
    %v2994 = vmul.f32 %v2912, %v2795
    %v2995 = vmul.f32 %v2915, %v2795
    %v2996 = vmul.f32 %v2918, %v2795
    %v2997 = vmul.f32 %v2921, %v2795
    %v2998 = vmul.f32 %v2924, %v2795
    %v2999 = vmul.f32 %v2927, %v2795
    %v3000 = vmul.f32 %v2930, %v2795
    %v3001 = vmul.f32 %v2933, %v2795
    %v3002 = vmul.f32 %v2936, %v2795
    %v3003 = vmul.f32 %v2939, %v2795
    %v3004 = vmul.f32 %v2942, %v2795
    %v3005 = vmul.f32 %v2945, %v2795
    %v3006 = vmul.f32 %v2948, %v2795
    %v3007 = vmul.f32 %v2951, %v2795
    %v3008 = vmul.f32 %v2954, %v2795
    %v3009 = vmul.f32 %v2957, %v2795
    %v3010 = vmul.f32 %v2960, %v2795
    %v3011 = vmul.f32 %v2963, %v2795
    %v3012 = vmul.f32 %v2966, %v2795
    %v3013 = vmul.f32 %v2969, %v2795
    %v3014 = vmul.f32 %v2972, %v2795
    %v3015 = vmul.f32 %v2975, %v2795
    %v3016 = vmul.f32 %v2978, %v2795
    %v3017 = vmul.f32 %v2981, %v2795
    %v3018 = vmul.f32 %v2984, %v2795
    %v3019 = vmul.f32 %v2987, %v2795
    %v3020 = vadd.f32 %v2988, 1e-05
    %v3021 = vadd.f32 %v2989, 1e-05
    %v3022 = vadd.f32 %v2990, 1e-05
    %v3023 = vadd.f32 %v2991, 1e-05
    %v3024 = vadd.f32 %v2992, 1e-05
    %v3025 = vadd.f32 %v2993, 1e-05
    %v3026 = vadd.f32 %v2994, 1e-05
    %v3027 = vadd.f32 %v2995, 1e-05
    %v3028 = vadd.f32 %v2996, 1e-05
    %v3029 = vadd.f32 %v2997, 1e-05
    %v3030 = vadd.f32 %v2998, 1e-05
    %v3031 = vadd.f32 %v2999, 1e-05
    %v3032 = vadd.f32 %v3000, 1e-05
    %v3033 = vadd.f32 %v3001, 1e-05
    %v3034 = vadd.f32 %v3002, 1e-05
    %v3035 = vadd.f32 %v3003, 1e-05
    %v3036 = vadd.f32 %v3004, 1e-05
    %v3037 = vadd.f32 %v3005, 1e-05
    %v3038 = vadd.f32 %v3006, 1e-05
    %v3039 = vadd.f32 %v3007, 1e-05
    %v3040 = vadd.f32 %v3008, 1e-05
    %v3041 = vadd.f32 %v3009, 1e-05
    %v3042 = vadd.f32 %v3010, 1e-05
    %v3043 = vadd.f32 %v3011, 1e-05
    %v3044 = vadd.f32 %v3012, 1e-05
    %v3045 = vadd.f32 %v3013, 1e-05
    %v3046 = vadd.f32 %v3014, 1e-05
    %v3047 = vadd.f32 %v3015, 1e-05
    %v3048 = vadd.f32 %v3016, 1e-05
    %v3049 = vadd.f32 %v3017, 1e-05
    %v3050 = vadd.f32 %v3018, 1e-05
    %v3051 = vadd.f32 %v3019, 1e-05
    %v3052 = vrsqrt.pop %v3020
    %v3053 = vmul.f32 %v3052, %v3020
    %v3054 = vmul.f32 %v3053, %v3052
    %v3055 = vmul.f32 0.5, %v3054
    %v3056 = vsub.f32 1.5, %v3055
    %v3057 = vmul.f32 %v3052, %v3056
    %vm3058 = vweird.f32 %v3020
    %vm3059 = vweird.f32 %v3052
    %vm3060 = vmor %vm3058, %vm3059
    %v3061 = vsel %vm3060, %v3052, %v3057
    %v3062 = vrsqrt.pop %v3021
    %v3063 = vmul.f32 %v3062, %v3021
    %v3064 = vmul.f32 %v3063, %v3062
    %v3065 = vmul.f32 0.5, %v3064
    %v3066 = vsub.f32 1.5, %v3065
    %v3067 = vmul.f32 %v3062, %v3066
    %vm3068 = vweird.f32 %v3021
    %vm3069 = vweird.f32 %v3062
    %vm3070 = vmor %vm3068, %vm3069
    %v3071 = vsel %vm3070, %v3062, %v3067
    %v3072 = vrsqrt.pop %v3022
    %v3073 = vmul.f32 %v3072, %v3022
    %v3074 = vmul.f32 %v3073, %v3072
    %v3075 = vmul.f32 0.5, %v3074
    %v3076 = vsub.f32 1.5, %v3075
    %v3077 = vmul.f32 %v3072, %v3076
    %vm3078 = vweird.f32 %v3022
    %vm3079 = vweird.f32 %v3072
    %vm3080 = vmor %vm3078, %vm3079
    %v3081 = vsel %vm3080, %v3072, %v3077
    %v3082 = vrsqrt.pop %v3023
    %v3083 = vmul.f32 %v3082, %v3023
    %v3084 = vmul.f32 %v3083, %v3082
    %v3085 = vmul.f32 0.5, %v3084
    %v3086 = vsub.f32 1.5, %v3085
    %v3087 = vmul.f32 %v3082, %v3086
    %vm3088 = vweird.f32 %v3023
    %vm3089 = vweird.f32 %v3082
    %vm3090 = vmor %vm3088, %vm3089
    %v3091 = vsel %vm3090, %v3082, %v3087
    %v3092 = vrsqrt.pop %v3024
    %v3093 = vmul.f32 %v3092, %v3024
    %v3094 = vmul.f32 %v3093, %v3092
    %v3095 = vmul.f32 0.5, %v3094
    %v3096 = vsub.f32 1.5, %v3095
    %v3097 = vmul.f32 %v3092, %v3096
    %vm3098 = vweird.f32 %v3024
    %vm3099 = vweird.f32 %v3092
    %vm3100 = vmor %vm3098, %vm3099
    %v3101 = vsel %vm3100, %v3092, %v3097
    %v3102 = vrsqrt.pop %v3025
    %v3103 = vmul.f32 %v3102, %v3025
    %v3104 = vmul.f32 %v3103, %v3102
    %v3105 = vmul.f32 0.5, %v3104
    %v3106 = vsub.f32 1.5, %v3105
    %v3107 = vmul.f32 %v3102, %v3106
    %vm3108 = vweird.f32 %v3025
    %vm3109 = vweird.f32 %v3102
    %vm3110 = vmor %vm3108, %vm3109
    %v3111 = vsel %vm3110, %v3102, %v3107
    %v3112 = vrsqrt.pop %v3026
    %v3113 = vmul.f32 %v3112, %v3026
    %v3114 = vmul.f32 %v3113, %v3112
    %v3115 = vmul.f32 0.5, %v3114
    %v3116 = vsub.f32 1.5, %v3115
    %v3117 = vmul.f32 %v3112, %v3116
    %vm3118 = vweird.f32 %v3026
    %vm3119 = vweird.f32 %v3112
    %vm3120 = vmor %vm3118, %vm3119
    %v3121 = vsel %vm3120, %v3112, %v3117
    %v3122 = vrsqrt.pop %v3027
    %v3123 = vmul.f32 %v3122, %v3027
    %v3124 = vmul.f32 %v3123, %v3122
    %v3125 = vmul.f32 0.5, %v3124
    %v3126 = vsub.f32 1.5, %v3125
    %v3127 = vmul.f32 %v3122, %v3126
    %vm3128 = vweird.f32 %v3027
    %vm3129 = vweird.f32 %v3122
    %vm3130 = vmor %vm3128, %vm3129
    %v3131 = vsel %vm3130, %v3122, %v3127
    %v3132 = vrsqrt.pop %v3028
    %v3133 = vmul.f32 %v3132, %v3028
    %v3134 = vmul.f32 %v3133, %v3132
    %v3135 = vmul.f32 0.5, %v3134
    %v3136 = vsub.f32 1.5, %v3135
    %v3137 = vmul.f32 %v3132, %v3136
    %vm3138 = vweird.f32 %v3028
    %vm3139 = vweird.f32 %v3132
    %vm3140 = vmor %vm3138, %vm3139
    %v3141 = vsel %vm3140, %v3132, %v3137
    %v3142 = vrsqrt.pop %v3029
    %v3143 = vmul.f32 %v3142, %v3029
    %v3144 = vmul.f32 %v3143, %v3142
    %v3145 = vmul.f32 0.5, %v3144
    %v3146 = vsub.f32 1.5, %v3145
    %v3147 = vmul.f32 %v3142, %v3146
    %vm3148 = vweird.f32 %v3029
    %vm3149 = vweird.f32 %v3142
    %vm3150 = vmor %vm3148, %vm3149
    %v3151 = vsel %vm3150, %v3142, %v3147
    %v3152 = vrsqrt.pop %v3030
    %v3153 = vmul.f32 %v3152, %v3030
    %v3154 = vmul.f32 %v3153, %v3152
    %v3155 = vmul.f32 0.5, %v3154
    %v3156 = vsub.f32 1.5, %v3155
    %v3157 = vmul.f32 %v3152, %v3156
    %vm3158 = vweird.f32 %v3030
    %vm3159 = vweird.f32 %v3152
    %vm3160 = vmor %vm3158, %vm3159
    %v3161 = vsel %vm3160, %v3152, %v3157
    %v3162 = vrsqrt.pop %v3031
    %v3163 = vmul.f32 %v3162, %v3031
    %v3164 = vmul.f32 %v3163, %v3162
    %v3165 = vmul.f32 0.5, %v3164
    %v3166 = vsub.f32 1.5, %v3165
    %v3167 = vmul.f32 %v3162, %v3166
    %vm3168 = vweird.f32 %v3031
    %vm3169 = vweird.f32 %v3162
    %vm3170 = vmor %vm3168, %vm3169
    %v3171 = vsel %vm3170, %v3162, %v3167
    %v3172 = vrsqrt.pop %v3032
    %v3173 = vmul.f32 %v3172, %v3032
    %v3174 = vmul.f32 %v3173, %v3172
    %v3175 = vmul.f32 0.5, %v3174
    %v3176 = vsub.f32 1.5, %v3175
    %v3177 = vmul.f32 %v3172, %v3176
    %vm3178 = vweird.f32 %v3032
    %vm3179 = vweird.f32 %v3172
    %vm3180 = vmor %vm3178, %vm3179
    %v3181 = vsel %vm3180, %v3172, %v3177
    %v3182 = vrsqrt.pop %v3033
    %v3183 = vmul.f32 %v3182, %v3033
    %v3184 = vmul.f32 %v3183, %v3182
    %v3185 = vmul.f32 0.5, %v3184
    %v3186 = vsub.f32 1.5, %v3185
    %v3187 = vmul.f32 %v3182, %v3186
    %vm3188 = vweird.f32 %v3033
    %vm3189 = vweird.f32 %v3182
    %vm3190 = vmor %vm3188, %vm3189
    %v3191 = vsel %vm3190, %v3182, %v3187
    %v3192 = vrsqrt.pop %v3034
    %v3193 = vmul.f32 %v3192, %v3034
    %v3194 = vmul.f32 %v3193, %v3192
    %v3195 = vmul.f32 0.5, %v3194
    %v3196 = vsub.f32 1.5, %v3195
    %v3197 = vmul.f32 %v3192, %v3196
    %vm3198 = vweird.f32 %v3034
    %vm3199 = vweird.f32 %v3192
    %vm3200 = vmor %vm3198, %vm3199
    %v3201 = vsel %vm3200, %v3192, %v3197
    %v3202 = vrsqrt.pop %v3035
    %v3203 = vmul.f32 %v3202, %v3035
    %v3204 = vmul.f32 %v3203, %v3202
    %v3205 = vmul.f32 0.5, %v3204
    %v3206 = vsub.f32 1.5, %v3205
    %v3207 = vmul.f32 %v3202, %v3206
    %vm3208 = vweird.f32 %v3035
    %vm3209 = vweird.f32 %v3202
    %vm3210 = vmor %vm3208, %vm3209
    %v3211 = vsel %vm3210, %v3202, %v3207
    %v3212 = vrsqrt.pop %v3036
    %v3213 = vmul.f32 %v3212, %v3036
    %v3214 = vmul.f32 %v3213, %v3212
    %v3215 = vmul.f32 0.5, %v3214
    %v3216 = vsub.f32 1.5, %v3215
    %v3217 = vmul.f32 %v3212, %v3216
    %vm3218 = vweird.f32 %v3036
    %vm3219 = vweird.f32 %v3212
    %vm3220 = vmor %vm3218, %vm3219
    %v3221 = vsel %vm3220, %v3212, %v3217
    %v3222 = vrsqrt.pop %v3037
    %v3223 = vmul.f32 %v3222, %v3037
    %v3224 = vmul.f32 %v3223, %v3222
    %v3225 = vmul.f32 0.5, %v3224
    %v3226 = vsub.f32 1.5, %v3225
    %v3227 = vmul.f32 %v3222, %v3226
    %vm3228 = vweird.f32 %v3037
    %vm3229 = vweird.f32 %v3222
    %vm3230 = vmor %vm3228, %vm3229
    %v3231 = vsel %vm3230, %v3222, %v3227
    %v3232 = vrsqrt.pop %v3038
    %v3233 = vmul.f32 %v3232, %v3038
    %v3234 = vmul.f32 %v3233, %v3232
    %v3235 = vmul.f32 0.5, %v3234
    %v3236 = vsub.f32 1.5, %v3235
    %v3237 = vmul.f32 %v3232, %v3236
    %vm3238 = vweird.f32 %v3038
    %vm3239 = vweird.f32 %v3232
    %vm3240 = vmor %vm3238, %vm3239
    %v3241 = vsel %vm3240, %v3232, %v3237
    %v3242 = vrsqrt.pop %v3039
    %v3243 = vmul.f32 %v3242, %v3039
    %v3244 = vmul.f32 %v3243, %v3242
    %v3245 = vmul.f32 0.5, %v3244
    %v3246 = vsub.f32 1.5, %v3245
    %v3247 = vmul.f32 %v3242, %v3246
    %vm3248 = vweird.f32 %v3039
    %vm3249 = vweird.f32 %v3242
    %vm3250 = vmor %vm3248, %vm3249
    %v3251 = vsel %vm3250, %v3242, %v3247
    %v3252 = vrsqrt.pop %v3040
    %v3253 = vmul.f32 %v3252, %v3040
    %v3254 = vmul.f32 %v3253, %v3252
    %v3255 = vmul.f32 0.5, %v3254
    %v3256 = vsub.f32 1.5, %v3255
    %v3257 = vmul.f32 %v3252, %v3256
    %vm3258 = vweird.f32 %v3040
    %vm3259 = vweird.f32 %v3252
    %vm3260 = vmor %vm3258, %vm3259
    %v3261 = vsel %vm3260, %v3252, %v3257
    %v3262 = vrsqrt.pop %v3041
    %v3263 = vmul.f32 %v3262, %v3041
    %v3264 = vmul.f32 %v3263, %v3262
    %v3265 = vmul.f32 0.5, %v3264
    %v3266 = vsub.f32 1.5, %v3265
    %v3267 = vmul.f32 %v3262, %v3266
    %vm3268 = vweird.f32 %v3041
    %vm3269 = vweird.f32 %v3262
    %vm3270 = vmor %vm3268, %vm3269
    %v3271 = vsel %vm3270, %v3262, %v3267
    %v3272 = vrsqrt.pop %v3042
    %v3273 = vmul.f32 %v3272, %v3042
    %v3274 = vmul.f32 %v3273, %v3272
    %v3275 = vmul.f32 0.5, %v3274
    %v3276 = vsub.f32 1.5, %v3275
    %v3277 = vmul.f32 %v3272, %v3276
    %vm3278 = vweird.f32 %v3042
    %vm3279 = vweird.f32 %v3272
    %vm3280 = vmor %vm3278, %vm3279
    %v3281 = vsel %vm3280, %v3272, %v3277
    %v3282 = vrsqrt.pop %v3043
    %v3283 = vmul.f32 %v3282, %v3043
    %v3284 = vmul.f32 %v3283, %v3282
    %v3285 = vmul.f32 0.5, %v3284
    %v3286 = vsub.f32 1.5, %v3285
    %v3287 = vmul.f32 %v3282, %v3286
    %vm3288 = vweird.f32 %v3043
    %vm3289 = vweird.f32 %v3282
    %vm3290 = vmor %vm3288, %vm3289
    %v3291 = vsel %vm3290, %v3282, %v3287
    %v3292 = vrsqrt.pop %v3044
    %v3293 = vmul.f32 %v3292, %v3044
    %v3294 = vmul.f32 %v3293, %v3292
    %v3295 = vmul.f32 0.5, %v3294
    %v3296 = vsub.f32 1.5, %v3295
    %v3297 = vmul.f32 %v3292, %v3296
    %vm3298 = vweird.f32 %v3044
    %vm3299 = vweird.f32 %v3292
    %vm3300 = vmor %vm3298, %vm3299
    %v3301 = vsel %vm3300, %v3292, %v3297
    %v3302 = vrsqrt.pop %v3045
    %v3303 = vmul.f32 %v3302, %v3045
    %v3304 = vmul.f32 %v3303, %v3302
    %v3305 = vmul.f32 0.5, %v3304
    %v3306 = vsub.f32 1.5, %v3305
    %v3307 = vmul.f32 %v3302, %v3306
    %vm3308 = vweird.f32 %v3045
    %vm3309 = vweird.f32 %v3302
    %vm3310 = vmor %vm3308, %vm3309
    %v3311 = vsel %vm3310, %v3302, %v3307
    %v3312 = vrsqrt.pop %v3046
    %v3313 = vmul.f32 %v3312, %v3046
    %v3314 = vmul.f32 %v3313, %v3312
    %v3315 = vmul.f32 0.5, %v3314
    %v3316 = vsub.f32 1.5, %v3315
    %v3317 = vmul.f32 %v3312, %v3316
    %vm3318 = vweird.f32 %v3046
    %vm3319 = vweird.f32 %v3312
    %vm3320 = vmor %vm3318, %vm3319
    %v3321 = vsel %vm3320, %v3312, %v3317
    %v3322 = vrsqrt.pop %v3047
    %v3323 = vmul.f32 %v3322, %v3047
    %v3324 = vmul.f32 %v3323, %v3322
    %v3325 = vmul.f32 0.5, %v3324
    %v3326 = vsub.f32 1.5, %v3325
    %v3327 = vmul.f32 %v3322, %v3326
    %vm3328 = vweird.f32 %v3047
    %vm3329 = vweird.f32 %v3322
    %vm3330 = vmor %vm3328, %vm3329
    %v3331 = vsel %vm3330, %v3322, %v3327
    %v3332 = vrsqrt.pop %v3048
    %v3333 = vmul.f32 %v3332, %v3048
    %v3334 = vmul.f32 %v3333, %v3332
    %v3335 = vmul.f32 0.5, %v3334
    %v3336 = vsub.f32 1.5, %v3335
    %v3337 = vmul.f32 %v3332, %v3336
    %vm3338 = vweird.f32 %v3048
    %vm3339 = vweird.f32 %v3332
    %vm3340 = vmor %vm3338, %vm3339
    %v3341 = vsel %vm3340, %v3332, %v3337
    %v3342 = vrsqrt.pop %v3049
    %v3343 = vmul.f32 %v3342, %v3049
    %v3344 = vmul.f32 %v3343, %v3342
    %v3345 = vmul.f32 0.5, %v3344
    %v3346 = vsub.f32 1.5, %v3345
    %v3347 = vmul.f32 %v3342, %v3346
    %vm3348 = vweird.f32 %v3049
    %vm3349 = vweird.f32 %v3342
    %vm3350 = vmor %vm3348, %vm3349
    %v3351 = vsel %vm3350, %v3342, %v3347
    %v3352 = vrsqrt.pop %v3050
    %v3353 = vmul.f32 %v3352, %v3050
    %v3354 = vmul.f32 %v3353, %v3352
    %v3355 = vmul.f32 0.5, %v3354
    %v3356 = vsub.f32 1.5, %v3355
    %v3357 = vmul.f32 %v3352, %v3356
    %vm3358 = vweird.f32 %v3050
    %vm3359 = vweird.f32 %v3352
    %vm3360 = vmor %vm3358, %vm3359
    %v3361 = vsel %vm3360, %v3352, %v3357
    %v3362 = vrsqrt.pop %v3051
    %v3363 = vmul.f32 %v3362, %v3051
    %v3364 = vmul.f32 %v3363, %v3362
    %v3365 = vmul.f32 0.5, %v3364
    %v3366 = vsub.f32 1.5, %v3365
    %v3367 = vmul.f32 %v3362, %v3366
    %vm3368 = vweird.f32 %v3051
    %vm3369 = vweird.f32 %v3362
    %vm3370 = vmor %vm3368, %vm3369
    %v3371 = vsel %vm3370, %v3362, %v3367
    %v3372 = vmul.f32 %v2828, %v3061
    %v3373 = vmul.f32 %v2829, %v3071
    %v3374 = vmul.f32 %v2830, %v3081
    %v3375 = vmul.f32 %v2831, %v3091
    %v3376 = vmul.f32 %v2832, %v3101
    %v3377 = vmul.f32 %v2833, %v3111
    %v3378 = vmul.f32 %v2834, %v3121
    %v3379 = vmul.f32 %v2835, %v3131
    %v3380 = vmul.f32 %v2836, %v3141
    %v3381 = vmul.f32 %v2837, %v3151
    %v3382 = vmul.f32 %v2838, %v3161
    %v3383 = vmul.f32 %v2839, %v3171
    %v3384 = vmul.f32 %v2840, %v3181
    %v3385 = vmul.f32 %v2841, %v3191
    %v3386 = vmul.f32 %v2842, %v3201
    %v3387 = vmul.f32 %v2843, %v3211
    %v3388 = vmul.f32 %v2844, %v3221
    %v3389 = vmul.f32 %v2845, %v3231
    %v3390 = vmul.f32 %v2846, %v3241
    %v3391 = vmul.f32 %v2847, %v3251
    %v3392 = vmul.f32 %v2848, %v3261
    %v3393 = vmul.f32 %v2849, %v3271
    %v3394 = vmul.f32 %v2850, %v3281
    %v3395 = vmul.f32 %v2851, %v3291
    %v3396 = vmul.f32 %v2852, %v3301
    %v3397 = vmul.f32 %v2853, %v3311
    %v3398 = vmul.f32 %v2854, %v3321
    %v3399 = vmul.f32 %v2855, %v3331
    %v3400 = vmul.f32 %v2856, %v3341
    %v3401 = vmul.f32 %v2857, %v3351
    %v3402 = vmul.f32 %v2858, %v3361
    %v3403 = vmul.f32 %v2859, %v3371
    %v3404 = vperm.slane %v53, 2
    %v3405 = vmul.f32 %v3372, %v3404
    %v3406 = vmul.f32 %v3373, %v3404
    %v3407 = vmul.f32 %v3374, %v3404
    %v3408 = vmul.f32 %v3375, %v3404
    %v3409 = vmul.f32 %v3376, %v3404
    %v3410 = vmul.f32 %v3377, %v3404
    %v3411 = vmul.f32 %v3378, %v3404
    %v3412 = vmul.f32 %v3379, %v3404
    %v3413 = vmul.f32 %v3380, %v3404
    %v3414 = vmul.f32 %v3381, %v3404
    %v3415 = vmul.f32 %v3382, %v3404
    %v3416 = vmul.f32 %v3383, %v3404
    %v3417 = vmul.f32 %v3384, %v3404
    %v3418 = vmul.f32 %v3385, %v3404
    %v3419 = vmul.f32 %v3386, %v3404
    %v3420 = vmul.f32 %v3387, %v3404
    %v3421 = vmul.f32 %v3388, %v3404
    %v3422 = vmul.f32 %v3389, %v3404
    %v3423 = vmul.f32 %v3390, %v3404
    %v3424 = vmul.f32 %v3391, %v3404
    %v3425 = vmul.f32 %v3392, %v3404
    %v3426 = vmul.f32 %v3393, %v3404
    %v3427 = vmul.f32 %v3394, %v3404
    %v3428 = vmul.f32 %v3395, %v3404
    %v3429 = vmul.f32 %v3396, %v3404
    %v3430 = vmul.f32 %v3397, %v3404
    %v3431 = vmul.f32 %v3398, %v3404
    %v3432 = vmul.f32 %v3399, %v3404
    %v3433 = vmul.f32 %v3400, %v3404
    %v3434 = vmul.f32 %v3401, %v3404
    %v3435 = vmul.f32 %v3402, %v3404
    %v3436 = vmul.f32 %v3403, %v3404
    %v3437 = vperm.slane %v53, 3
    %v3438 = vadd.f32 %v3405, %v3437
    %v3439 = vadd.f32 %v3406, %v3437
    %v3440 = vadd.f32 %v3407, %v3437
    %v3441 = vadd.f32 %v3408, %v3437
    %v3442 = vadd.f32 %v3409, %v3437
    %v3443 = vadd.f32 %v3410, %v3437
    %v3444 = vadd.f32 %v3411, %v3437
    %v3445 = vadd.f32 %v3412, %v3437
    %v3446 = vadd.f32 %v3413, %v3437
    %v3447 = vadd.f32 %v3414, %v3437
    %v3448 = vadd.f32 %v3415, %v3437
    %v3449 = vadd.f32 %v3416, %v3437
    %v3450 = vadd.f32 %v3417, %v3437
    %v3451 = vadd.f32 %v3418, %v3437
    %v3452 = vadd.f32 %v3419, %v3437
    %v3453 = vadd.f32 %v3420, %v3437
    %v3454 = vadd.f32 %v3421, %v3437
    %v3455 = vadd.f32 %v3422, %v3437
    %v3456 = vadd.f32 %v3423, %v3437
    %v3457 = vadd.f32 %v3424, %v3437
    %v3458 = vadd.f32 %v3425, %v3437
    %v3459 = vadd.f32 %v3426, %v3437
    %v3460 = vadd.f32 %v3427, %v3437
    %v3461 = vadd.f32 %v3428, %v3437
    %v3462 = vadd.f32 %v3429, %v3437
    %v3463 = vadd.f32 %v3430, %v3437
    %v3464 = vadd.f32 %v3431, %v3437
    %v3465 = vadd.f32 %v3432, %v3437
    %v3466 = vadd.f32 %v3433, %v3437
    %v3467 = vadd.f32 %v3434, %v3437
    %v3468 = vadd.f32 %v3435, %v3437
    %v3469 = vadd.f32 %v3436, %v3437
    %v3470 = vrot.slane %v3442, 4
    %vm3471 = vcmask 1047556
    %v3472 = vsel %vm3471, %v3470, %v3438
    %v3473 = vrot.slane %v3438, 4
    %v3474 = vsel %vm3471, %v3442, %v3473
    %v3476 = vunpack.c.l.s4 1983009808
    %v3477 = vunpack.c.0.s8 %v3476
    %v3478 = vperm.slane %v3472, %v3477
    %v3480 = vunpack.c.l.s4 1983009808
    %v3481 = vunpack.c.0.s8 %v3480
    %v3482 = vperm.slane %v3474, %v3481
    %v3483 = vrot.slane %v3444, 4
    %v3484 = vsel %vm3471, %v3483, %v3440
    %v3485 = vrot.slane %v3440, 4
    %v3486 = vsel %vm3471, %v3444, %v3485
    %v3488 = vunpack.c.l.s4 1983009808
    %v3489 = vunpack.c.0.s8 %v3488
    %v3490 = vperm.slane %v3484, %v3489
    %v3492 = vunpack.c.l.s4 1983009808
    %v3493 = vunpack.c.0.s8 %v3492
    %v3494 = vperm.slane %v3486, %v3493
    %v3495 = vrot.slane %v3450, 4
    %v3496 = vsel %vm3471, %v3495, %v3446
    %v3497 = vrot.slane %v3446, 4
    %v3498 = vsel %vm3471, %v3450, %v3497
    %v3500 = vunpack.c.l.s4 1983009808
    %v3501 = vunpack.c.0.s8 %v3500
    %v3502 = vperm.slane %v3496, %v3501
    %v3504 = vunpack.c.l.s4 1983009808
    %v3505 = vunpack.c.0.s8 %v3504
    %v3506 = vperm.slane %v3498, %v3505
    %v3507 = vrot.slane %v3452, 4
    %v3508 = vsel %vm3471, %v3507, %v3448
    %v3509 = vrot.slane %v3448, 4
    %v3510 = vsel %vm3471, %v3452, %v3509
    %v3512 = vunpack.c.l.s4 1983009808
    %v3513 = vunpack.c.0.s8 %v3512
    %v3514 = vperm.slane %v3508, %v3513
    %v3516 = vunpack.c.l.s4 1983009808
    %v3517 = vunpack.c.0.s8 %v3516
    %v3518 = vperm.slane %v3510, %v3517
    %v3519 = vrot.slane %v3490, 4
    %v3520 = vsel %vm3471, %v3519, %v3478
    %v3521 = vrot.slane %v3478, 4
    %v3522 = vsel %vm3471, %v3490, %v3521
    %v3524 = vunpack.c.l.s4 1934713408
    %v3525 = vunpack.c.0.s8 %v3524
    %v3526 = vperm.slane %v3520, %v3525
    %v3528 = vunpack.c.l.s4 1934713408
    %v3529 = vunpack.c.0.s8 %v3528
    %v3530 = vperm.slane %v3522, %v3529
    %v3531 = vrot.slane %v3494, 4
    %v3532 = vsel %vm3471, %v3531, %v3482
    %v3533 = vrot.slane %v3482, 4
    %v3534 = vsel %vm3471, %v3494, %v3533
    %v3536 = vunpack.c.l.s4 1934713408
    %v3537 = vunpack.c.0.s8 %v3536
    %v3538 = vperm.slane %v3532, %v3537
    %v3540 = vunpack.c.l.s4 1934713408
    %v3541 = vunpack.c.0.s8 %v3540
    %v3542 = vperm.slane %v3534, %v3541
    %v3543 = vrot.slane %v3514, 4
    %v3544 = vsel %vm3471, %v3543, %v3502
    %v3545 = vrot.slane %v3502, 4
    %v3546 = vsel %vm3471, %v3514, %v3545
    %v3548 = vunpack.c.l.s4 1934713408
    %v3549 = vunpack.c.0.s8 %v3548
    %v3550 = vperm.slane %v3544, %v3549
    %v3552 = vunpack.c.l.s4 1934713408
    %v3553 = vunpack.c.0.s8 %v3552
    %v3554 = vperm.slane %v3546, %v3553
    %v3555 = vrot.slane %v3518, 4
    %v3556 = vsel %vm3471, %v3555, %v3506
    %v3557 = vrot.slane %v3506, 4
    %v3558 = vsel %vm3471, %v3518, %v3557
    %v3560 = vunpack.c.l.s4 1934713408
    %v3561 = vunpack.c.0.s8 %v3560
    %v3562 = vperm.slane %v3556, %v3561
    %v3564 = vunpack.c.l.s4 1934713408
    %v3565 = vunpack.c.0.s8 %v3564
    %v3566 = vperm.slane %v3558, %v3565
    %v3567 = vrot.slane %v3550, 4
    %v3568 = vsel %vm3471, %v3567, %v3526
    %v3569 = vrot.slane %v3526, 4
    %v3570 = vsel %vm3471, %v3550, %v3569
    %v3571 = vrot.slane %v3554, 4
    %v3572 = vsel %vm3471, %v3571, %v3530
    %v3573 = vrot.slane %v3530, 4
    %v3574 = vsel %vm3471, %v3554, %v3573
    %v3575 = vrot.slane %v3562, 4
    %v3576 = vsel %vm3471, %v3575, %v3538
    %v3577 = vrot.slane %v3538, 4
    %v3578 = vsel %vm3471, %v3562, %v3577
    %v3579 = vrot.slane %v3566, 4
    %v3580 = vsel %vm3471, %v3579, %v3542
    %v3581 = vrot.slane %v3542, 4
    %v3582 = vsel %vm3471, %v3566, %v3581
    %v3583 = vrot.slane %v3458, 4
    %v3584 = vsel %vm3471, %v3583, %v3454
    %v3585 = vrot.slane %v3454, 4
    %v3586 = vsel %vm3471, %v3458, %v3585
    %v3588 = vunpack.c.l.s4 1983009808
    %v3589 = vunpack.c.0.s8 %v3588
    %v3590 = vperm.slane %v3584, %v3589
    %v3592 = vunpack.c.l.s4 1983009808
    %v3593 = vunpack.c.0.s8 %v3592
    %v3594 = vperm.slane %v3586, %v3593
    %v3595 = vrot.slane %v3460, 4
    %v3596 = vsel %vm3471, %v3595, %v3456
    %v3597 = vrot.slane %v3456, 4
    %v3598 = vsel %vm3471, %v3460, %v3597
    %v3600 = vunpack.c.l.s4 1983009808
    %v3601 = vunpack.c.0.s8 %v3600
    %v3602 = vperm.slane %v3596, %v3601
    %v3604 = vunpack.c.l.s4 1983009808
    %v3605 = vunpack.c.0.s8 %v3604
    %v3606 = vperm.slane %v3598, %v3605
    %v3607 = vrot.slane %v3466, 4
    %v3608 = vsel %vm3471, %v3607, %v3462
    %v3609 = vrot.slane %v3462, 4
    %v3610 = vsel %vm3471, %v3466, %v3609
    %v3612 = vunpack.c.l.s4 1983009808
    %v3613 = vunpack.c.0.s8 %v3612
    %v3614 = vperm.slane %v3608, %v3613
    %v3616 = vunpack.c.l.s4 1983009808
    %v3617 = vunpack.c.0.s8 %v3616
    %v3618 = vperm.slane %v3610, %v3617
    %v3619 = vrot.slane %v3468, 4
    %v3620 = vsel %vm3471, %v3619, %v3464
    %v3621 = vrot.slane %v3464, 4
    %v3622 = vsel %vm3471, %v3468, %v3621
    %v3624 = vunpack.c.l.s4 1983009808
    %v3625 = vunpack.c.0.s8 %v3624
    %v3626 = vperm.slane %v3620, %v3625
    %v3628 = vunpack.c.l.s4 1983009808
    %v3629 = vunpack.c.0.s8 %v3628
    %v3630 = vperm.slane %v3622, %v3629
    %v3631 = vrot.slane %v3602, 4
    %v3632 = vsel %vm3471, %v3631, %v3590
    %v3633 = vrot.slane %v3590, 4
    %v3634 = vsel %vm3471, %v3602, %v3633
    %v3636 = vunpack.c.l.s4 1934713408
    %v3637 = vunpack.c.0.s8 %v3636
    %v3638 = vperm.slane %v3632, %v3637
    %v3640 = vunpack.c.l.s4 1934713408
    %v3641 = vunpack.c.0.s8 %v3640
    %v3642 = vperm.slane %v3634, %v3641
    %v3643 = vrot.slane %v3606, 4
    %v3644 = vsel %vm3471, %v3643, %v3594
    %v3645 = vrot.slane %v3594, 4
    %v3646 = vsel %vm3471, %v3606, %v3645
    %v3648 = vunpack.c.l.s4 1934713408
    %v3649 = vunpack.c.0.s8 %v3648
    %v3650 = vperm.slane %v3644, %v3649
    %v3652 = vunpack.c.l.s4 1934713408
    %v3653 = vunpack.c.0.s8 %v3652
    %v3654 = vperm.slane %v3646, %v3653
    %v3655 = vrot.slane %v3626, 4
    %v3656 = vsel %vm3471, %v3655, %v3614
    %v3657 = vrot.slane %v3614, 4
    %v3658 = vsel %vm3471, %v3626, %v3657
    %v3660 = vunpack.c.l.s4 1934713408
    %v3661 = vunpack.c.0.s8 %v3660
    %v3662 = vperm.slane %v3656, %v3661
    %v3664 = vunpack.c.l.s4 1934713408
    %v3665 = vunpack.c.0.s8 %v3664
    %v3666 = vperm.slane %v3658, %v3665
    %v3667 = vrot.slane %v3630, 4
    %v3668 = vsel %vm3471, %v3667, %v3618
    %v3669 = vrot.slane %v3618, 4
    %v3670 = vsel %vm3471, %v3630, %v3669
    %v3672 = vunpack.c.l.s4 1934713408
    %v3673 = vunpack.c.0.s8 %v3672
    %v3674 = vperm.slane %v3668, %v3673
    %v3676 = vunpack.c.l.s4 1934713408
    %v3677 = vunpack.c.0.s8 %v3676
    %v3678 = vperm.slane %v3670, %v3677
    %v3679 = vrot.slane %v3662, 4
    %v3680 = vsel %vm3471, %v3679, %v3638
    %v3681 = vrot.slane %v3638, 4
    %v3682 = vsel %vm3471, %v3662, %v3681
    %v3683 = vrot.slane %v3666, 4
    %v3684 = vsel %vm3471, %v3683, %v3642
    %v3685 = vrot.slane %v3642, 4
    %v3686 = vsel %vm3471, %v3666, %v3685
    %v3687 = vrot.slane %v3674, 4
    %v3688 = vsel %vm3471, %v3687, %v3650
    %v3689 = vrot.slane %v3650, 4
    %v3690 = vsel %vm3471, %v3674, %v3689
    %v3691 = vrot.slane %v3678, 4
    %v3692 = vsel %vm3471, %v3691, %v3654
    %v3693 = vrot.slane %v3654, 4
    %v3694 = vsel %vm3471, %v3678, %v3693
    %v3695 = vrot.slane %v3443, 4
    %v3696 = vsel %vm3471, %v3695, %v3439
    %v3697 = vrot.slane %v3439, 4
    %v3698 = vsel %vm3471, %v3443, %v3697
    %v3700 = vunpack.c.l.s4 1983009808
    %v3701 = vunpack.c.0.s8 %v3700
    %v3702 = vperm.slane %v3696, %v3701
    %v3704 = vunpack.c.l.s4 1983009808
    %v3705 = vunpack.c.0.s8 %v3704
    %v3706 = vperm.slane %v3698, %v3705
    %v3707 = vrot.slane %v3445, 4
    %v3708 = vsel %vm3471, %v3707, %v3441
    %v3709 = vrot.slane %v3441, 4
    %v3710 = vsel %vm3471, %v3445, %v3709
    %v3712 = vunpack.c.l.s4 1983009808
    %v3713 = vunpack.c.0.s8 %v3712
    %v3714 = vperm.slane %v3708, %v3713
    %v3716 = vunpack.c.l.s4 1983009808
    %v3717 = vunpack.c.0.s8 %v3716
    %v3718 = vperm.slane %v3710, %v3717
    %v3719 = vrot.slane %v3451, 4
    %v3720 = vsel %vm3471, %v3719, %v3447
    %v3721 = vrot.slane %v3447, 4
    %v3722 = vsel %vm3471, %v3451, %v3721
    %v3724 = vunpack.c.l.s4 1983009808
    %v3725 = vunpack.c.0.s8 %v3724
    %v3726 = vperm.slane %v3720, %v3725
    %v3728 = vunpack.c.l.s4 1983009808
    %v3729 = vunpack.c.0.s8 %v3728
    %v3730 = vperm.slane %v3722, %v3729
    %v3731 = vrot.slane %v3453, 4
    %v3732 = vsel %vm3471, %v3731, %v3449
    %v3733 = vrot.slane %v3449, 4
    %v3734 = vsel %vm3471, %v3453, %v3733
    %v3736 = vunpack.c.l.s4 1983009808
    %v3737 = vunpack.c.0.s8 %v3736
    %v3738 = vperm.slane %v3732, %v3737
    %v3740 = vunpack.c.l.s4 1983009808
    %v3741 = vunpack.c.0.s8 %v3740
    %v3742 = vperm.slane %v3734, %v3741
    %v3743 = vrot.slane %v3714, 4
    %v3744 = vsel %vm3471, %v3743, %v3702
    %v3745 = vrot.slane %v3702, 4
    %v3746 = vsel %vm3471, %v3714, %v3745
    %v3748 = vunpack.c.l.s4 1934713408
    %v3749 = vunpack.c.0.s8 %v3748
    %v3750 = vperm.slane %v3744, %v3749
    %v3752 = vunpack.c.l.s4 1934713408
    %v3753 = vunpack.c.0.s8 %v3752
    %v3754 = vperm.slane %v3746, %v3753
    %v3755 = vrot.slane %v3718, 4
    %v3756 = vsel %vm3471, %v3755, %v3706
    %v3757 = vrot.slane %v3706, 4
    %v3758 = vsel %vm3471, %v3718, %v3757
    %v3760 = vunpack.c.l.s4 1934713408
    %v3761 = vunpack.c.0.s8 %v3760
    %v3762 = vperm.slane %v3756, %v3761
    %v3764 = vunpack.c.l.s4 1934713408
    %v3765 = vunpack.c.0.s8 %v3764
    %v3766 = vperm.slane %v3758, %v3765
    %v3767 = vrot.slane %v3738, 4
    %v3768 = vsel %vm3471, %v3767, %v3726
    %v3769 = vrot.slane %v3726, 4
    %v3770 = vsel %vm3471, %v3738, %v3769
    %v3772 = vunpack.c.l.s4 1934713408
    %v3773 = vunpack.c.0.s8 %v3772
    %v3774 = vperm.slane %v3768, %v3773
    %v3776 = vunpack.c.l.s4 1934713408
    %v3777 = vunpack.c.0.s8 %v3776
    %v3778 = vperm.slane %v3770, %v3777
    %v3779 = vrot.slane %v3742, 4
    %v3780 = vsel %vm3471, %v3779, %v3730
    %v3781 = vrot.slane %v3730, 4
    %v3782 = vsel %vm3471, %v3742, %v3781
    %v3784 = vunpack.c.l.s4 1934713408
    %v3785 = vunpack.c.0.s8 %v3784
    %v3786 = vperm.slane %v3780, %v3785
    %v3788 = vunpack.c.l.s4 1934713408
    %v3789 = vunpack.c.0.s8 %v3788
    %v3790 = vperm.slane %v3782, %v3789
    %v3791 = vrot.slane %v3774, 4
    %v3792 = vsel %vm3471, %v3791, %v3750
    %v3793 = vrot.slane %v3750, 4
    %v3794 = vsel %vm3471, %v3774, %v3793
    %v3795 = vrot.slane %v3778, 4
    %v3796 = vsel %vm3471, %v3795, %v3754
    %v3797 = vrot.slane %v3754, 4
    %v3798 = vsel %vm3471, %v3778, %v3797
    %v3799 = vrot.slane %v3786, 4
    %v3800 = vsel %vm3471, %v3799, %v3762
    %v3801 = vrot.slane %v3762, 4
    %v3802 = vsel %vm3471, %v3786, %v3801
    %v3803 = vrot.slane %v3790, 4
    %v3804 = vsel %vm3471, %v3803, %v3766
    %v3805 = vrot.slane %v3766, 4
    %v3806 = vsel %vm3471, %v3790, %v3805
    %v3807 = vrot.slane %v3459, 4
    %v3808 = vsel %vm3471, %v3807, %v3455
    %v3809 = vrot.slane %v3455, 4
    %v3810 = vsel %vm3471, %v3459, %v3809
    %v3812 = vunpack.c.l.s4 1983009808
    %v3813 = vunpack.c.0.s8 %v3812
    %v3814 = vperm.slane %v3808, %v3813
    %v3816 = vunpack.c.l.s4 1983009808
    %v3817 = vunpack.c.0.s8 %v3816
    %v3818 = vperm.slane %v3810, %v3817
    %v3819 = vrot.slane %v3461, 4
    %v3820 = vsel %vm3471, %v3819, %v3457
    %v3821 = vrot.slane %v3457, 4
    %v3822 = vsel %vm3471, %v3461, %v3821
    %v3824 = vunpack.c.l.s4 1983009808
    %v3825 = vunpack.c.0.s8 %v3824
    %v3826 = vperm.slane %v3820, %v3825
    %v3828 = vunpack.c.l.s4 1983009808
    %v3829 = vunpack.c.0.s8 %v3828
    %v3830 = vperm.slane %v3822, %v3829
    %v3831 = vrot.slane %v3467, 4
    %v3832 = vsel %vm3471, %v3831, %v3463
    %v3833 = vrot.slane %v3463, 4
    %v3834 = vsel %vm3471, %v3467, %v3833
    %v3836 = vunpack.c.l.s4 1983009808
    %v3837 = vunpack.c.0.s8 %v3836
    %v3838 = vperm.slane %v3832, %v3837
    %v3840 = vunpack.c.l.s4 1983009808
    %v3841 = vunpack.c.0.s8 %v3840
    %v3842 = vperm.slane %v3834, %v3841
    %v3843 = vrot.slane %v3469, 4
    %v3844 = vsel %vm3471, %v3843, %v3465
    %v3845 = vrot.slane %v3465, 4
    %v3846 = vsel %vm3471, %v3469, %v3845
    %v3848 = vunpack.c.l.s4 1983009808
    %v3849 = vunpack.c.0.s8 %v3848
    %v3850 = vperm.slane %v3844, %v3849
    %v3852 = vunpack.c.l.s4 1983009808
    %v3853 = vunpack.c.0.s8 %v3852
    %v3854 = vperm.slane %v3846, %v3853
    %v3855 = vrot.slane %v3826, 4
    %v3856 = vsel %vm3471, %v3855, %v3814
    %v3857 = vrot.slane %v3814, 4
    %v3858 = vsel %vm3471, %v3826, %v3857
    %v3860 = vunpack.c.l.s4 1934713408
    %v3861 = vunpack.c.0.s8 %v3860
    %v3862 = vperm.slane %v3856, %v3861
    %v3864 = vunpack.c.l.s4 1934713408
    %v3865 = vunpack.c.0.s8 %v3864
    %v3866 = vperm.slane %v3858, %v3865
    %v3867 = vrot.slane %v3830, 4
    %v3868 = vsel %vm3471, %v3867, %v3818
    %v3869 = vrot.slane %v3818, 4
    %v3870 = vsel %vm3471, %v3830, %v3869
    %v3872 = vunpack.c.l.s4 1934713408
    %v3873 = vunpack.c.0.s8 %v3872
    %v3874 = vperm.slane %v3868, %v3873
    %v3876 = vunpack.c.l.s4 1934713408
    %v3877 = vunpack.c.0.s8 %v3876
    %v3878 = vperm.slane %v3870, %v3877
    %v3879 = vrot.slane %v3850, 4
    %v3880 = vsel %vm3471, %v3879, %v3838
    %v3881 = vrot.slane %v3838, 4
    %v3882 = vsel %vm3471, %v3850, %v3881
    %v3884 = vunpack.c.l.s4 1934713408
    %v3885 = vunpack.c.0.s8 %v3884
    %v3886 = vperm.slane %v3880, %v3885
    %v3888 = vunpack.c.l.s4 1934713408
    %v3889 = vunpack.c.0.s8 %v3888
    %v3890 = vperm.slane %v3882, %v3889
    %v3891 = vrot.slane %v3854, 4
    %v3892 = vsel %vm3471, %v3891, %v3842
    %v3893 = vrot.slane %v3842, 4
    %v3894 = vsel %vm3471, %v3854, %v3893
    %v3896 = vunpack.c.l.s4 1934713408
    %v3897 = vunpack.c.0.s8 %v3896
    %v3898 = vperm.slane %v3892, %v3897
    %v3900 = vunpack.c.l.s4 1934713408
    %v3901 = vunpack.c.0.s8 %v3900
    %v3902 = vperm.slane %v3894, %v3901
    %v3903 = vrot.slane %v3886, 4
    %v3904 = vsel %vm3471, %v3903, %v3862
    %v3905 = vrot.slane %v3862, 4
    %v3906 = vsel %vm3471, %v3886, %v3905
    %v3907 = vrot.slane %v3890, 4
    %v3908 = vsel %vm3471, %v3907, %v3866
    %v3909 = vrot.slane %v3866, 4
    %v3910 = vsel %vm3471, %v3890, %v3909
    %v3911 = vrot.slane %v3898, 4
    %v3912 = vsel %vm3471, %v3911, %v3874
    %v3913 = vrot.slane %v3874, 4
    %v3914 = vsel %vm3471, %v3898, %v3913
    %v3915 = vrot.slane %v3902, 4
    %v3916 = vsel %vm3471, %v3915, %v3878
    %v3917 = vrot.slane %v3878, 4
    %v3918 = vsel %vm3471, %v3902, %v3917
    %3921 = vrot.lane.b32.xlu0 %v3570, 32
    %v3922 = vpop.permute.xlu0 %3921
    %3923 = vrot.lane.b32.xlu0 %v3682, 32
    %v3924 = vpop.permute.xlu0 %3923
    %3929 = vrot.lane.b32.xlu0 %v3572, 64
    %v3930 = vpop.permute.xlu0 %3929
    %3931 = vrot.lane.b32.xlu0 %v3684, 64
    %v3932 = vpop.permute.xlu0 %3931
    %3937 = vrot.lane.b32.xlu0 %v3574, 96
    %v3938 = vpop.permute.xlu0 %3937
    %3939 = vrot.lane.b32.xlu0 %v3686, 96
    %v3940 = vpop.permute.xlu0 %3939
    %3945 = vrot.lane.b32.xlu0 %v3578, 32
    %v3946 = vpop.permute.xlu0 %3945
    %3947 = vrot.lane.b32.xlu0 %v3690, 32
    %v3948 = vpop.permute.xlu0 %3947
    %3953 = vrot.lane.b32.xlu0 %v3580, 64
    %v3954 = vpop.permute.xlu0 %3953
    %3955 = vrot.lane.b32.xlu0 %v3692, 64
    %v3956 = vpop.permute.xlu0 %3955
    %3961 = vrot.lane.b32.xlu0 %v3582, 96
    %v3962 = vpop.permute.xlu0 %3961
    %3963 = vrot.lane.b32.xlu0 %v3694, 96
    %v3964 = vpop.permute.xlu0 %3963
    %3969 = vrot.lane.b32.xlu0 %v3794, 32
    %v3970 = vpop.permute.xlu0 %3969
    %3971 = vrot.lane.b32.xlu0 %v3906, 32
    %v3972 = vpop.permute.xlu0 %3971
    %3977 = vrot.lane.b32.xlu0 %v3796, 64
    %v3978 = vpop.permute.xlu0 %3977
    %3979 = vrot.lane.b32.xlu0 %v3908, 64
    %v3980 = vpop.permute.xlu0 %3979
    %3985 = vrot.lane.b32.xlu0 %v3798, 96
    %v3986 = vpop.permute.xlu0 %3985
    %3987 = vrot.lane.b32.xlu0 %v3910, 96
    %v3988 = vpop.permute.xlu0 %3987
    %3993 = vrot.lane.b32.xlu0 %v3802, 32
    %v3994 = vpop.permute.xlu0 %3993
    %3995 = vrot.lane.b32.xlu0 %v3914, 32
    %v3996 = vpop.permute.xlu0 %3995
    %4001 = vrot.lane.b32.xlu0 %v3804, 64
    %v4002 = vpop.permute.xlu0 %4001
    %4003 = vrot.lane.b32.xlu0 %v3916, 64
    %v4004 = vpop.permute.xlu0 %4003
    %4009 = vrot.lane.b32.xlu0 %v3806, 96
    %v4010 = vpop.permute.xlu0 %4009
    %4011 = vrot.lane.b32.xlu0 %v3918, 96
    %v4012 = vpop.permute.xlu0 %4011
    %v4015 = vsel %vm107, %v3568, %v3922
    %v4016 = vsel %vm107, %v3680, %v3924
    %vm4017 = vcmask 523264
    %v4018 = vsel %vm4017, %v4015, %v3930
    %v4019 = vsel %vm4017, %v4016, %v3932
    %vm4020 = vcmask 785408
    %v4021 = vsel %vm4020, %v4018, %v3938
    %v4022 = vsel %vm4020, %v4019, %v3940
    %v4023 = vsel %vm107, %v3576, %v3946
    %v4024 = vsel %vm107, %v3688, %v3948
    %v4025 = vsel %vm4017, %v4023, %v3954
    %v4026 = vsel %vm4017, %v4024, %v3956
    %v4027 = vsel %vm4020, %v4025, %v3962
    %v4028 = vsel %vm4020, %v4026, %v3964
    %v4029 = vsel %vm107, %v3792, %v3970
    %v4030 = vsel %vm107, %v3904, %v3972
    %v4031 = vsel %vm4017, %v4029, %v3978
    %v4032 = vsel %vm4017, %v4030, %v3980
    %v4033 = vsel %vm4020, %v4031, %v3986
    %v4034 = vsel %vm4020, %v4032, %v3988
    %v4035 = vsel %vm107, %v3800, %v3994
    %v4036 = vsel %vm107, %v3912, %v3996
    %v4037 = vsel %vm4017, %v4035, %v4002
    %v4038 = vsel %vm4017, %v4036, %v4004
    %v4039 = vsel %vm4020, %v4037, %v4010
    %v4040 = vsel %vm4020, %v4038, %v4012
    %4041 = vst [vmem:[#allocation7] sm:$0xff] %v4021
    %4042 = vst [vmem:[#allocation7 + $0x8] sm:$0xff] %v4027
    %4043 = vst [vmem:[#allocation7 + $0x10] sm:$0xff] %v4033
    %4044 = vst [vmem:[#allocation7 + $0x18] sm:$0xff] %v4039
    %4045 = vst [vmem:[#allocation7 + $0x20] sm:$0xff] %v4022
    %4046 = vst [vmem:[#allocation7 + $0x28] sm:$0xff] %v4028
    %4047 = vst [vmem:[#allocation7 + $0x30] sm:$0xff] %v4034
    %4048 = vst [vmem:[#allocation7 + $0x38] sm:$0xff] %v4040
    // Predicated region
    $region30: #{tpu_custom_call.1} parent=1 // pred_check
      _
    $region31: #{tpu_custom_call.1} parent=1 // pred_check_branch
      %4050 = sbr.rel (0) target = $region33
    $region32: #{tpu_custom_call.1} parent=1 // pred_region
      %4052 = vsyncadd [#allocation4], 0
      %s4053 = sshll.u32 [#allocation7], 4
      %s4054 = int_to_ptr.vmem [resolvable:$true] %s4053
      %s4055 = sshll.u32 %s5, 4
      %s4056 = int_to_ptr.hbm [resolvable:$true] %s4055
      %4061 = dma.vmem_to_hbm [thread:$0]  %s4054, 1024, %s4056, [#allocation4], 512, 512, 32
    $region33: #{tpu_custom_call.1} parent=1 // pred_fallthru
      _
    // Predicated region
    $region34: #{tpu_custom_call.1} parent=1 // pred_check
      _
    $region35: #{tpu_custom_call.1} parent=1 // pred_check_branch
      %4063 = sbr.rel (0) target = $region37
    $region36: #{tpu_custom_call.1} parent=1 // pred_region
      %4065 = dma.done [#allocation4], 1024
    $region37: #{tpu_custom_call.1} parent=1 // pred_fallthru
      _
    %4066 = vsyncpa [#allocation3], 1
    %4067 = vsyncpa [#allocation6], 1
    %4068 = vsyncpa [#allocation4], 1

</llo_original>
